<compile_context>
chip_gen: v7x
topology: tpu7x:2x2x1
jax: 0.10.0
libtpu: 0.0.40
codegen_flags: <defaults>
</compile_context>

<pallas_src>
import numpy as np
import jax
import jax.numpy as jnp
from jax.experimental import pallas as pl
from jax.experimental.pallas import tpu as pltpu


LANE = 128        # feature dim padded to a multiple of this
TILE = 512        # adjacency tile for the propagation matmuls
NODE_TILE = 256   # node tile for the mask / projection kernel
EDGE_TILE = 512   # edge tile for the edge-gate kernel


def _round_up(n, m):
    return ((n + m - 1) // m) * m


def _lane_pad(d):
    return max(LANE, _round_up(d, LANE))


def _pad2d(x, rows, cols):
    return jnp.pad(x, ((0, rows - x.shape[0]), (0, cols - x.shape[1])))


def _vmem_limit(block_bytes):
    """Explicit scoped-VMEM limit sized from the tiles (double-buffer + margin)."""
    need = int(block_bytes) * 3
    return int(max(8 * 1024 * 1024, min(need, 48 * 1024 * 1024)))


def _sigmoid(x):
    return 1.0 / (1.0 + jnp.exp(-x))


def _softplus(x):
    return jnp.maximum(x, 0.0) + jnp.log(1.0 + jnp.exp(-jnp.abs(x)))


# ----------------------------------------------------------------------------
# Kernel A: per-layer node projections (for the edge MLP) + node mask.
#   grid=(L, node_tiles); bf16 MXU operands, f32 accumulation.
# ----------------------------------------------------------------------------
def node_proj_and_mask(cur_emb_bf, packed, noise_n, choosing_tmp):
    Np, Dp = cur_emb_bf.shape
    L = packed['ew1s'].shape[0]
    tN = NODE_TILE if (Np > NODE_TILE and Np % NODE_TILE == 0) else Np
    nN = Np // tN
    inv_tmp = 1.0 / float(choosing_tmp)

    def kernel(emb_ref, ew1s_ref, ew1d_ref, eb1_ref,
               nw1_ref, nb1_ref, nw2_ref, nb2_ref, nn_ref,
               hsrc_ref, hdst_ref, nmask_ref):
        x = emb_ref[...]                                          # (tN, Dp) bf16
        # edge-MLP first layer, split per endpoint (bias folded into src half)
        hsrc_ref[0] = (jnp.dot(x, ew1s_ref[0],
                               preferred_element_type=jnp.float32) + eb1_ref[0])
        hdst_ref[0] = jnp.dot(x, ew1d_ref[0],
                              preferred_element_type=jnp.float32)
        # node-mask MLP
        hn = jnp.dot(x, nw1_ref[0], preferred_element_type=jnp.float32)
        hn = jnp.maximum(hn + nb1_ref[0], 0.0)
        logit = jnp.sum(hn * nw2_ref[0], axis=1, keepdims=True) + nb2_ref[0]
        nmask_ref[0] = _sigmoid((nn_ref[0] + logit) * inv_tmp)

    blk_bytes = (tN * Dp * 2 + 3 * Dp * Dp * 2 + 4 * Dp * 4
                 + tN * 4 + 2 * tN * Dp * 4 + tN * 4)
    return pl.pallas_call(
        kernel,
        grid=(L, nN),
        in_specs=[
            pl.BlockSpec((tN, Dp), lambda l, n: (n, 0)),
            pl.BlockSpec((1, Dp, Dp), lambda l, n: (l, 0, 0)),
            pl.BlockSpec((1, Dp, Dp), lambda l, n: (l, 0, 0)),
            pl.BlockSpec((1, 1, Dp), lambda l, n: (l, 0, 0)),
            pl.BlockSpec((1, Dp, Dp), lambda l, n: (l, 0, 0)),
            pl.BlockSpec((1, 1, Dp), lambda l, n: (l, 0, 0)),
            pl.BlockSpec((1, 1, Dp), lambda l, n: (l, 0, 0)),
            pl.BlockSpec((1, 1, 1), lambda l, n: (l, 0, 0)),
            pl.BlockSpec((1, tN, 1), lambda l, n: (l, n, 0)),
        ],
        out_specs=(
            pl.BlockSpec((1, tN, Dp), lambda l, n: (l, n, 0)),
            pl.BlockSpec((1, tN, Dp), lambda l, n: (l, n, 0)),
            pl.BlockSpec((1, tN, 1), lambda l, n: (l, n, 0)),
        ),
        out_shape=(
            jax.ShapeDtypeStruct((L, Np, Dp), jnp.float32),
            jax.ShapeDtypeStruct((L, Np, Dp), jnp.float32),
            jax.ShapeDtypeStruct((L, Np, 1), jnp.float32),
        ),
        compiler_params=pltpu.CompilerParams(
            dimension_semantics=("parallel", "parallel"),
            vmem_limit_bytes=_vmem_limit(blk_bytes)),
    )(cur_emb_bf, packed['ew1s'], packed['ew1d'], packed['eb1'],
      packed['nw1'], packed['nb1'], packed['nw2'], packed['nb2'], noise_n)


# ----------------------------------------------------------------------------
# Kernel B: per-edge gate.  grid=(L, edge_tiles); ReLU + VPU mul + lane reduce
#           + sigmoid concrete relaxation.
# ----------------------------------------------------------------------------
def edge_gate(pre_e, ew2, eb2, noise_e, choosing_tmp):
    L, Ep, Dp = pre_e.shape
    tE = EDGE_TILE if (Ep > EDGE_TILE and Ep % EDGE_TILE == 0) else Ep
    nE = Ep // tE
    inv_tmp = 1.0 / float(choosing_tmp)

    def kernel(pe_ref, w2_ref, b2_ref, ne_ref, emask_ref):
        h = jnp.maximum(pe_ref[0], 0.0)                           # (tE, Dp)
        logit = jnp.sum(h * w2_ref[0], axis=1, keepdims=True) + b2_ref[0]
        emask_ref[0] = _sigmoid((ne_ref[0] + logit) * inv_tmp)

    blk_bytes = tE * Dp * 4 + Dp * 4 + tE * 4 + tE * 4
    return pl.pallas_call(
        kernel,
        grid=(L, nE),
        in_specs=[
            pl.BlockSpec((1, tE, Dp), lambda l, e: (l, e, 0)),
            pl.BlockSpec((1, 1, Dp), lambda l, e: (l, 0, 0)),
            pl.BlockSpec((1, 1, 1), lambda l, e: (l, 0, 0)),
            pl.BlockSpec((1, tE, 1), lambda l, e: (l, e, 0)),
        ],
        out_specs=pl.BlockSpec((1, tE, 1), lambda l, e: (l, e, 0)),
        out_shape=jax.ShapeDtypeStruct((L, Ep, 1), jnp.float32),
        compiler_params=pltpu.CompilerParams(
            dimension_semantics=("parallel", "parallel"),
            vmem_limit_bytes=_vmem_limit(blk_bytes)),
    )(pre_e, ew2, eb2, noise_e)


# ----------------------------------------------------------------------------
# Kernel C: tiled Y = A @ X.  A (Np,Np) bf16 tiled (tm,tk); X (Np,Dp) bf16
#           fully VMEM-resident (sliced in-kernel); accumulate into o_ref.
# ----------------------------------------------------------------------------
def tiled_matmul(a_bf16, x_bf16):
    Np = a_bf16.shape[0]
    Dp = x_bf16.shape[1]
    tm = Np if Np <= TILE else TILE
    tk = tm
    gi, gk = Np // tm, Np // tk

    def kernel(a_ref, x_ref, o_ref):
        @pl.when(pl.program_id(1) == 0)
        def _():
            o_ref[...] = jnp.zeros_like(o_ref)
        start = pl.multiple_of(pl.program_id(1) * tk, tk)
        xk = x_ref[pl.ds(start, tk), :]
        o_ref[...] += jnp.dot(a_ref[...], xk,
                              preferred_element_type=jnp.float32)

    blk_bytes = tm * tk * 2 + Np * Dp * 2 + tm * Dp * 4
    return pl.pallas_call(
        kernel,
        grid=(gi, gk),
        in_specs=[pl.BlockSpec((tm, tk), lambda i, k: (i, k)),
                  pl.BlockSpec((Np, Dp), lambda i, k: (0, 0))],   # resident RHS
        out_specs=pl.BlockSpec((tm, Dp), lambda i, k: (i, 0)),
        out_shape=jax.ShapeDtypeStruct((Np, Dp), jnp.float32),
        compiler_params=pltpu.CompilerParams(
            dimension_semantics=("parallel", "arbitrary"),
            vmem_limit_bytes=_vmem_limit(blk_bytes)),
    )(a_bf16, x_bf16)


# ----------------------------------------------------------------------------
# Kernel D: node mix+pool  mixed = m*X + (1-m)*(rw @ X), bf16 output.
# ----------------------------------------------------------------------------
def node_mix_pool(rw_bf16, x_bf16, x_f32, node_mask):
    Np = rw_bf16.shape[0]
    Dp = x_bf16.shape[1]
    tm = Np if Np <= TILE else TILE
    tk = tm
    gi, gk = Np // tm, Np // tk

    def kernel(rw_ref, x_ref, xi_ref, m_ref, o_ref, acc_ref):
        @pl.when(pl.program_id(1) == 0)
        def _():
            acc_ref[...] = jnp.zeros_like(acc_ref)
        start = pl.multiple_of(pl.program_id(1) * tk, tk)
        xk = x_ref[pl.ds(start, tk), :]
        acc_ref[...] += jnp.dot(rw_ref[...], xk,
                                preferred_element_type=jnp.float32)

        @pl.when(pl.program_id(1) == pl.num_programs(1) - 1)
        def _():
            m = m_ref[...]
            o_ref[...] = (m * xi_ref[...]
                          + (1.0 - m) * acc_ref[...]).astype(jnp.bfloat16)

    blk_bytes = (tm * tk * 2 + Np * Dp * 2 + tm * Dp * 4 + tm * 4
                 + tm * Dp * 4 + tm * Dp * 2)
    return pl.pallas_call(
        kernel,
        grid=(gi, gk),
        in_specs=[pl.BlockSpec((tm, tk), lambda i, k: (i, k)),
                  pl.BlockSpec((Np, Dp), lambda i, k: (0, 0)),    # resident RHS
                  pl.BlockSpec((tm, Dp), lambda i, k: (i, 0)),
                  pl.BlockSpec((tm, 1), lambda i, k: (i, 0))],
        out_specs=pl.BlockSpec((tm, Dp), lambda i, k: (i, 0)),
        out_shape=jax.ShapeDtypeStruct((Np, Dp), jnp.bfloat16),
        scratch_shapes=[pltpu.VMEM((tm, Dp), jnp.float32)],
        compiler_params=pltpu.CompilerParams(
            dimension_semantics=("parallel", "arbitrary"),
            vmem_limit_bytes=_vmem_limit(blk_bytes)),
    )(rw_bf16, x_bf16, x_f32, node_mask)


# ----------------------------------------------------------------------------
# Kernel E: batched BPR softplus terms (edge view & node view in one launch).
# ----------------------------------------------------------------------------
def bpr_softplus(u_stack, p_stack, n_stack):
    V, Bp, Dp = u_stack.shape

    def kernel(u_ref, p_ref, n_ref, o_ref):
        uv = u_ref[0]
        pos = jnp.sum(uv * p_ref[0], axis=1, keepdims=True)
        neg = jnp.sum(uv * n_ref[0], axis=1, keepdims=True)
        o_ref[0] = _softplus(neg - pos)

    return pl.pallas_call(
        kernel,
        grid=(V,),
        in_specs=[pl.BlockSpec((1, Bp, Dp), lambda v: (v, 0, 0))] * 3,
        out_specs=pl.BlockSpec((1, Bp, 1), lambda v: (v, 0, 0)),
        out_shape=jax.ShapeDtypeStruct((V, Bp, 1), jnp.float32),
        compiler_params=pltpu.CompilerParams(
            dimension_semantics=("parallel",)),
    )(u_stack, p_stack, n_stack)


# ----------------------------------------------------------------------------
# Kernel F: batched ssl_compute (four InfoNCE terms in one launch),
#           logsumexp-stabilized, duplicate columns masked out.
# ----------------------------------------------------------------------------
def ssl_mi(x1_stack, x2_stack, valid_t, ssl_temp):
    V, Bp, Dp = x1_stack.shape
    inv_t = 1.0 / float(ssl_temp)

    def kernel(x1_ref, x2_ref, vt_ref, o_ref):
        a = x1_ref[0]
        b = x2_ref[0]
        na = a * jax.lax.rsqrt(jnp.maximum(jnp.sum(a * a, axis=1, keepdims=True), 1e-24))
        nb = b * jax.lax.rsqrt(jnp.maximum(jnp.sum(b * b, axis=1, keepdims=True), 1e-24))
        pos = jnp.sum(na * nb, axis=1, keepdims=True)                     # (Bp,1)
        allsc = jax.lax.dot_general(na, nb, (((1,), (1,)), ((), ())),
                                    preferred_element_type=jnp.float32) + 1e-8
        s = allsc * inv_t
        s = jnp.where(vt_ref[0] > 0.5, s, -1e30)       # drop dup / padded columns
        m = jnp.max(s, axis=1, keepdims=True)
        lse = m + jnp.log(jnp.sum(jnp.exp(s - m), axis=1, keepdims=True))
        o_ref[0] = jnp.log(jnp.exp(pos * inv_t - lse) + 1e-8)

    return pl.pallas_call(
        kernel,
        grid=(V,),
        in_specs=[pl.BlockSpec((1, Bp, Dp), lambda v: (v, 0, 0)),
                  pl.BlockSpec((1, Bp, Dp), lambda v: (v, 0, 0)),
                  pl.BlockSpec((1, 1, Bp), lambda v: (v, 0, 0))],
        out_specs=pl.BlockSpec((1, Bp, 1), lambda v: (v, 0, 0)),
        out_shape=jax.ShapeDtypeStruct((V, Bp, 1), jnp.float32),
        compiler_params=pltpu.CompilerParams(
            dimension_semantics=("parallel",)),
    )(x1_stack, x2_stack, valid_t)


def first_occurrence_mask(ids):
    """1.0 on the first occurrence of each id, 0.0 on later duplicates."""
    eq = (ids[:, None] == ids[None, :]).astype(jnp.int32)
    dup = jnp.any(jnp.tril(eq, k=-1) > 0, axis=1)
    return jnp.where(dup, 0.0, 1.0).astype(jnp.float32)


# ----------------------------------------------------------------------------
# Graph construction (stands in for the __init__ preprocessing).
# ----------------------------------------------------------------------------
def build_graph(user_num, item_num, walk_length):
    n = user_num + item_num
    edges = set()
    for u in range(user_num):
        for it in (u % item_num, (3 * u + 1) % item_num, (5 * u + 2) % item_num):
            edges.add((u, user_num + it))
    sym = set()
    for (r, c) in edges:
        sym.add((r, c))
        sym.add((c, r))
    pairs = sorted(sym)           # coalesced COO order
    row = np.array([p[0] for p in pairs], dtype=np.int32)
    col = np.array([p[1] for p in pairs], dtype=np.int32)

    A = np.zeros((n, n), dtype=np.float32)
    A[row, col] = 1.0
    deg = A.sum(axis=1)
    dinv = np.power(deg + 1e-8, -0.5)
    dinv[np.isinf(dinv)] = 0.0
    a_norm = (dinv[:, None] * A) * dinv[None, :]

    # TODO(synk): torch_cluster.random_walk replaced by a deterministic walk.
    neigh = [np.nonzero(A[i])[0] for i in range(n)]
    rw = np.zeros((n, n), dtype=np.float32)
    for i in range(n):
        cur = i
        rw[i, cur] = 1.0
        for step in range(walk_length):
            if len(neigh[cur]) == 0:
                nxt = cur
            else:
                nxt = int(neigh[cur][(i + step) % len(neigh[cur])])
            rw[i, nxt] = 1.0
            cur = nxt
    d = rw.sum(axis=1)
    dinv = np.power(d + 1e-8, -1.0)
    dinv[np.isinf(dinv)] = 0.0
    rw = dinv[:, None] * rw

    return (jnp.asarray(row), jnp.asarray(col),
            jnp.asarray(a_norm), jnp.asarray(rw))


# ----------------------------------------------------------------------------
# Parameter init (per-layer, module-like) + packing into kernel layout.
# ----------------------------------------------------------------------------
def init_params(key, in_size, lcn_layer):
    params = {'edge': [], 'node': []}
    keys = jax.random.split(key, 4 * lcn_layer)
    k = 0
    for _ in range(lcn_layer):
        ew1 = 0.1 * jax.random.normal(keys[k], (2 * in_size, in_size), jnp.float32); k += 1
        eb1 = jnp.zeros((1, in_size), jnp.float32)
        ew2 = 0.1 * jax.random.normal(keys[k], (in_size, 1), jnp.float32); k += 1
        eb2 = jnp.zeros((1, 1), jnp.float32)
        params['edge'].append((ew1, eb1, ew2, eb2))
        nw1 = 0.1 * jax.random.normal(keys[k], (in_size, in_size), jnp.float32); k += 1
        nb1 = jnp.zeros((1, in_size), jnp.float32)
        nw2 = 0.1 * jax.random.normal(keys[k], (in_size, 1), jnp.float32); k += 1
        nb2 = jnp.zeros((1, 1), jnp.float32)
        params['node'].append((nw1, nb1, nw2, nb2))
    return params


def pack_mask_params(params, in_size):
    """Pad feature dims to 128 lanes, split edge-W1 per endpoint, stack layers.
    W1 weights stored in bf16 (MXU operands); biases / W2 row-vectors in f32."""
    D = in_size
    Dp = _lane_pad(D)
    L = len(params['edge'])
    ew1s = np.zeros((L, Dp, Dp), np.float32)
    ew1d = np.zeros((L, Dp, Dp), np.float32)
    eb1 = np.zeros((L, 1, Dp), np.float32)
    ew2 = np.zeros((L, 1, Dp), np.float32)
    eb2 = np.zeros((L, 1, 1), np.float32)
    nw1 = np.zeros((L, Dp, Dp), np.float32)
    nb1 = np.zeros((L, 1, Dp), np.float32)
    nw2 = np.zeros((L, 1, Dp), np.float32)
    nb2 = np.zeros((L, 1, 1), np.float32)
    for l in range(L):
        w1, b1, w2, b2 = [np.asarray(t) for t in params['edge'][l]]
        ew1s[l, :D, :D] = w1[:D]
        ew1d[l, :D, :D] = w1[D:]
        eb1[l, 0, :D] = b1[0]
        ew2[l, 0, :D] = w2[:, 0]
        eb2[l] = b2
        w1, b1, w2, b2 = [np.asarray(t) for t in params['node'][l]]
        nw1[l, :D, :D] = w1
        nb1[l, 0, :D] = b1[0]
        nw2[l, 0, :D] = w2[:, 0]
        nb2[l] = b2
    return dict(
        ew1s=jnp.asarray(ew1s).astype(jnp.bfloat16),
        ew1d=jnp.asarray(ew1d).astype(jnp.bfloat16),
        eb1=jnp.asarray(eb1), ew2=jnp.asarray(ew2), eb2=jnp.asarray(eb2),
        nw1=jnp.asarray(nw1).astype(jnp.bfloat16),
        nb1=jnp.asarray(nb1), nw2=jnp.asarray(nw2), nb2=jnp.asarray(nb2))


# ----------------------------------------------------------------------------
# Forward pass (mirrors Contrast_IB.forward)
# ----------------------------------------------------------------------------
def contrast_ib_forward(packed, graph, cur_user_emb, cur_item_emb,
                        original_user_emb, original_item_emb,
                        user_id, pos_item, neg_item,
                        noise_key, choosing_tmp, ssl_temp):
    row, col, a_norm, rw_adj = graph
    user_num = cur_user_emb.shape[0]
    item_num = cur_item_emb.shape[0]
    n_nodes = user_num + item_num
    E = int(row.shape[0])
    L = packed['ew1s'].shape[0]
    Dp = packed['ew1s'].shape[1]

    Np = n_nodes if n_nodes <= TILE else _round_up(n_nodes, TILE)
    Ep = _round_up(E, 8)
    if Ep > EDGE_TILE:
        Ep = _round_up(E, EDGE_TILE)

    # ---- lane-pad features; tile-pad node dim; bf16 copies for the MXU ----
    cur_emb_p = _pad2d(jnp.concatenate([cur_user_emb, cur_item_emb], axis=0), Np, Dp)
    cur_emb_bf = cur_emb_p.astype(jnp.bfloat16)
    emb0_p = _pad2d(jnp.concatenate([original_user_emb, original_item_emb], axis=0),
                    Np, Dp)
    a_norm_bf = _pad2d(a_norm, Np, Np).astype(jnp.bfloat16)
    rw_bf = _pad2d(rw_adj, Np, Np).astype(jnp.bfloat16)
    a_vals = a_norm[row, col]                                   # (E,) coalesced values

    # ---- concrete-relaxation noise (same formula as reference) ------------
    bias = 0.0 + 0.0001
    k_e, k_n = jax.random.split(noise_key)
    r_e = jax.random.uniform(k_e, (L, Ep, 1), dtype=jnp.float32)
    r_n = jax.random.uniform(k_n, (L, Np, 1), dtype=jnp.float32)
    eps_e = (bias - (1.0 - bias)) * r_e + (1.0 - bias)
    eps_n = (bias - (1.0 - bias)) * r_n + (1.0 - bias)
    noise_e = jnp.log(eps_e) - jnp.log(1.0 - eps_e)
    noise_n = jnp.log(eps_n) - jnp.log(1.0 - eps_n)

    # ---- masks: node projections + node gate, then per-edge gate ----------
    h_src, h_dst, node_mask = node_proj_and_mask(cur_emb_bf, packed, noise_n,
                                                 choosing_tmp)
    pre_e = h_src[:, row, :] + h_dst[:, col, :]                 # (L, E, Dp)
    pre_e = jnp.pad(pre_e, ((0, 0), (0, Ep - E), (0, 0)))
    edge_mask = edge_gate(pre_e, packed['ew2'], packed['eb2'], noise_e,
                          choosing_tmp)                         # (L, Ep, 1)

    edge_mask_e = edge_mask[:, :E, 0]                           # (L, E)
    edge_reg = jnp.sum(edge_mask_e * a_vals[None, :]) / (E * L)
    node_reg = jnp.sum(node_mask[:, :n_nodes, 0]) / (n_nodes * L)

    # ---- masked adjacencies (one batched scatter for all layers) ----------
    # TODO(synk): replace this dense O(L*N^2) build with a sparse segment-sum
    #             Pallas kernel for large graphs.
    masked_vals = (edge_mask_e * a_vals[None, :]).astype(jnp.bfloat16)
    a_masked_all = jnp.zeros((L, Np, Np), jnp.bfloat16).at[:, row, col].set(masked_vals)

    # ---- edge_dropout_view -------------------------------------------------
    emb = emb0_p
    emb_sum = emb0_p
    for l in range(L):
        emb = tiled_matmul(a_masked_all[l], emb.astype(jnp.bfloat16))
        emb_sum = emb_sum + emb
    all_edge = (emb_sum / (L + 1))[:n_nodes]
    user_edge, item_edge = all_edge[:user_num], all_edge[user_num:]

    # ---- node_dropout_view -------------------------------------------------
    emb = emb0_p
    emb_sum = emb0_p
    for l in range(L):
        mixed_bf = node_mix_pool(rw_bf, emb.astype(jnp.bfloat16), emb,
                                 node_mask[l])                  # (Np, Dp) bf16
        emb = tiled_matmul(a_norm_bf, mixed_bf)
        emb_sum = emb_sum + emb
    all_node = (emb_sum / (L + 1))[:n_nodes]
    user_node, item_node = all_node[:user_num], all_node[user_num:]

    # ---- BPR losses (both views in one batched launch) ---------------------
    B = int(user_id.shape[0])
    Bp = _round_up(B, 8)

    def pad_b(x):
        return jnp.pad(x, ((0, Bp - B), (0, 0)))

    u_stack = jnp.stack([pad_b(user_edge[user_id]), pad_b(user_node[user_id])])
    p_stack = jnp.stack([pad_b(item_edge[pos_item]), pad_b(item_node[pos_item])])
    n_stack = jnp.stack([pad_b(item_edge[neg_item]), pad_b(item_node[neg_item])])
    sp = bpr_softplus(u_stack, p_stack, n_stack)                # (2, Bp, 1)
    bmask = (jnp.arange(Bp) < B).astype(jnp.float32)
    bpr_vals = jnp.sum(sp[:, :, 0] * bmask[None, :], axis=1) / float(B)
    bpr_edge, bpr_node = bpr_vals[0], bpr_vals[1]

    # ---- mutual information (unique -> static first-occurrence mask) -------
    # TODO(synk): jnp.unique replaced by a static-shape first-occurrence mask.
    vu = jnp.pad(first_occurrence_mask(user_id), (0, Bp - B))
    vp = jnp.pad(first_occurrence_mask(pos_item), (0, Bp - B))
    cur_u_p = _pad2d(cur_user_emb, user_num, Dp)
    cur_i_p = _pad2d(cur_item_emb, item_num, Dp)
    x1 = jnp.stack([pad_b(user_edge[user_id]), pad_b(item_edge[pos_item]),
                    pad_b(user_node[user_id]), pad_b(item_node[pos_item])])
    x2 = jnp.stack([pad_b(cur_u_p[user_id]), pad_b(cur_i_p[pos_item]),
                    pad_b(cur_u_p[user_id]), pad_b(cur_i_p[pos_item])])
    v_stack = jnp.stack([vu, vp, vu, vp])                       # (4, Bp)
    vt_stack = v_stack[:, None, :]                              # (4, 1, Bp)
    mi = ssl_mi(x1, x2, vt_stack, ssl_temp)                     # (4, Bp, 1)
    ssl_scores = jnp.sum(mi[:, :, 0] * v_stack, axis=1) / jnp.sum(v_stack, axis=1)

    return (bpr_edge, bpr_node,
            ssl_scores[0], ssl_scores[1], ssl_scores[2], ssl_scores[3],
            edge_reg, node_reg)


# ----------------------------------------------------------------------------
# Demo
# ----------------------------------------------------------------------------
if __name__ == "__main__":
    USER_NUM = 8
    ITEM_NUM = 16
    IN_SIZE = 32
    LCN_LAYER = 2
    WALK_LENGTH = 3
    CHOOSING_TMP = 0.5
    SSL_TEMP = 0.2

    key = jax.random.PRNGKey(0)
    k_param, k_u, k_i, k_ou, k_oi, k_noise = jax.random.split(key, 6)

    params = init_params(k_param, IN_SIZE, LCN_LAYER)
    packed = pack_mask_params(params, IN_SIZE)
    graph = build_graph(USER_NUM, ITEM_NUM, WALK_LENGTH)

    cur_user_emb = 0.1 * jax.random.normal(k_u, (USER_NUM, IN_SIZE), jnp.float32)
    cur_item_emb = 0.1 * jax.random.normal(k_i, (ITEM_NUM, IN_SIZE), jnp.float32)
    original_user_emb = 0.1 * jax.random.normal(k_ou, (USER_NUM, IN_SIZE), jnp.float32)
    original_item_emb = 0.1 * jax.random.normal(k_oi, (ITEM_NUM, IN_SIZE), jnp.float32)

    user_id = jnp.array([0, 1, 2, 3, 4, 1], dtype=jnp.int32)   # contains a dup
    pos_item = jnp.array([0, 1, 2, 3, 4, 5], dtype=jnp.int32)
    neg_item = jnp.array([6, 7, 8, 9, 10, 11], dtype=jnp.int32)

    @jax.jit
    def run_forward(cu, ci, ou, oi, uid, pit, nit):
        return contrast_ib_forward(packed, graph, cu, ci, ou, oi,
                                   uid, pit, nit, k_noise,
                                   CHOOSING_TMP, SSL_TEMP)

    outs = run_forward(cur_user_emb, cur_item_emb,
                       original_user_emb, original_item_emb,
                       user_id, pos_item, neg_item)
    outs = jax.block_until_ready(outs)
    print("KERNEL_OK")
</pallas_src>

<mosaic_0001>
module attributes {stable_mosaic.version = 11 : i64} {
  func.func @kernel(%arg0: i32, %arg1: i32, %arg2: memref<24x128xbf16, #tpu.memory_space<vmem>>, %arg3: memref<1x128x128xbf16, #tpu.memory_space<vmem>>, %arg4: memref<1x128x128xbf16, #tpu.memory_space<vmem>>, %arg5: memref<1x1x128xf32, #tpu.memory_space<vmem>>, %arg6: memref<1x128x128xbf16, #tpu.memory_space<vmem>>, %arg7: memref<1x1x128xf32, #tpu.memory_space<vmem>>, %arg8: memref<1x1x128xf32, #tpu.memory_space<vmem>>, %arg9: memref<1x1x1xf32, #tpu.memory_space<vmem>>, %arg10: memref<1x24x1xf32, #tpu.memory_space<vmem>>, %arg11: memref<1x24x128xf32, #tpu.memory_space<vmem>>, %arg12: memref<1x24x128xf32, #tpu.memory_space<vmem>>, %arg13: memref<1x24x1xf32, #tpu.memory_space<vmem>>) attributes {dimension_semantics = [#tpu.dimension_semantics<parallel>, #tpu.dimension_semantics<parallel>], iteration_bounds = array<i64: 2, 1>, scalar_prefetch = 0 : i64, scratch_operands = 0 : i64, tpu.core_type = #tpu.core_type<tc>, window_params = [{transform_indices = @transform_0, window_bounds = array<i64: 24, 128>}, {transform_indices = @transform_1, window_bounds = array<i64: 1, 128, 128>}, {transform_indices = @transform_2, window_bounds = array<i64: 1, 128, 128>}, {transform_indices = @transform_3, window_bounds = array<i64: 1, 1, 128>}, {transform_indices = @transform_4, window_bounds = array<i64: 1, 128, 128>}, {transform_indices = @transform_5, window_bounds = array<i64: 1, 1, 128>}, {transform_indices = @transform_6, window_bounds = array<i64: 1, 1, 128>}, {transform_indices = @transform_7, window_bounds = array<i64: 1, 1, 1>}, {transform_indices = @transform_8, window_bounds = array<i64: 1, 24, 1>}, {transform_indices = @transform_9, window_bounds = array<i64: 1, 24, 128>}, {transform_indices = @transform_10, window_bounds = array<i64: 1, 24, 128>}, {transform_indices = @transform_11, window_bounds = array<i64: 1, 24, 1>}]} {
    %c0 = arith.constant 0 : index
    %c0_0 = arith.constant 0 : index
    %0 = vector.load %arg2[%c0, %c0_0] : memref<24x128xbf16, #tpu.memory_space<vmem>>, vector<24x128xbf16>
    %c0_1 = arith.constant 0 : index
    %c0_2 = arith.constant 0 : index
    %c0_3 = arith.constant 0 : index
    %1 = vector.load %arg3[%c0_1, %c0_2, %c0_3] : memref<1x128x128xbf16, #tpu.memory_space<vmem>>, vector<1x128x128xbf16>
    %2 = vector.shape_cast %1 : vector<1x128x128xbf16> to vector<128x128xbf16>
    %cst = arith.constant dense<0.000000e+00> : vector<24x128xf32>
    %3 = tpu.matmul %0, %2, %cst {dimension_numbers = #tpu.dot_dimension_numbers<[1], [0], [0], [1], [0, 0, 1, 1], [], []>} : vector<24x128xbf16>, vector<128x128xbf16>, vector<24x128xf32> -> vector<24x128xf32>
    %c0_4 = arith.constant 0 : index
    %c0_5 = arith.constant 0 : index
    %c0_6 = arith.constant 0 : index
    %4 = vector.load %arg5[%c0_4, %c0_5, %c0_6] : memref<1x1x128xf32, #tpu.memory_space<vmem>>, vector<1x1x128xf32>
    %5 = vector.shape_cast %4 : vector<1x1x128xf32> to vector<1x128xf32>
    %6 = vector.broadcast %5 : vector<1x128xf32> to vector<24x128xf32>
    %7 = arith.addf %3, %6 : vector<24x128xf32>
    %c0_7 = arith.constant 0 : index
    %c0_8 = arith.constant 0 : index
    %c0_9 = arith.constant 0 : index
    %8 = vector.load %arg11[%c0_7, %c0_8, %c0_9] : memref<1x24x128xf32, #tpu.memory_space<vmem>>, vector<1x24x128xf32>
    %9 = vector.shape_cast %8 : vector<1x24x128xf32> to vector<24x128xf32>
    %10 = vector.shape_cast %7 : vector<24x128xf32> to vector<1x24x128xf32>
    tpu.vector_store %arg11[%c0_7, %c0_8, %c0_9], %10 {strides = array<i32>} : memref<1x24x128xf32, #tpu.memory_space<vmem>>, vector<1x24x128xf32>,
    %c0_10 = arith.constant 0 : index
    %c0_11 = arith.constant 0 : index
    %c0_12 = arith.constant 0 : index
    %11 = vector.load %arg4[%c0_10, %c0_11, %c0_12] : memref<1x128x128xbf16, #tpu.memory_space<vmem>>, vector<1x128x128xbf16>
    %12 = vector.shape_cast %11 : vector<1x128x128xbf16> to vector<128x128xbf16>
    %cst_13 = arith.constant dense<0.000000e+00> : vector<24x128xf32>
    %13 = tpu.matmul %0, %12, %cst_13 {dimension_numbers = #tpu.dot_dimension_numbers<[1], [0], [0], [1], [0, 0, 1, 1], [], []>} : vector<24x128xbf16>, vector<128x128xbf16>, vector<24x128xf32> -> vector<24x128xf32>
    %c0_14 = arith.constant 0 : index
    %c0_15 = arith.constant 0 : index
    %c0_16 = arith.constant 0 : index
    %14 = vector.load %arg12[%c0_14, %c0_15, %c0_16] : memref<1x24x128xf32, #tpu.memory_space<vmem>>, vector<1x24x128xf32>
    %15 = vector.shape_cast %14 : vector<1x24x128xf32> to vector<24x128xf32>
    %16 = vector.shape_cast %13 : vector<24x128xf32> to vector<1x24x128xf32>
    tpu.vector_store %arg12[%c0_14, %c0_15, %c0_16], %16 {strides = array<i32>} : memref<1x24x128xf32, #tpu.memory_space<vmem>>, vector<1x24x128xf32>,
    %c0_17 = arith.constant 0 : index
    %c0_18 = arith.constant 0 : index
    %c0_19 = arith.constant 0 : index
    %17 = vector.load %arg6[%c0_17, %c0_18, %c0_19] : memref<1x128x128xbf16, #tpu.memory_space<vmem>>, vector<1x128x128xbf16>
    %18 = vector.shape_cast %17 : vector<1x128x128xbf16> to vector<128x128xbf16>
    %cst_20 = arith.constant dense<0.000000e+00> : vector<24x128xf32>
    %19 = tpu.matmul %0, %18, %cst_20 {dimension_numbers = #tpu.dot_dimension_numbers<[1], [0], [0], [1], [0, 0, 1, 1], [], []>} : vector<24x128xbf16>, vector<128x128xbf16>, vector<24x128xf32> -> vector<24x128xf32>
    %c0_21 = arith.constant 0 : index
    %c0_22 = arith.constant 0 : index
    %c0_23 = arith.constant 0 : index
    %20 = vector.load %arg7[%c0_21, %c0_22, %c0_23] : memref<1x1x128xf32, #tpu.memory_space<vmem>>, vector<1x1x128xf32>
    %21 = vector.shape_cast %20 : vector<1x1x128xf32> to vector<1x128xf32>
    %22 = vector.broadcast %21 : vector<1x128xf32> to vector<24x128xf32>
    %23 = arith.addf %19, %22 : vector<24x128xf32>
    %cst_24 = arith.constant 0.000000e+00 : f32
    %24 = vector.broadcast %cst_24 : f32 to vector<24x128xf32>
    %25 = arith.maximumf %23, %24 : vector<24x128xf32>
    %c0_25 = arith.constant 0 : index
    %c0_26 = arith.constant 0 : index
    %c0_27 = arith.constant 0 : index
    %26 = vector.load %arg8[%c0_25, %c0_26, %c0_27] : memref<1x1x128xf32, #tpu.memory_space<vmem>>, vector<1x1x128xf32>
    %27 = vector.shape_cast %26 : vector<1x1x128xf32> to vector<1x128xf32>
    %28 = vector.broadcast %27 : vector<1x128xf32> to vector<24x128xf32>
    %29 = arith.mulf %25, %28 : vector<24x128xf32>
    %cst_28 = arith.constant dense<0.000000e+00> : vector<24xf32>
    %30 = vector.multi_reduction <add>, %29, %cst_28 [1] : vector<24x128xf32> to vector<24xf32>
    %31 = vector.shape_cast %30 : vector<24xf32> to vector<24x1xf32>
    %c0_29 = arith.constant 0 : index
    %c0_30 = arith.constant 0 : index
    %c0_31 = arith.constant 0 : index
    %32 = vector.load %arg9[%c0_29, %c0_30, %c0_31] : memref<1x1x1xf32, #tpu.memory_space<vmem>>, vector<1x1x1xf32>
    %33 = vector.shape_cast %32 : vector<1x1x1xf32> to vector<1x1xf32>
    %34 = vector.broadcast %33 : vector<1x1xf32> to vector<24x1xf32>
    %35 = arith.addf %31, %34 : vector<24x1xf32>
    %c0_32 = arith.constant 0 : index
    %c0_33 = arith.constant 0 : index
    %c0_34 = arith.constant 0 : index
    %36 = vector.load %arg10[%c0_32, %c0_33, %c0_34] : memref<1x24x1xf32, #tpu.memory_space<vmem>>, vector<1x24x1xf32>
    %37 = vector.shape_cast %36 : vector<1x24x1xf32> to vector<24x1xf32>
    %38 = arith.addf %37, %35 : vector<24x1xf32>
    %cst_35 = arith.constant 2.000000e+00 : f32
    %39 = vector.broadcast %cst_35 : f32 to vector<24x1xf32>
    %40 = arith.mulf %38, %39 : vector<24x1xf32>
    %cst_36 = arith.constant 0.000000e+00 : f32
    %41 = vector.broadcast %cst_36 : f32 to vector<24x1xf32>
    %42 = arith.subf %41, %40 : vector<24x1xf32>
    %43 = math.exp %42 : vector<24x1xf32>
    %cst_37 = arith.constant 1.000000e+00 : f32
    %44 = vector.broadcast %cst_37 : f32 to vector<24x1xf32>
    %45 = arith.addf %44, %43 : vector<24x1xf32>
    %cst_38 = arith.constant 1.000000e+00 : f32
    %46 = vector.broadcast %cst_38 : f32 to vector<24x1xf32>
    %47 = arith.divf %46, %45 : vector<24x1xf32>
    %c0_39 = arith.constant 0 : index
    %c0_40 = arith.constant 0 : index
    %c0_41 = arith.constant 0 : index
    %48 = vector.load %arg13[%c0_39, %c0_40, %c0_41] : memref<1x24x1xf32, #tpu.memory_space<vmem>>, vector<1x24x1xf32>
    %49 = vector.shape_cast %48 : vector<1x24x1xf32> to vector<24x1xf32>
    %50 = vector.shape_cast %47 : vector<24x1xf32> to vector<1x24x1xf32>
    tpu.vector_store %arg13[%c0_39, %c0_40, %c0_41], %50 {strides = array<i32>} : memref<1x24x1xf32, #tpu.memory_space<vmem>>, vector<1x24x1xf32>,
    return
  }
  func.func @transform_0(%arg0: i32, %arg1: i32) -> (i32, i32) {
    %c0_i32 = arith.constant 0 : i32
    %c0_i32_0 = arith.constant 0 : i32
    return %arg1, %c0_i32 : i32, i32
  }
  func.func @transform_1(%arg0: i32, %arg1: i32) -> (i32, i32, i32) {
    %c0_i32 = arith.constant 0 : i32
    %c0_i32_0 = arith.constant 0 : i32
    %c0_i32_1 = arith.constant 0 : i32
    return %arg0, %c0_i32, %c0_i32_0 : i32, i32, i32
  }
  func.func @transform_2(%arg0: i32, %arg1: i32) -> (i32, i32, i32) {
    %c0_i32 = arith.constant 0 : i32
    %c0_i32_0 = arith.constant 0 : i32
    %c0_i32_1 = arith.constant 0 : i32
    return %arg0, %c0_i32, %c0_i32_0 : i32, i32, i32
  }
  func.func @transform_3(%arg0: i32, %arg1: i32) -> (i32, i32, i32) {
    %c0_i32 = arith.constant 0 : i32
    %c0_i32_0 = arith.constant 0 : i32
    %c0_i32_1 = arith.constant 0 : i32
    return %arg0, %c0_i32, %c0_i32_0 : i32, i32, i32
  }
  func.func @transform_4(%arg0: i32, %arg1: i32) -> (i32, i32, i32) {
    %c0_i32 = arith.constant 0 : i32
    %c0_i32_0 = arith.constant 0 : i32
    %c0_i32_1 = arith.constant 0 : i32
    return %arg0, %c0_i32, %c0_i32_0 : i32, i32, i32
  }
  func.func @transform_5(%arg0: i32, %arg1: i32) -> (i32, i32, i32) {
    %c0_i32 = arith.constant 0 : i32
    %c0_i32_0 = arith.constant 0 : i32
    %c0_i32_1 = arith.constant 0 : i32
    return %arg0, %c0_i32, %c0_i32_0 : i32, i32, i32
  }
  func.func @transform_6(%arg0: i32, %arg1: i32) -> (i32, i32, i32) {
    %c0_i32 = arith.constant 0 : i32
    %c0_i32_0 = arith.constant 0 : i32
    %c0_i32_1 = arith.constant 0 : i32
    return %arg0, %c0_i32, %c0_i32_0 : i32, i32, i32
  }
  func.func @transform_7(%arg0: i32, %arg1: i32) -> (i32, i32, i32) {
    %c0_i32 = arith.constant 0 : i32
    %c0_i32_0 = arith.constant 0 : i32
    %c0_i32_1 = arith.constant 0 : i32
    return %arg0, %c0_i32, %c0_i32_0 : i32, i32, i32
  }
  func.func @transform_8(%arg0: i32, %arg1: i32) -> (i32, i32, i32) {
    %c0_i32 = arith.constant 0 : i32
    %c0_i32_0 = arith.constant 0 : i32
    return %arg0, %arg1, %c0_i32 : i32, i32, i32
  }
  func.func @transform_9(%arg0: i32, %arg1: i32) -> (i32, i32, i32) {
    %c0_i32 = arith.constant 0 : i32
    %c0_i32_0 = arith.constant 0 : i32
    return %arg0, %arg1, %c0_i32 : i32, i32, i32
  }
  func.func @transform_10(%arg0: i32, %arg1: i32) -> (i32, i32, i32) {
    %c0_i32 = arith.constant 0 : i32
    %c0_i32_0 = arith.constant 0 : i32
    return %arg0, %arg1, %c0_i32 : i32, i32, i32
  }
  func.func @transform_11(%arg0: i32, %arg1: i32) -> (i32, i32, i32) {
    %c0_i32 = arith.constant 0 : i32
    %c0_i32_0 = arith.constant 0 : i32
    return %arg0, %arg1, %c0_i32 : i32, i32, i32
  }
}

module attributes {stable_mosaic.version = 11 : i64} {
  func.func @kernel(%arg0: i32, %arg1: i32, %arg2: memref<1x48x128xf32, #tpu.memory_space<vmem>>, %arg3: memref<1x1x128xf32, #tpu.memory_space<vmem>>, %arg4: memref<1x1x1xf32, #tpu.memory_space<vmem>>, %arg5: memref<1x48x1xf32, #tpu.memory_space<vmem>>, %arg6: memref<1x48x1xf32, #tpu.memory_space<vmem>>) attributes {dimension_semantics = [#tpu.dimension_semantics<parallel>, #tpu.dimension_semantics<parallel>], iteration_bounds = array<i64: 2, 1>, scalar_prefetch = 0 : i64, scratch_operands = 0 : i64, tpu.core_type = #tpu.core_type<tc>, window_params = [{transform_indices = @transform_0, window_bounds = array<i64: 1, 48, 128>}, {transform_indices = @transform_1, window_bounds = array<i64: 1, 1, 128>}, {transform_indices = @transform_2, window_bounds = array<i64: 1, 1, 1>}, {transform_indices = @transform_3, window_bounds = array<i64: 1, 48, 1>}, {transform_indices = @transform_4, window_bounds = array<i64: 1, 48, 1>}]} {
    %c0 = arith.constant 0 : index
    %c0_0 = arith.constant 0 : index
    %c0_1 = arith.constant 0 : index
    %0 = vector.load %arg2[%c0, %c0_0, %c0_1] : memref<1x48x128xf32, #tpu.memory_space<vmem>>, vector<1x48x128xf32>
    %1 = vector.shape_cast %0 : vector<1x48x128xf32> to vector<48x128xf32>
    %cst = arith.constant 0.000000e+00 : f32
    %2 = vector.broadcast %cst : f32 to vector<48x128xf32>
    %3 = arith.maximumf %1, %2 : vector<48x128xf32>
    %c0_2 = arith.constant 0 : index
    %c0_3 = arith.constant 0 : index
    %c0_4 = arith.constant 0 : index
    %4 = vector.load %arg3[%c0_2, %c0_3, %c0_4] : memref<1x1x128xf32, #tpu.memory_space<vmem>>, vector<1x1x128xf32>
    %5 = vector.shape_cast %4 : vector<1x1x128xf32> to vector<1x128xf32>
    %6 = vector.broadcast %5 : vector<1x128xf32> to vector<48x128xf32>
    %7 = arith.mulf %3, %6 : vector<48x128xf32>
    %cst_5 = arith.constant dense<0.000000e+00> : vector<48xf32>
    %8 = vector.multi_reduction <add>, %7, %cst_5 [1] : vector<48x128xf32> to vector<48xf32>
    %9 = vector.shape_cast %8 : vector<48xf32> to vector<48x1xf32>
    %c0_6 = arith.constant 0 : index
    %c0_7 = arith.constant 0 : index
    %c0_8 = arith.constant 0 : index
    %10 = vector.load %arg4[%c0_6, %c0_7, %c0_8] : memref<1x1x1xf32, #tpu.memory_space<vmem>>, vector<1x1x1xf32>
    %11 = vector.shape_cast %10 : vector<1x1x1xf32> to vector<1x1xf32>
    %12 = vector.broadcast %11 : vector<1x1xf32> to vector<48x1xf32>
    %13 = arith.addf %9, %12 : vector<48x1xf32>
    %c0_9 = arith.constant 0 : index
    %c0_10 = arith.constant 0 : index
    %c0_11 = arith.constant 0 : index
    %14 = vector.load %arg5[%c0_9, %c0_10, %c0_11] : memref<1x48x1xf32, #tpu.memory_space<vmem>>, vector<1x48x1xf32>
    %15 = vector.shape_cast %14 : vector<1x48x1xf32> to vector<48x1xf32>
    %16 = arith.addf %15, %13 : vector<48x1xf32>
    %cst_12 = arith.constant 2.000000e+00 : f32
    %17 = vector.broadcast %cst_12 : f32 to vector<48x1xf32>
    %18 = arith.mulf %16, %17 : vector<48x1xf32>
    %cst_13 = arith.constant 0.000000e+00 : f32
    %19 = vector.broadcast %cst_13 : f32 to vector<48x1xf32>
    %20 = arith.subf %19, %18 : vector<48x1xf32>
    %21 = math.exp %20 : vector<48x1xf32>
    %cst_14 = arith.constant 1.000000e+00 : f32
    %22 = vector.broadcast %cst_14 : f32 to vector<48x1xf32>
    %23 = arith.addf %22, %21 : vector<48x1xf32>
    %cst_15 = arith.constant 1.000000e+00 : f32
    %24 = vector.broadcast %cst_15 : f32 to vector<48x1xf32>
    %25 = arith.divf %24, %23 : vector<48x1xf32>
    %c0_16 = arith.constant 0 : index
    %c0_17 = arith.constant 0 : index
    %c0_18 = arith.constant 0 : index
    %26 = vector.load %arg6[%c0_16, %c0_17, %c0_18] : memref<1x48x1xf32, #tpu.memory_space<vmem>>, vector<1x48x1xf32>
    %27 = vector.shape_cast %26 : vector<1x48x1xf32> to vector<48x1xf32>
    %28 = vector.shape_cast %25 : vector<48x1xf32> to vector<1x48x1xf32>
    tpu.vector_store %arg6[%c0_16, %c0_17, %c0_18], %28 {strides = array<i32>} : memref<1x48x1xf32, #tpu.memory_space<vmem>>, vector<1x48x1xf32>,
    return
  }
  func.func @transform_0(%arg0: i32, %arg1: i32) -> (i32, i32, i32) {
    %c0_i32 = arith.constant 0 : i32
    %c0_i32_0 = arith.constant 0 : i32
    return %arg0, %arg1, %c0_i32 : i32, i32, i32
  }
  func.func @transform_1(%arg0: i32, %arg1: i32) -> (i32, i32, i32) {
    %c0_i32 = arith.constant 0 : i32
    %c0_i32_0 = arith.constant 0 : i32
    %c0_i32_1 = arith.constant 0 : i32
    return %arg0, %c0_i32, %c0_i32_0 : i32, i32, i32
  }
  func.func @transform_2(%arg0: i32, %arg1: i32) -> (i32, i32, i32) {
    %c0_i32 = arith.constant 0 : i32
    %c0_i32_0 = arith.constant 0 : i32
    %c0_i32_1 = arith.constant 0 : i32
    return %arg0, %c0_i32, %c0_i32_0 : i32, i32, i32
  }
  func.func @transform_3(%arg0: i32, %arg1: i32) -> (i32, i32, i32) {
    %c0_i32 = arith.constant 0 : i32
    %c0_i32_0 = arith.constant 0 : i32
    return %arg0, %arg1, %c0_i32 : i32, i32, i32
  }
  func.func @transform_4(%arg0: i32, %arg1: i32) -> (i32, i32, i32) {
    %c0_i32 = arith.constant 0 : i32
    %c0_i32_0 = arith.constant 0 : i32
    return %arg0, %arg1, %c0_i32 : i32, i32, i32
  }
}

module attributes {stable_mosaic.version = 11 : i64} {
  func.func @kernel(%arg0: i32, %arg1: i32, %arg2: memref<24x24xbf16, #tpu.memory_space<vmem>>, %arg3: memref<24x128xbf16, #tpu.memory_space<vmem>>, %arg4: memref<24x128xf32, #tpu.memory_space<vmem>>) attributes {dimension_semantics = [#tpu.dimension_semantics<parallel>, #tpu.dimension_semantics<arbitrary>], iteration_bounds = array<i64: 1, 1>, scalar_prefetch = 0 : i64, scratch_operands = 0 : i64, tpu.core_type = #tpu.core_type<tc>, window_params = [{transform_indices = @transform_0, window_bounds = array<i64: 24, 24>}, {pipeline_mode = #tpu.pipeline_mode<synchronous>, transform_indices = @transform_1, window_bounds = array<i64: 24, 128>}, {transform_indices = @transform_2, window_bounds = array<i64: 24, 128>}]} {
    %c0_i32 = arith.constant 0 : i32
    %0 = arith.cmpi eq, %arg1, %c0_i32 : i32
    %1 = arith.extui %0 : i1 to i32
    %c0_i32_0 = arith.constant 0 : i32
    %2 = arith.cmpi ne, %1, %c0_i32_0 : i32
    scf.if %2 {
      %cst_7 = arith.constant 0.000000e+00 : f32
      %12 = vector.broadcast %cst_7 : f32 to vector<24x128xf32>
      %c0_8 = arith.constant 0 : index
      %c0_9 = arith.constant 0 : index
      %13 = vector.load %arg4[%c0_8, %c0_9] : memref<24x128xf32, #tpu.memory_space<vmem>>, vector<24x128xf32>
      tpu.vector_store %arg4[%c0_8, %c0_9], %12 {strides = array<i32>} : memref<24x128xf32, #tpu.memory_space<vmem>>, vector<24x128xf32>,
    } else {
    }
    %c24_i32 = arith.constant 24 : i32
    %3 = arith.muli %arg1, %c24_i32 : i32
    %4 = tpu.assume_multiple %3, 24 : i32
    %5 = arith.index_cast %4 : i32 to index
    %c0 = arith.constant 0 : index
    %6 = vector.load %arg3[%5, %c0] : memref<24x128xbf16, #tpu.memory_space<vmem>>, vector<24x128xbf16>
    %c0_1 = arith.constant 0 : index
    %c0_2 = arith.constant 0 : index
    %7 = vector.load %arg4[%c0_1, %c0_2] : memref<24x128xf32, #tpu.memory_space<vmem>>, vector<24x128xf32>
    %c0_3 = arith.constant 0 : index
    %c0_4 = arith.constant 0 : index
    %8 = vector.load %arg2[%c0_3, %c0_4] : memref<24x24xbf16, #tpu.memory_space<vmem>>, vector<24x24xbf16>
    %cst = arith.constant dense<0.000000e+00> : vector<24x128xf32>
    %9 = tpu.matmul %8, %6, %cst {dimension_numbers = #tpu.dot_dimension_numbers<[1], [0], [0], [1], [0, 0, 1, 1], [], []>} : vector<24x24xbf16>, vector<24x128xbf16>, vector<24x128xf32> -> vector<24x128xf32>
    %10 = arith.addf %7, %9 : vector<24x128xf32>
    %c0_5 = arith.constant 0 : index
    %c0_6 = arith.constant 0 : index
    %11 = vector.load %arg4[%c0_5, %c0_6] : memref<24x128xf32, #tpu.memory_space<vmem>>, vector<24x128xf32>
    tpu.vector_store %arg4[%c0_5, %c0_6], %10 {strides = array<i32>} : memref<24x128xf32, #tpu.memory_space<vmem>>, vector<24x128xf32>,
    return
  }
  func.func @transform_0(%arg0: i32, %arg1: i32) -> (i32, i32) {
    %c0_i32 = arith.constant 0 : i32
    return %arg0, %arg1 : i32, i32
  }
  func.func @transform_1(%arg0: i32, %arg1: i32) -> (i32, i32) {
    %c0_i32 = arith.constant 0 : i32
    %c0_i32_0 = arith.constant 0 : i32
    %c0_i32_1 = arith.constant 0 : i32
    return %c0_i32, %c0_i32_0 : i32, i32
  }
  func.func @transform_2(%arg0: i32, %arg1: i32) -> (i32, i32) {
    %c0_i32 = arith.constant 0 : i32
    %c0_i32_0 = arith.constant 0 : i32
    return %arg0, %c0_i32 : i32, i32
  }
}

module attributes {stable_mosaic.version = 11 : i64} {
  func.func @kernel(%arg0: i32, %arg1: i32, %arg2: memref<24x24xbf16, #tpu.memory_space<vmem>>, %arg3: memref<24x128xbf16, #tpu.memory_space<vmem>>, %arg4: memref<24x128xf32, #tpu.memory_space<vmem>>, %arg5: memref<24x1xf32, #tpu.memory_space<vmem>>, %arg6: memref<24x128xbf16, #tpu.memory_space<vmem>>, %arg7: memref<24x128xf32, #tpu.memory_space<vmem>>) attributes {dimension_semantics = [#tpu.dimension_semantics<parallel>, #tpu.dimension_semantics<arbitrary>], iteration_bounds = array<i64: 1, 1>, scalar_prefetch = 0 : i64, scratch_operands = 1 : i64, tpu.core_type = #tpu.core_type<tc>, window_params = [{transform_indices = @transform_0, window_bounds = array<i64: 24, 24>}, {pipeline_mode = #tpu.pipeline_mode<synchronous>, transform_indices = @transform_1, window_bounds = array<i64: 24, 128>}, {transform_indices = @transform_2, window_bounds = array<i64: 24, 128>}, {transform_indices = @transform_3, window_bounds = array<i64: 24, 1>}, {transform_indices = @transform_4, window_bounds = array<i64: 24, 128>}]} {
    %c0_i32 = arith.constant 0 : i32
    %0 = arith.cmpi eq, %arg1, %c0_i32 : i32
    %1 = arith.extui %0 : i1 to i32
    %c0_i32_0 = arith.constant 0 : i32
    %2 = arith.cmpi ne, %1, %c0_i32_0 : i32
    scf.if %2 {
      %cst_9 = arith.constant 0.000000e+00 : f32
      %15 = vector.broadcast %cst_9 : f32 to vector<24x128xf32>
      %c0_10 = arith.constant 0 : index
      %c0_11 = arith.constant 0 : index
      %16 = vector.load %arg7[%c0_10, %c0_11] : memref<24x128xf32, #tpu.memory_space<vmem>>, vector<24x128xf32>
      tpu.vector_store %arg7[%c0_10, %c0_11], %15 {strides = array<i32>} : memref<24x128xf32, #tpu.memory_space<vmem>>, vector<24x128xf32>,
    } else {
    }
    %c24_i32 = arith.constant 24 : i32
    %3 = arith.muli %arg1, %c24_i32 : i32
    %4 = tpu.assume_multiple %3, 24 : i32
    %5 = arith.index_cast %4 : i32 to index
    %c0 = arith.constant 0 : index
    %6 = vector.load %arg3[%5, %c0] : memref<24x128xbf16, #tpu.memory_space<vmem>>, vector<24x128xbf16>
    %c0_1 = arith.constant 0 : index
    %c0_2 = arith.constant 0 : index
    %7 = vector.load %arg7[%c0_1, %c0_2] : memref<24x128xf32, #tpu.memory_space<vmem>>, vector<24x128xf32>
    %c0_3 = arith.constant 0 : index
    %c0_4 = arith.constant 0 : index
    %8 = vector.load %arg2[%c0_3, %c0_4] : memref<24x24xbf16, #tpu.memory_space<vmem>>, vector<24x24xbf16>
    %cst = arith.constant dense<0.000000e+00> : vector<24x128xf32>
    %9 = tpu.matmul %8, %6, %cst {dimension_numbers = #tpu.dot_dimension_numbers<[1], [0], [0], [1], [0, 0, 1, 1], [], []>} : vector<24x24xbf16>, vector<24x128xbf16>, vector<24x128xf32> -> vector<24x128xf32>
    %10 = arith.addf %7, %9 : vector<24x128xf32>
    %c0_5 = arith.constant 0 : index
    %c0_6 = arith.constant 0 : index
    %11 = vector.load %arg7[%c0_5, %c0_6] : memref<24x128xf32, #tpu.memory_space<vmem>>, vector<24x128xf32>
    tpu.vector_store %arg7[%c0_5, %c0_6], %10 {strides = array<i32>} : memref<24x128xf32, #tpu.memory_space<vmem>>, vector<24x128xf32>,
    %c0_i32_7 = arith.constant 0 : i32
    %12 = arith.cmpi eq, %arg1, %c0_i32_7 : i32
    %13 = arith.extui %12 : i1 to i32
    %c0_i32_8 = arith.constant 0 : i32
    %14 = arith.cmpi ne, %13, %c0_i32_8 : i32
    scf.if %14 {
      %c0_9 = arith.constant 0 : index
      %c0_10 = arith.constant 0 : index
      %15 = vector.load %arg5[%c0_9, %c0_10] : memref<24x1xf32, #tpu.memory_space<vmem>>, vector<24x1xf32>
      %c0_11 = arith.constant 0 : index
      %c0_12 = arith.constant 0 : index
      %16 = vector.load %arg4[%c0_11, %c0_12] : memref<24x128xf32, #tpu.memory_space<vmem>>, vector<24x128xf32>
      %17 = vector.broadcast %15 : vector<24x1xf32> to vector<24x128xf32>
      %18 = arith.mulf %17, %16 : vector<24x128xf32>
      %cst_13 = arith.constant 1.000000e+00 : f32
      %19 = vector.broadcast %cst_13 : f32 to vector<24x1xf32>
      %20 = arith.subf %19, %15 : vector<24x1xf32>
      %c0_14 = arith.constant 0 : index
      %c0_15 = arith.constant 0 : index
      %21 = vector.load %arg7[%c0_14, %c0_15] : memref<24x128xf32, #tpu.memory_space<vmem>>, vector<24x128xf32>
      %22 = vector.broadcast %20 : vector<24x1xf32> to vector<24x128xf32>
      %23 = arith.mulf %22, %21 : vector<24x128xf32>
      %24 = arith.addf %18, %23 : vector<24x128xf32>
      %25 = arith.truncf %24 : vector<24x128xf32> to vector<24x128xbf16>
      %c0_16 = arith.constant 0 : index
      %c0_17 = arith.constant 0 : index
      %26 = vector.load %arg6[%c0_16, %c0_17] : memref<24x128xbf16, #tpu.memory_space<vmem>>, vector<24x128xbf16>
      tpu.vector_store %arg6[%c0_16, %c0_17], %25 {strides = array<i32>} : memref<24x128xbf16, #tpu.memory_space<vmem>>, vector<24x128xbf16>,
    } else {
    }
    return
  }
  func.func @transform_0(%arg0: i32, %arg1: i32) -> (i32, i32) {
    %c0_i32 = arith.constant 0 : i32
    return %arg0, %arg1 : i32, i32
  }
  func.func @transform_1(%arg0: i32, %arg1: i32) -> (i32, i32) {
    %c0_i32 = arith.constant 0 : i32
    %c0_i32_0 = arith.constant 0 : i32
    %c0_i32_1 = arith.constant 0 : i32
    return %c0_i32, %c0_i32_0 : i32, i32
  }
  func.func @transform_2(%arg0: i32, %arg1: i32) -> (i32, i32) {
    %c0_i32 = arith.constant 0 : i32
    %c0_i32_0 = arith.constant 0 : i32
    return %arg0, %c0_i32 : i32, i32
  }
  func.func @transform_3(%arg0: i32, %arg1: i32) -> (i32, i32) {
    %c0_i32 = arith.constant 0 : i32
    %c0_i32_0 = arith.constant 0 : i32
    return %arg0, %c0_i32 : i32, i32
  }
  func.func @transform_4(%arg0: i32, %arg1: i32) -> (i32, i32) {
    %c0_i32 = arith.constant 0 : i32
    %c0_i32_0 = arith.constant 0 : i32
    return %arg0, %c0_i32 : i32, i32
  }
}

module attributes {stable_mosaic.version = 11 : i64} {
  func.func @kernel(%arg0: i32, %arg1: memref<1x8x128xf32, #tpu.memory_space<vmem>>, %arg2: memref<1x8x128xf32, #tpu.memory_space<vmem>>, %arg3: memref<1x1x8xf32, #tpu.memory_space<vmem>>, %arg4: memref<1x8x1xf32, #tpu.memory_space<vmem>>) attributes {dimension_semantics = [#tpu.dimension_semantics<parallel>], iteration_bounds = array<i64: 4>, scalar_prefetch = 0 : i64, scratch_operands = 0 : i64, tpu.core_type = #tpu.core_type<tc>, window_params = [{transform_indices = @transform_0, window_bounds = array<i64: 1, 8, 128>}, {transform_indices = @transform_1, window_bounds = array<i64: 1, 8, 128>}, {transform_indices = @transform_2, window_bounds = array<i64: 1, 1, 8>}, {transform_indices = @transform_3, window_bounds = array<i64: 1, 8, 1>}]} {
    %c0 = arith.constant 0 : index
    %c0_0 = arith.constant 0 : index
    %c0_1 = arith.constant 0 : index
    %0 = vector.load %arg1[%c0, %c0_0, %c0_1] : memref<1x8x128xf32, #tpu.memory_space<vmem>>, vector<1x8x128xf32>
    %1 = vector.shape_cast %0 : vector<1x8x128xf32> to vector<8x128xf32>
    %c0_2 = arith.constant 0 : index
    %c0_3 = arith.constant 0 : index
    %c0_4 = arith.constant 0 : index
    %2 = vector.load %arg2[%c0_2, %c0_3, %c0_4] : memref<1x8x128xf32, #tpu.memory_space<vmem>>, vector<1x8x128xf32>
    %3 = vector.shape_cast %2 : vector<1x8x128xf32> to vector<8x128xf32>
    %4 = arith.mulf %1, %1 : vector<8x128xf32>
    %cst = arith.constant dense<0.000000e+00> : vector<8xf32>
    %5 = vector.multi_reduction <add>, %4, %cst [1] : vector<8x128xf32> to vector<8xf32>
    %6 = vector.shape_cast %5 : vector<8xf32> to vector<8x1xf32>
    %cst_5 = arith.constant 1.000000e-24 : f32
    %7 = vector.broadcast %cst_5 : f32 to vector<8x1xf32>
    %8 = arith.maximumf %6, %7 : vector<8x1xf32>
    %9 = math.rsqrt %8 : vector<8x1xf32>
    %10 = vector.broadcast %9 : vector<8x1xf32> to vector<8x128xf32>
    %11 = arith.mulf %1, %10 : vector<8x128xf32>
    %12 = arith.mulf %3, %3 : vector<8x128xf32>
    %cst_6 = arith.constant dense<0.000000e+00> : vector<8xf32>
    %13 = vector.multi_reduction <add>, %12, %cst_6 [1] : vector<8x128xf32> to vector<8xf32>
    %14 = vector.shape_cast %13 : vector<8xf32> to vector<8x1xf32>
    %cst_7 = arith.constant 1.000000e-24 : f32
    %15 = vector.broadcast %cst_7 : f32 to vector<8x1xf32>
    %16 = arith.maximumf %14, %15 : vector<8x1xf32>
    %17 = math.rsqrt %16 : vector<8x1xf32>
    %18 = vector.broadcast %17 : vector<8x1xf32> to vector<8x128xf32>
    %19 = arith.mulf %3, %18 : vector<8x128xf32>
    %20 = arith.mulf %11, %19 : vector<8x128xf32>
    %cst_8 = arith.constant dense<0.000000e+00> : vector<8xf32>
    %21 = vector.multi_reduction <add>, %20, %cst_8 [1] : vector<8x128xf32> to vector<8xf32>
    %22 = vector.shape_cast %21 : vector<8xf32> to vector<8x1xf32>
    %cst_9 = arith.constant dense<0.000000e+00> : vector<8x8xf32>
    %23 = tpu.matmul %11, %19, %cst_9 {dimension_numbers = #tpu.dot_dimension_numbers<[1], [1], [0], [0], [0, 0, 1, 0], [], []>} : vector<8x128xf32>, vector<8x128xf32>, vector<8x8xf32> -> vector<8x8xf32>
    %cst_10 = arith.constant 9.99999993E-9 : f32
    %24 = vector.broadcast %cst_10 : f32 to vector<8x8xf32>
    %25 = arith.addf %23, %24 : vector<8x8xf32>
    %cst_11 = arith.constant 5.000000e+00 : f32
    %26 = vector.broadcast %cst_11 : f32 to vector<8x8xf32>
    %27 = arith.mulf %25, %26 : vector<8x8xf32>
    %c0_12 = arith.constant 0 : index
    %c0_13 = arith.constant 0 : index
    %c0_14 = arith.constant 0 : index
    %28 = vector.load %arg3[%c0_12, %c0_13, %c0_14] : memref<1x1x8xf32, #tpu.memory_space<vmem>>, vector<1x1x8xf32>
    %29 = vector.shape_cast %28 : vector<1x1x8xf32> to vector<1x8xf32>
    %cst_15 = arith.constant 5.000000e-01 : f32
    %30 = vector.broadcast %cst_15 : f32 to vector<1x8xf32>
    %31 = arith.cmpf ogt, %29, %30 : vector<1x8xf32>
    %cst_16 = arith.constant -1.000000e+30 : f32
    %32 = vector.shape_cast %31 : vector<1x8xi1> to vector<1x8xi1>
    %33 = vector.broadcast %32 : vector<1x8xi1> to vector<8x8xi1>
    %34 = vector.broadcast %cst_16 : f32 to vector<8x8xf32>
    %35 = arith.select %33, %27, %34 : vector<8x8xi1>, vector<8x8xf32>
    %cst_17 = arith.constant dense<0xFF800000> : vector<8xf32>
    %36 = vector.multi_reduction <maximumf>, %35, %cst_17 [1] : vector<8x8xf32> to vector<8xf32>
    %37 = vector.shape_cast %36 : vector<8xf32> to vector<8x1xf32>
    %38 = vector.broadcast %37 : vector<8x1xf32> to vector<8x8xf32>
    %39 = arith.subf %35, %38 : vector<8x8xf32>
    %40 = math.exp %39 : vector<8x8xf32>
    %cst_18 = arith.constant dense<0.000000e+00> : vector<8xf32>
    %41 = vector.multi_reduction <add>, %40, %cst_18 [1] : vector<8x8xf32> to vector<8xf32>
    %42 = vector.shape_cast %41 : vector<8xf32> to vector<8x1xf32>
    %43 = math.log %42 : vector<8x1xf32>
    %44 = arith.addf %37, %43 : vector<8x1xf32>
    %cst_19 = arith.constant 5.000000e+00 : f32
    %45 = vector.broadcast %cst_19 : f32 to vector<8x1xf32>
    %46 = arith.mulf %22, %45 : vector<8x1xf32>
    %47 = arith.subf %46, %44 : vector<8x1xf32>
    %48 = math.exp %47 : vector<8x1xf32>
    %cst_20 = arith.constant 9.99999993E-9 : f32
    %49 = vector.broadcast %cst_20 : f32 to vector<8x1xf32>
    %50 = arith.addf %48, %49 : vector<8x1xf32>
    %51 = math.log %50 : vector<8x1xf32>
    %c0_21 = arith.constant 0 : index
    %c0_22 = arith.constant 0 : index
    %c0_23 = arith.constant 0 : index
    %52 = vector.load %arg4[%c0_21, %c0_22, %c0_23] : memref<1x8x1xf32, #tpu.memory_space<vmem>>, vector<1x8x1xf32>
    %53 = vector.shape_cast %52 : vector<1x8x1xf32> to vector<8x1xf32>
    %54 = vector.shape_cast %51 : vector<8x1xf32> to vector<1x8x1xf32>
    tpu.vector_store %arg4[%c0_21, %c0_22, %c0_23], %54 {strides = array<i32>} : memref<1x8x1xf32, #tpu.memory_space<vmem>>, vector<1x8x1xf32>,
    return
  }
  func.func @transform_0(%arg0: i32) -> (i32, i32, i32) {
    %c0_i32 = arith.constant 0 : i32
    %c0_i32_0 = arith.constant 0 : i32
    %c0_i32_1 = arith.constant 0 : i32
    return %arg0, %c0_i32, %c0_i32_0 : i32, i32, i32
  }
  func.func @transform_1(%arg0: i32) -> (i32, i32, i32) {
    %c0_i32 = arith.constant 0 : i32
    %c0_i32_0 = arith.constant 0 : i32
    %c0_i32_1 = arith.constant 0 : i32
    return %arg0, %c0_i32, %c0_i32_0 : i32, i32, i32
  }
  func.func @transform_2(%arg0: i32) -> (i32, i32, i32) {
    %c0_i32 = arith.constant 0 : i32
    %c0_i32_0 = arith.constant 0 : i32
    %c0_i32_1 = arith.constant 0 : i32
    return %arg0, %c0_i32, %c0_i32_0 : i32, i32, i32
  }
  func.func @transform_3(%arg0: i32) -> (i32, i32, i32) {
    %c0_i32 = arith.constant 0 : i32
    %c0_i32_0 = arith.constant 0 : i32
    %c0_i32_1 = arith.constant 0 : i32
    return %arg0, %c0_i32, %c0_i32_0 : i32, i32, i32
  }
}

module attributes {stable_mosaic.version = 11 : i64} {
  func.func @kernel(%arg0: i32, %arg1: memref<1x8x128xf32, #tpu.memory_space<vmem>>, %arg2: memref<1x8x128xf32, #tpu.memory_space<vmem>>, %arg3: memref<1x8x128xf32, #tpu.memory_space<vmem>>, %arg4: memref<1x8x1xf32, #tpu.memory_space<vmem>>) attributes {dimension_semantics = [#tpu.dimension_semantics<parallel>], iteration_bounds = array<i64: 2>, scalar_prefetch = 0 : i64, scratch_operands = 0 : i64, tpu.core_type = #tpu.core_type<tc>, window_params = [{transform_indices = @transform_0, window_bounds = array<i64: 1, 8, 128>}, {transform_indices = @transform_1, window_bounds = array<i64: 1, 8, 128>}, {transform_indices = @transform_2, window_bounds = array<i64: 1, 8, 128>}, {transform_indices = @transform_3, window_bounds = array<i64: 1, 8, 1>}]} {
    %c0 = arith.constant 0 : index
    %c0_0 = arith.constant 0 : index
    %c0_1 = arith.constant 0 : index
    %0 = vector.load %arg1[%c0, %c0_0, %c0_1] : memref<1x8x128xf32, #tpu.memory_space<vmem>>, vector<1x8x128xf32>
    %1 = vector.shape_cast %0 : vector<1x8x128xf32> to vector<8x128xf32>
    %c0_2 = arith.constant 0 : index
    %c0_3 = arith.constant 0 : index
    %c0_4 = arith.constant 0 : index
    %2 = vector.load %arg2[%c0_2, %c0_3, %c0_4] : memref<1x8x128xf32, #tpu.memory_space<vmem>>, vector<1x8x128xf32>
    %3 = vector.shape_cast %2 : vector<1x8x128xf32> to vector<8x128xf32>
    %4 = arith.mulf %1, %3 : vector<8x128xf32>
    %cst = arith.constant dense<0.000000e+00> : vector<8xf32>
    %5 = vector.multi_reduction <add>, %4, %cst [1] : vector<8x128xf32> to vector<8xf32>
    %6 = vector.shape_cast %5 : vector<8xf32> to vector<8x1xf32>
    %c0_5 = arith.constant 0 : index
    %c0_6 = arith.constant 0 : index
    %c0_7 = arith.constant 0 : index
    %7 = vector.load %arg3[%c0_5, %c0_6, %c0_7] : memref<1x8x128xf32, #tpu.memory_space<vmem>>, vector<1x8x128xf32>
    %8 = vector.shape_cast %7 : vector<1x8x128xf32> to vector<8x128xf32>
    %9 = arith.mulf %1, %8 : vector<8x128xf32>
    %cst_8 = arith.constant dense<0.000000e+00> : vector<8xf32>
    %10 = vector.multi_reduction <add>, %9, %cst_8 [1] : vector<8x128xf32> to vector<8xf32>
    %11 = vector.shape_cast %10 : vector<8xf32> to vector<8x1xf32>
    %12 = arith.subf %11, %6 : vector<8x1xf32>
    %cst_9 = arith.constant 0.000000e+00 : f32
    %13 = vector.broadcast %cst_9 : f32 to vector<8x1xf32>
    %14 = arith.maximumf %12, %13 : vector<8x1xf32>
    %15 = math.absf %12 : vector<8x1xf32>
    %cst_10 = arith.constant 0.000000e+00 : f32
    %16 = vector.broadcast %cst_10 : f32 to vector<8x1xf32>
    %17 = arith.subf %16, %15 : vector<8x1xf32>
    %18 = math.exp %17 : vector<8x1xf32>
    %cst_11 = arith.constant 1.000000e+00 : f32
    %19 = vector.broadcast %cst_11 : f32 to vector<8x1xf32>
    %20 = arith.addf %19, %18 : vector<8x1xf32>
    %21 = math.log %20 : vector<8x1xf32>
    %22 = arith.addf %14, %21 : vector<8x1xf32>
    %c0_12 = arith.constant 0 : index
    %c0_13 = arith.constant 0 : index
    %c0_14 = arith.constant 0 : index
    %23 = vector.load %arg4[%c0_12, %c0_13, %c0_14] : memref<1x8x1xf32, #tpu.memory_space<vmem>>, vector<1x8x1xf32>
    %24 = vector.shape_cast %23 : vector<1x8x1xf32> to vector<8x1xf32>
    %25 = vector.shape_cast %22 : vector<8x1xf32> to vector<1x8x1xf32>
    tpu.vector_store %arg4[%c0_12, %c0_13, %c0_14], %25 {strides = array<i32>} : memref<1x8x1xf32, #tpu.memory_space<vmem>>, vector<1x8x1xf32>,
    return
  }
  func.func @transform_0(%arg0: i32) -> (i32, i32, i32) {
    %c0_i32 = arith.constant 0 : i32
    %c0_i32_0 = arith.constant 0 : i32
    %c0_i32_1 = arith.constant 0 : i32
    return %arg0, %c0_i32, %c0_i32_0 : i32, i32, i32
  }
  func.func @transform_1(%arg0: i32) -> (i32, i32, i32) {
    %c0_i32 = arith.constant 0 : i32
    %c0_i32_0 = arith.constant 0 : i32
    %c0_i32_1 = arith.constant 0 : i32
    return %arg0, %c0_i32, %c0_i32_0 : i32, i32, i32
  }
  func.func @transform_2(%arg0: i32) -> (i32, i32, i32) {
    %c0_i32 = arith.constant 0 : i32
    %c0_i32_0 = arith.constant 0 : i32
    %c0_i32_1 = arith.constant 0 : i32
    return %arg0, %c0_i32, %c0_i32_0 : i32, i32, i32
  }
  func.func @transform_3(%arg0: i32) -> (i32, i32, i32) {
    %c0_i32 = arith.constant 0 : i32
    %c0_i32_0 = arith.constant 0 : i32
    %c0_i32_1 = arith.constant 0 : i32
    return %arg0, %c0_i32, %c0_i32_0 : i32, i32, i32
  }
}

</mosaic_0001>

<llo_original>
// kernel: run_forward.11
$region0: #{run_forward.11}
  #allocation0 [shape = 'u32[]', space=smem, size = 0x4, offset = 0x4, fixed_abs, tag = 'smem constant byte address 0x4 - core index']
  #allocation1 [shape = 'u32[144,128]{1,0:T(1,128)}', space=vmem, size = 0x12000, scoped, tag = 'internal scratch']
  %s0 = inlined_call_operand.vmem [shape: f32[2,48,128], index: 0, kind: input, shape index: {}]
  %s1 = inlined_call_operand.vmem [shape: f32[2,1,128], index: 1, kind: input, shape index: {}]
  %s2 = inlined_call_operand.vmem [shape: f32[2,1,1], index: 2, kind: input, shape index: {}]
  %s3 = inlined_call_operand.vmem [shape: f32[2,48,1], index: 3, kind: input, shape index: {}]
  %s4 = inlined_call_operand.vmem [shape: f32[2,48,1], index: 4, kind: output, shape index: {}]
  %s5 = sld [smem:[#allocation0]]
  $region49: #{run_forward.11} parent=0
    _
  %s7 = ssub.s32 1, %s5
  %s8 = scalar_select 0, %s7, %s5
  loop: start=0, step=1, limit=4
  $region2: #{run_forward.11} parent=0 // loop_pre_header
    _
  $region3: #{run_forward.11} parent=0 // loop_header
    %s10 = sphi 0, %s14
    %p11 = scmp.ge.s32.totalorder %s10, 4
    %s17 = sphi 0, %s29
    %s18 = sphi 0, %s25
    %s19 = sphi 0, %s17
    %s20 = sphi 0, %s18
    %s21 = sphi 0, %s19
    %s22 = sphi 0, %s20
    %s34 = sphi 0, %s36
    %s37 = sphi 0, %s34
    %s38 = sphi 0, %s37
    %s54 = sphi 0, %s38
    %s60 = sphi 0, %s62
    %s63 = sphi 0, %s60
    %s64 = sphi 0, %s63
    %s80 = sphi 0, %s64
    %s86 = sphi 0, %s88
    %s89 = sphi 0, %s86
    %s90 = sphi 0, %s89
    %s106 = sphi 0, %s90
    %s114 = sphi 0, %s116
    %s117 = sphi 0, %s114
    %s118 = sphi 0, %s117
    %s134 = sphi 0, %s118
    %s142 = sphi 0, %s144
    %s145 = sphi 0, %s142
    %s146 = sphi 0, %s145
    %s162 = sphi 0, %s146
  $region4: #{run_forward.11} parent=0 // loop_header_branch
    %13 = sbr.rel (%p11) target = $region8
  $region5: #{run_forward.11} parent=0 // loop_body
    %s15 = ssub.s32 %s10, 1
    %s16 = ssub.s32 %s10, 2
    %s23 = sadd.s32 1, %s18
    %p24 = scmp.ge.s32.totalorder %s23, 1
    %s25 = scalar_select %p24, 0, %s23
    %s26 = sadd.s32 1, %s17
    %s27 = scalar_select %p24, %s26, %s17
    %p28 = scmp.ge.s32.totalorder %s27, 2
    %s29 = scalar_select %p28, 0, %s27
    %s30 = ssub.s32 %s17, %s29
    %s31 = ssub.s32 %s18, %s25
    %s32 = sor.u32 %s30, %s31
    %p33 = scmp.eq.s32.totalorder %s32, 0
    %s35 = sadd.s32 %s34, 1
    %s36 = scalar_select %p33, %s34, %s35
    %p39 = pneg %p33
    %p40 = scmp.eq.s32.totalorder %s10, 1
    %p41 = por %p39, %p40
    %p42 = scmp.ne.s32.totalorder %s34, %s37
    %p43 = scmp.eq.s32.totalorder %s10, 0
    %p44 = por %p42, %p43
    %p45 = scmp.ne.s32.totalorder %s34, %s37
    %p46 = scmp.eq.s32.totalorder %s15, 1
    %p47 = por %p45, %p46
    %p48 = scmp.ne.s32.totalorder %s37, %s38
    %p49 = scmp.eq.s32.totalorder %s15, 0
    %p50 = por %p48, %p49
    %p51 = scmp.ne.s32.totalorder %s37, %s38
    %p52 = scmp.eq.s32.totalorder %s16, 1
    %p53 = por %p51, %p52
    %p55 = scmp.ne.s32.totalorder %s38, %s54
    %p56 = scmp.eq.s32.totalorder %s16, 0
    %p57 = por %p55, %p56
    %s58 = ssub.s32 %s17, %s29
    %p59 = scmp.eq.s32.totalorder %s58, 0
    %s61 = sadd.s32 %s60, 1
    %s62 = scalar_select %p59, %s60, %s61
    %p65 = pneg %p59
    %p66 = scmp.eq.s32.totalorder %s10, 1
    %p67 = por %p65, %p66
    %p68 = scmp.ne.s32.totalorder %s60, %s63
    %p69 = scmp.eq.s32.totalorder %s10, 0
    %p70 = por %p68, %p69
    %p71 = scmp.ne.s32.totalorder %s60, %s63
    %p72 = scmp.eq.s32.totalorder %s15, 1
    %p73 = por %p71, %p72
    %p74 = scmp.ne.s32.totalorder %s63, %s64
    %p75 = scmp.eq.s32.totalorder %s15, 0
    %p76 = por %p74, %p75
    %p77 = scmp.ne.s32.totalorder %s63, %s64
    %p78 = scmp.eq.s32.totalorder %s16, 1
    %p79 = por %p77, %p78
    %p81 = scmp.ne.s32.totalorder %s64, %s80
    %p82 = scmp.eq.s32.totalorder %s16, 0
    %p83 = por %p81, %p82
    %s84 = ssub.s32 %s17, %s29
    %p85 = scmp.eq.s32.totalorder %s84, 0
    %s87 = sadd.s32 %s86, 1
    %s88 = scalar_select %p85, %s86, %s87
    %p91 = pneg %p85
    %p92 = scmp.eq.s32.totalorder %s10, 1
    %p93 = por %p91, %p92
    %p94 = scmp.ne.s32.totalorder %s86, %s89
    %p95 = scmp.eq.s32.totalorder %s10, 0
    %p96 = por %p94, %p95
    %p97 = scmp.ne.s32.totalorder %s86, %s89
    %p98 = scmp.eq.s32.totalorder %s15, 1
    %p99 = por %p97, %p98
    %p100 = scmp.ne.s32.totalorder %s89, %s90
    %p101 = scmp.eq.s32.totalorder %s15, 0
    %p102 = por %p100, %p101
    %p103 = scmp.ne.s32.totalorder %s89, %s90
    %p104 = scmp.eq.s32.totalorder %s16, 1
    %p105 = por %p103, %p104
    %p107 = scmp.ne.s32.totalorder %s90, %s106
    %p108 = scmp.eq.s32.totalorder %s16, 0
    %p109 = por %p107, %p108
    %s110 = ssub.s32 %s17, %s29
    %s111 = ssub.s32 %s18, %s25
    %s112 = sor.u32 %s110, %s111
    %p113 = scmp.eq.s32.totalorder %s112, 0
    %s115 = sadd.s32 %s114, 1
    %s116 = scalar_select %p113, %s114, %s115
    %p119 = pneg %p113
    %p120 = scmp.eq.s32.totalorder %s10, 1
    %p121 = por %p119, %p120
    %p122 = scmp.ne.s32.totalorder %s114, %s117
    %p123 = scmp.eq.s32.totalorder %s10, 0
    %p124 = por %p122, %p123
    %p125 = scmp.ne.s32.totalorder %s114, %s117
    %p126 = scmp.eq.s32.totalorder %s15, 1
    %p127 = por %p125, %p126
    %p128 = scmp.ne.s32.totalorder %s117, %s118
    %p129 = scmp.eq.s32.totalorder %s15, 0
    %p130 = por %p128, %p129
    %p131 = scmp.ne.s32.totalorder %s117, %s118
    %p132 = scmp.eq.s32.totalorder %s16, 1
    %p133 = por %p131, %p132
    %p135 = scmp.ne.s32.totalorder %s118, %s134
    %p136 = scmp.eq.s32.totalorder %s16, 0
    %p137 = por %p135, %p136
    %s138 = ssub.s32 %s17, %s29
    %s139 = ssub.s32 %s18, %s25
    %s140 = sor.u32 %s138, %s139
    %p141 = scmp.eq.s32.totalorder %s140, 0
    %s143 = sadd.s32 %s142, 1
    %s144 = scalar_select %p141, %s142, %s143
    %p147 = pneg %p141
    %p148 = scmp.eq.s32.totalorder %s10, 1
    %p149 = por %p147, %p148
    %p150 = scmp.ne.s32.totalorder %s142, %s145
    %p151 = scmp.eq.s32.totalorder %s10, 0
    %p152 = por %p150, %p151
    %p153 = scmp.ne.s32.totalorder %s142, %s145
    %p154 = scmp.eq.s32.totalorder %s15, 1
    %p155 = por %p153, %p154
    %p156 = scmp.ne.s32.totalorder %s145, %s146
    %p157 = scmp.eq.s32.totalorder %s15, 0
    %p158 = por %p156, %p157
    %p159 = scmp.ne.s32.totalorder %s145, %s146
    %p160 = scmp.eq.s32.totalorder %s16, 1
    %p161 = por %p159, %p160
    %p163 = scmp.ne.s32.totalorder %s146, %s162
    %p164 = scmp.eq.s32.totalorder %s16, 0
    %p165 = por %p163, %p164
    %p166 = scmp.le.s32.totalorder 1, %s10
    %p167 = scmp.lt.s32.totalorder %s10, 3
    %p168 = pnand %p166, %p167
    %p169 = pneg %p168
    // Predicated region
    $region9: #{run_forward.11} parent=5 // pred_check
      _
    $region10: #{run_forward.11} parent=5 // pred_check_branch
      %171 = sbr.rel (%p168) target = $region12
    $region11: #{run_forward.11} parent=5 // pred_region
      %s172 = ssub.s32 %s10, 1
    $region12: #{run_forward.11} parent=5 // pred_fallthru
      _
    %p173 = scmp.lt.s32.totalorder %s10, 2
    // Predicated region
    $region13: #{run_forward.11} parent=5 // pred_check
      %p174 = pneg %p173
    $region14: #{run_forward.11} parent=5 // pred_check_branch
      %176 = sbr.rel (%p174) target = $region16
    $region15: #{run_forward.11} parent=5 // pred_region
      // Predicated region
      $region17: #{run_forward.11} parent=15 // pred_check
        %p177 = pneg %p44
      $region18: #{run_forward.11} parent=15 // pred_check_branch
        %179 = sbr.rel (%p177) target = $region20
      $region19: #{run_forward.11} parent=15 // pred_region
        %s180 = smul.u32 6, %s18
        %p181 = scmp.lt.s32.totalorder %s17, 1
        %s182 = scalar_select %p181, %s17, 1
        %p183 = scmp.lt.s32.totalorder %s180, 5
        %s184 = scalar_select %p183, %s180, 5
        %s185 = smul.addr %s182, 6
        %s186 = sadd.s32 %s184, %s185
        %s187 = smul.addr %s186, 8
        %s188 = scalar_lea.vmem %s0, %s187
        %s189 = smul.u32 6, %s18
      $region20: #{run_forward.11} parent=15 // pred_fallthru
        _
      // Predicated region
      $region21: #{run_forward.11} parent=15 // pred_check
        %p190 = pneg %p70
      $region22: #{run_forward.11} parent=15 // pred_check_branch
        %192 = sbr.rel (%p190) target = $region24
      $region23: #{run_forward.11} parent=15 // pred_region
        %p193 = scmp.lt.s32.totalorder %s17, 1
        %s194 = scalar_select %p193, %s17, 1
        %s195 = scalar_lea.vmem %s1, %s194
      $region24: #{run_forward.11} parent=15 // pred_fallthru
        _
      // Predicated region
      $region25: #{run_forward.11} parent=15 // pred_check
        %p196 = pneg %p96
      $region26: #{run_forward.11} parent=15 // pred_check_branch
        %198 = sbr.rel (%p196) target = $region28
      $region27: #{run_forward.11} parent=15 // pred_region
        %p199 = scmp.lt.s32.totalorder %s17, 1
        %s200 = scalar_select %p199, %s17, 1
        %s201 = scalar_lea.vmem %s2, %s200
      $region28: #{run_forward.11} parent=15 // pred_fallthru
        _
      // Predicated region
      $region29: #{run_forward.11} parent=15 // pred_check
        %p202 = pneg %p124
      $region30: #{run_forward.11} parent=15 // pred_check_branch
        %204 = sbr.rel (%p202) target = $region32
      $region31: #{run_forward.11} parent=15 // pred_region
        %s205 = smul.u32 6, %s18
        %p206 = scmp.lt.s32.totalorder %s17, 1
        %s207 = scalar_select %p206, %s17, 1
        %p208 = scmp.lt.s32.totalorder %s205, 5
        %s209 = scalar_select %p208, %s205, 5
        %s210 = smul.addr %s207, 6
        %s211 = sadd.s32 %s209, %s210
        %s212 = smul.addr %s211, 8
        %s213 = scalar_lea.vmem %s3, %s212
        %s214 = smul.u32 6, %s18
      $region32: #{run_forward.11} parent=15 // pred_fallthru
        _
    $region16: #{run_forward.11} parent=5 // pred_fallthru
      _
    %p215 = scmp.le.s32.totalorder 1, %s10
    %p216 = scmp.lt.s32.totalorder %s10, 3
    %p217 = pnand %p215, %p216
    %p218 = pneg %p217
    // Predicated region
    $region33: #{run_forward.11} parent=5 // pred_check
      _
    $region34: #{run_forward.11} parent=5 // pred_check_branch
      %220 = sbr.rel (%p217) target = $region36
    $region35: #{run_forward.11} parent=5 // pred_region
      %s221 = ssub.s32 %s10, 1
      %s222 = smul.u32 6, %s20
      %p223 = scmp.lt.s32.totalorder %s19, 1
      %s224 = scalar_select %p223, %s19, 1
      %p225 = scmp.lt.s32.totalorder %s222, 5
      %s226 = scalar_select %p225, %s222, 5
      %s227 = smul.addr %s224, 6
      %s228 = sadd.s32 %s226, %s227
      %s229 = smul.addr %s228, 8
      %s230 = scalar_lea.vmem %s0, %s229
      %p231 = pneg %p50
      %p232 = pneg %p47
      %p233 = scmp.lt.s32.totalorder %s19, 1
      %s234 = scalar_select %p233, %s19, 1
      %s235 = scalar_lea.vmem %s1, %s234
      %p236 = pneg %p76
      %p237 = pneg %p73
      %p238 = scmp.lt.s32.totalorder %s19, 1
      %s239 = scalar_select %p238, %s19, 1
      %s240 = scalar_lea.vmem %s2, %s239
      %p241 = pneg %p102
      %p242 = pneg %p99
      %s243 = smul.u32 6, %s20
      %p244 = scmp.lt.s32.totalorder %s19, 1
      %s245 = scalar_select %p244, %s19, 1
      %p246 = scmp.lt.s32.totalorder %s243, 5
      %s247 = scalar_select %p246, %s243, 5
      %s248 = smul.addr %s245, 6
      %s249 = sadd.s32 %s247, %s248
      %s250 = smul.addr %s249, 8
      %s251 = scalar_lea.vmem %s3, %s250
      %p252 = pneg %p130
      %p253 = pneg %p127
      %p254 = pneg %p158
      %p255 = pneg %p155
      %s256 = smul.u32 6, %s20
      %p257 = scmp.lt.s32.totalorder %s19, 1
      %s258 = scalar_select %p257, %s19, 1
      %p259 = scmp.lt.s32.totalorder %s256, 5
      %s260 = scalar_select %p259, %s256, 5
      %s261 = smul.addr %s258, 6
      %s262 = sadd.s32 %s260, %s261
      %s263 = smul.addr %s262, 8
      %s264 = scalar_lea.vmem %s4, %s263
      %s265 = smul.u32 6, %s20
      %p266 = scmp.lt.s32.totalorder %s19, 1
      %s267 = scalar_select %p266, %s19, 1
      %p268 = scmp.lt.s32.totalorder %s265, 5
      %s269 = scalar_select %p268, %s265, 5
      %s270 = smul.addr %s267, 6
      %s271 = sadd.s32 %s269, %s270
      %s272 = smul.addr %s271, 8
      %s273 = scalar_lea.vmem %s0, %s272
      %s274 = smul.u32 6, %s20
      %p275 = scmp.lt.s32.totalorder %s19, 1
      %s276 = scalar_select %p275, %s19, 1
      %s277 = scalar_lea.vmem %s1, %s276
      %p278 = scmp.lt.s32.totalorder %s19, 1
      %s279 = scalar_select %p278, %s19, 1
      %s280 = scalar_lea.vmem %s2, %s279
      %s281 = smul.u32 6, %s20
      %p282 = scmp.lt.s32.totalorder %s19, 1
      %s283 = scalar_select %p282, %s19, 1
      %p284 = scmp.lt.s32.totalorder %s281, 5
      %s285 = scalar_select %p284, %s281, 5
      %s286 = smul.addr %s283, 6
      %s287 = sadd.s32 %s285, %s286
      %s288 = smul.addr %s287, 8
      %s289 = scalar_lea.vmem %s3, %s288
      %s290 = smul.u32 6, %s20
      %s291 = smul.u32 6, %s20
      %p292 = scmp.lt.s32.totalorder %s19, 1
      %s293 = scalar_select %p292, %s19, 1
      %p294 = scmp.lt.s32.totalorder %s291, 5
      %s295 = scalar_select %p294, %s291, 5
      %s296 = smul.addr %s293, 6
      %s297 = sadd.s32 %s295, %s296
      %s298 = smul.addr %s297, 8
      %s299 = scalar_lea.vmem %s4, %s298
      %s300 = smul.u32 6, %s20
      %v301 = vld [vmem:[%s273] sm:$0xff]
      %v302 = vld [vmem:[%s273 + $0x8] sm:$0xff]
      %v303 = vld [vmem:[%s273 + $0x10] sm:$0xff]
      %v304 = vld [vmem:[%s273 + $0x18] sm:$0xff]
      %v305 = vld [vmem:[%s273 + $0x20] sm:$0xff]
      %v306 = vld [vmem:[%s273 + $0x28] sm:$0xff]
      %v307 = vmax.f32 %v301, 0.0
      %v308 = vmax.f32 %v302, 0.0
      %v309 = vmax.f32 %v303, 0.0
      %v310 = vmax.f32 %v304, 0.0
      %v311 = vmax.f32 %v305, 0.0
      %v312 = vmax.f32 %v306, 0.0
      %v313 = vld [vmem:[%s277] sm:$0x1]
      %v315 = vlaneseq
      %v316 = vshrl.u32 %v315, 7
      %v317 = vsub.s32 0, %v316
      %v318 = vrot.slane %v313, %v317
      %v320 = vmul.f32 %v307, %v318
      %v321 = vmul.f32 %v308, %v318
      %v322 = vmul.f32 %v309, %v318
      %v323 = vmul.f32 %v310, %v318
      %v324 = vmul.f32 %v311, %v318
      %v325 = vmul.f32 %v312, %v318
      %326 = vadd.xlane.f32.xlu0 %v320
      %v327 = vpop.xlane.xlu0 %326
      %328 = vadd.xlane.f32.xlu0 %v321
      %v329 = vpop.xlane.xlu0 %328
      %330 = vadd.xlane.f32.xlu0 %v322
      %v331 = vpop.xlane.xlu0 %330
      %332 = vadd.xlane.f32.xlu0 %v323
      %v333 = vpop.xlane.xlu0 %332
      %334 = vadd.xlane.f32.xlu0 %v324
      %v335 = vpop.xlane.xlu0 %334
      %336 = vadd.xlane.f32.xlu0 %v325
      %v337 = vpop.xlane.xlu0 %336
      %v338 = vld [vmem:[%s280] sm:$0x1]
      %v340 = vlaneseq
      %v341 = vshrl.u32 %v340, 7
      %v342 = vsub.s32 0, %v341
      %v343 = vrot.slane %v338, %v342
      %v345 = vadd.f32 %v327, %v343
      %v346 = vadd.f32 %v329, %v343
      %v347 = vadd.f32 %v331, %v343
      %v348 = vadd.f32 %v333, %v343
      %v349 = vadd.f32 %v335, %v343
      %v350 = vadd.f32 %v337, %v343
      %v351 = vld [vmem:[%s289] sm:$0xff]
      %v352 = vld [vmem:[%s289 + $0x8] sm:$0xff]
      %v353 = vld [vmem:[%s289 + $0x10] sm:$0xff]
      %v354 = vld [vmem:[%s289 + $0x18] sm:$0xff]
      %v355 = vld [vmem:[%s289 + $0x20] sm:$0xff]
      %v356 = vld [vmem:[%s289 + $0x28] sm:$0xff]
      %v357 = vadd.f32 %v351, %v345
      %v358 = vadd.f32 %v352, %v346
      %v359 = vadd.f32 %v353, %v347
      %v360 = vadd.f32 %v354, %v348
      %v361 = vadd.f32 %v355, %v349
      %v362 = vadd.f32 %v356, %v350
      %v363 = vmul.f32 %v357, 2.0
      %v364 = vmul.f32 %v358, 2.0
      %v365 = vmul.f32 %v359, 2.0
      %v366 = vmul.f32 %v360, 2.0
      %v367 = vmul.f32 %v361, 2.0
      %v368 = vmul.f32 %v362, 2.0
      %v369 = vsub.f32 0.0, %v363
      %v370 = vsub.f32 0.0, %v364
      %v371 = vsub.f32 0.0, %v365
      %v372 = vsub.f32 0.0, %v366
      %v373 = vsub.f32 0.0, %v367
      %v374 = vsub.f32 0.0, %v368
      %v375 = vmul.f32 %v369, 1.442695
      %v376 = vpow.pop %v375
      %v377 = vmul.f32 %v370, 1.442695
      %v378 = vpow.pop %v377
      %v379 = vmul.f32 %v371, 1.442695
      %v380 = vpow.pop %v379
      %v381 = vmul.f32 %v372, 1.442695
      %v382 = vpow.pop %v381
      %v383 = vmul.f32 %v373, 1.442695
      %v384 = vpow.pop %v383
      %v385 = vmul.f32 %v374, 1.442695
      %v386 = vpow.pop %v385
      %v387 = vadd.f32 %v376, 1.0
      %v388 = vadd.f32 %v378, 1.0
      %v389 = vadd.f32 %v380, 1.0
      %v390 = vadd.f32 %v382, 1.0
      %v391 = vadd.f32 %v384, 1.0
      %v392 = vadd.f32 %v386, 1.0
      %v393 = vrcp.pop %v387
      %v394 = vmul.f32 1.0, %v393
      %v395 = vrcp.pop %v388
      %v396 = vmul.f32 1.0, %v395
      %v397 = vrcp.pop %v389
      %v398 = vmul.f32 1.0, %v397
      %v399 = vrcp.pop %v390
      %v400 = vmul.f32 1.0, %v399
      %v401 = vrcp.pop %v391
      %v402 = vmul.f32 1.0, %v401
      %v403 = vrcp.pop %v392
      %v404 = vmul.f32 1.0, %v403
      %vm405 = vcmask 7168
      %406 = vst.msk [vmem:[%s299] sm:$0xff] %vm405, %v394
      %407 = vst.msk [vmem:[%s299 + $0x8] sm:$0xff] %vm405, %v396
      %408 = vst.msk [vmem:[%s299 + $0x10] sm:$0xff] %vm405, %v398
      %409 = vst.msk [vmem:[%s299 + $0x18] sm:$0xff] %vm405, %v400
      %410 = vst.msk [vmem:[%s299 + $0x20] sm:$0xff] %vm405, %v402
      %411 = vst.msk [vmem:[%s299 + $0x28] sm:$0xff] %vm405, %v404
      %s412 = smul.u32 6, %s20
      %p413 = scmp.lt.s32.totalorder %s19, 1
      %s414 = scalar_select %p413, %s19, 1
      %p415 = scmp.lt.s32.totalorder %s412, 5
      %s416 = scalar_select %p415, %s412, 5
      %s417 = smul.addr %s414, 6
      %s418 = sadd.s32 %s416, %s417
      %s419 = smul.addr %s418, 8
      %s420 = scalar_lea.vmem %s4, %s419
      // Predicated region
      $region37: #{run_forward.11} parent=35 // pred_check
        %p421 = pneg %p155
      $region38: #{run_forward.11} parent=35 // pred_check_branch
        %423 = sbr.rel (%p421) target = $region40
      $region39: #{run_forward.11} parent=35 // pred_region
        %s424 = smul.u32 6, %s20
      $region40: #{run_forward.11} parent=35 // pred_fallthru
        _
    $region36: #{run_forward.11} parent=5 // pred_fallthru
      _
    %p425 = scmp.le.s32.totalorder 2, %s10
    // Predicated region
    $region41: #{run_forward.11} parent=5 // pred_check
      %p426 = pneg %p425
    $region42: #{run_forward.11} parent=5 // pred_check_branch
      %428 = sbr.rel (%p426) target = $region44
    $region43: #{run_forward.11} parent=5 // pred_region
      %s429 = ssub.s32 %s10, 2
      // Predicated region
      $region45: #{run_forward.11} parent=43 // pred_check
        %p430 = pneg %p161
      $region46: #{run_forward.11} parent=43 // pred_check_branch
        %432 = sbr.rel (%p430) target = $region48
      $region47: #{run_forward.11} parent=43 // pred_region
        %s433 = smul.u32 6, %s22
        %p434 = scmp.lt.s32.totalorder %s21, 1
        %s435 = scalar_select %p434, %s21, 1
        %p436 = scmp.lt.s32.totalorder %s433, 5
        %s437 = scalar_select %p436, %s433, 5
        %s438 = smul.addr %s435, 6
        %s439 = sadd.s32 %s437, %s438
        %s440 = smul.addr %s439, 8
        %s441 = scalar_lea.vmem %s4, %s440
      $region48: #{run_forward.11} parent=43 // pred_fallthru
        _
    $region44: #{run_forward.11} parent=5 // pred_fallthru
      _
  $region6: #{run_forward.11} parent=0 // loop_footer
    %s14 = sadd.s32 1, %s10
  $region7: #{run_forward.11} parent=0 // loop_footer_branch
    %9 = sbr.rel target = $region3
  $region8: #{run_forward.11} parent=0 // loop_exit
    _

// kernel: run_forward.10
$region0: #{run_forward.10}
  #allocation0 [shape = 'u32[]', space=smem, size = 0x4, offset = 0x4, fixed_abs, tag = 'smem constant byte address 0x4 - core index']
  #allocation1 [shape = 'u32[144,128]{1,0:T(1,128)}', space=vmem, size = 0x12000, scoped, tag = 'internal scratch']
  %s0 = inlined_call_operand.vmem [shape: bf16[24,128], index: 0, kind: input, shape index: {}]
  %s1 = inlined_call_operand.vmem [shape: bf16[2,128,128], index: 1, kind: input, shape index: {}]
  %s2 = inlined_call_operand.hbm [shape: bf16[2,128,128], index: 2, kind: input, shape index: {}]
  %s3 = inlined_call_operand.vmem [shape: f32[2,1,128], index: 3, kind: input, shape index: {}, may-alias: {3,5}]
  %s4 = inlined_call_operand.hbm [shape: bf16[2,128,128], index: 4, kind: input, shape index: {}]
  %s5 = inlined_call_operand.vmem [shape: f32[2,1,128], index: 5, kind: input, shape index: {}, may-alias: {3,5}]
  %s6 = inlined_call_operand.vmem [shape: f32[2,1,128], index: 6, kind: input, shape index: {}]
  %s7 = inlined_call_operand.vmem [shape: f32[2,1,1], index: 7, kind: input, shape index: {}]
  %s8 = inlined_call_operand.vmem [shape: f32[2,24,1], index: 8, kind: input, shape index: {}]
  %s9 = inlined_call_operand.vmem [shape: f32[2,24,128], index: 9, kind: output, shape index: {0}]
  %s10 = inlined_call_operand.vmem [shape: f32[2,24,128], index: 10, kind: output, shape index: {1}]
  %s11 = inlined_call_operand.vmem [shape: f32[2,24,1], index: 11, kind: output, shape index: {2}]
  %12 = xla_tuple %s9, %s10, %s11
  %s13 = sld [smem:[#allocation0]]
  $region93: #{run_forward.10} parent=0
    _
  %s15 = ssub.s32 1, %s13
  %s16 = scalar_select 0, %s15, %s13
  $region1: #{run_forward.10} parent=0
    #allocation2 [shape = 'u8[65536]{0}', space=vmem, size = 0x10000, scoped, tag = 'input window, operand 2']
    #allocation3 [shape = 's32[2]{0}', space=sflag, size = 0x8, scoped, tag = 'scoped memory for run_forward.10']
    #allocation4 [shape = 'u8[65536]{0}', space=vmem, size = 0x10000, scoped, tag = 'input window, operand 4']
    #allocation5 [shape = 's32[2]{0}', space=sflag, size = 0x8, scoped, tag = 'scoped memory for run_forward.10']
    %17 = vsyncpa [#allocation3], 0
    %s18 = scalar_lea.sflag [#allocation3], 1
    %19 = vsyncpa %s18, 0
    %20 = vsyncpa [#allocation5], 0
    %s21 = scalar_lea.sflag [#allocation5], 1
    %22 = vsyncpa %s21, 0
    loop: start=0, step=1, limit=4
    $region2: #{run_forward.10} parent=1 // loop_pre_header
      _
    $region3: #{run_forward.10} parent=1 // loop_header
      %s24 = sphi 0, %s28
      %p25 = scmp.ge.s32.totalorder %s24, 4
      %s31 = sphi 0, %s43
      %s32 = sphi 0, %s39
      %s33 = sphi 0, %s31
      %s34 = sphi 0, %s32
      %s35 = sphi 0, %s33
      %s36 = sphi 0, %s34
      %s46 = sphi 0, %s48
      %s49 = sphi 0, %s46
      %s50 = sphi 0, %s49
      %s66 = sphi 0, %s50
      %s72 = sphi 0, %s74
      %s75 = sphi 0, %s72
      %s76 = sphi 0, %s75
      %s92 = sphi 0, %s76
      %s98 = sphi 0, %s100
      %s101 = sphi 0, %s98
      %s102 = sphi 0, %s101
      %s118 = sphi 0, %s102
      %s124 = sphi 0, %s126
      %s127 = sphi 0, %s124
      %s128 = sphi 0, %s127
      %s144 = sphi 0, %s128
      %s150 = sphi 0, %s152
      %s153 = sphi 0, %s150
      %s154 = sphi 0, %s153
      %s170 = sphi 0, %s154
      %s176 = sphi 0, %s178
      %s179 = sphi 0, %s176
      %s180 = sphi 0, %s179
      %s196 = sphi 0, %s180
      %s202 = sphi 0, %s204
      %s205 = sphi 0, %s202
      %s206 = sphi 0, %s205
      %s222 = sphi 0, %s206
      %s228 = sphi 0, %s230
      %s231 = sphi 0, %s228
      %s232 = sphi 0, %s231
      %s248 = sphi 0, %s232
      %s256 = sphi 0, %s258
      %s259 = sphi 0, %s256
      %s260 = sphi 0, %s259
      %s276 = sphi 0, %s260
      %s284 = sphi 0, %s286
      %s287 = sphi 0, %s284
      %s288 = sphi 0, %s287
      %s304 = sphi 0, %s288
      %s312 = sphi 0, %s314
      %s315 = sphi 0, %s312
      %s316 = sphi 0, %s315
      %s332 = sphi 0, %s316
      %s340 = sphi 0, %s342
      %s343 = sphi 0, %s340
      %s344 = sphi 0, %s343
      %s360 = sphi 0, %s344
    $region4: #{run_forward.10} parent=1 // loop_header_branch
      %27 = sbr.rel (%p25) target = $region8
    $region5: #{run_forward.10} parent=1 // loop_body
      %s29 = ssub.s32 %s24, 1
      %s30 = ssub.s32 %s24, 2
      %s37 = sadd.s32 1, %s32
      %p38 = scmp.ge.s32.totalorder %s37, 1
      %s39 = scalar_select %p38, 0, %s37
      %s40 = sadd.s32 1, %s31
      %s41 = scalar_select %p38, %s40, %s31
      %p42 = scmp.ge.s32.totalorder %s41, 2
      %s43 = scalar_select %p42, 0, %s41
      %s44 = ssub.s32 %s32, %s39
      %p45 = scmp.eq.s32.totalorder %s44, 0
      %s47 = sadd.s32 %s46, 1
      %s48 = scalar_select %p45, %s46, %s47
      %p51 = pneg %p45
      %p52 = scmp.eq.s32.totalorder %s24, 1
      %p53 = por %p51, %p52
      %p54 = scmp.ne.s32.totalorder %s46, %s49
      %p55 = scmp.eq.s32.totalorder %s24, 0
      %p56 = por %p54, %p55
      %p57 = scmp.ne.s32.totalorder %s46, %s49
      %p58 = scmp.eq.s32.totalorder %s29, 1
      %p59 = por %p57, %p58
      %p60 = scmp.ne.s32.totalorder %s49, %s50
      %p61 = scmp.eq.s32.totalorder %s29, 0
      %p62 = por %p60, %p61
      %p63 = scmp.ne.s32.totalorder %s49, %s50
      %p64 = scmp.eq.s32.totalorder %s30, 1
      %p65 = por %p63, %p64
      %p67 = scmp.ne.s32.totalorder %s50, %s66
      %p68 = scmp.eq.s32.totalorder %s30, 0
      %p69 = por %p67, %p68
      %s70 = ssub.s32 %s31, %s43
      %p71 = scmp.eq.s32.totalorder %s70, 0
      %s73 = sadd.s32 %s72, 1
      %s74 = scalar_select %p71, %s72, %s73
      %p77 = pneg %p71
      %p78 = scmp.eq.s32.totalorder %s24, 1
      %p79 = por %p77, %p78
      %p80 = scmp.ne.s32.totalorder %s72, %s75
      %p81 = scmp.eq.s32.totalorder %s24, 0
      %p82 = por %p80, %p81
      %p83 = scmp.ne.s32.totalorder %s72, %s75
      %p84 = scmp.eq.s32.totalorder %s29, 1
      %p85 = por %p83, %p84
      %p86 = scmp.ne.s32.totalorder %s75, %s76
      %p87 = scmp.eq.s32.totalorder %s29, 0
      %p88 = por %p86, %p87
      %p89 = scmp.ne.s32.totalorder %s75, %s76
      %p90 = scmp.eq.s32.totalorder %s30, 1
      %p91 = por %p89, %p90
      %p93 = scmp.ne.s32.totalorder %s76, %s92
      %p94 = scmp.eq.s32.totalorder %s30, 0
      %p95 = por %p93, %p94
      %s96 = ssub.s32 %s31, %s43
      %p97 = scmp.eq.s32.totalorder %s96, 0
      %s99 = sadd.s32 %s98, 1
      %s100 = scalar_select %p97, %s98, %s99
      %p103 = pneg %p97
      %p104 = scmp.eq.s32.totalorder %s24, 1
      %p105 = por %p103, %p104
      %p106 = scmp.ne.s32.totalorder %s98, %s101
      %p107 = scmp.eq.s32.totalorder %s24, 0
      %p108 = por %p106, %p107
      %p109 = scmp.ne.s32.totalorder %s98, %s101
      %p110 = scmp.eq.s32.totalorder %s29, 1
      %p111 = por %p109, %p110
      %p112 = scmp.ne.s32.totalorder %s101, %s102
      %p113 = scmp.eq.s32.totalorder %s29, 0
      %p114 = por %p112, %p113
      %p115 = scmp.ne.s32.totalorder %s101, %s102
      %p116 = scmp.eq.s32.totalorder %s30, 1
      %p117 = por %p115, %p116
      %p119 = scmp.ne.s32.totalorder %s102, %s118
      %p120 = scmp.eq.s32.totalorder %s30, 0
      %p121 = por %p119, %p120
      %s122 = ssub.s32 %s31, %s43
      %p123 = scmp.eq.s32.totalorder %s122, 0
      %s125 = sadd.s32 %s124, 1
      %s126 = scalar_select %p123, %s124, %s125
      %p129 = pneg %p123
      %p130 = scmp.eq.s32.totalorder %s24, 1
      %p131 = por %p129, %p130
      %p132 = scmp.ne.s32.totalorder %s124, %s127
      %p133 = scmp.eq.s32.totalorder %s24, 0
      %p134 = por %p132, %p133
      %p135 = scmp.ne.s32.totalorder %s124, %s127
      %p136 = scmp.eq.s32.totalorder %s29, 1
      %p137 = por %p135, %p136
      %p138 = scmp.ne.s32.totalorder %s127, %s128
      %p139 = scmp.eq.s32.totalorder %s29, 0
      %p140 = por %p138, %p139
      %p141 = scmp.ne.s32.totalorder %s127, %s128
      %p142 = scmp.eq.s32.totalorder %s30, 1
      %p143 = por %p141, %p142
      %p145 = scmp.ne.s32.totalorder %s128, %s144
      %p146 = scmp.eq.s32.totalorder %s30, 0
      %p147 = por %p145, %p146
      %s148 = ssub.s32 %s31, %s43
      %p149 = scmp.eq.s32.totalorder %s148, 0
      %s151 = sadd.s32 %s150, 1
      %s152 = scalar_select %p149, %s150, %s151
      %p155 = pneg %p149
      %p156 = scmp.eq.s32.totalorder %s24, 1
      %p157 = por %p155, %p156
      %p158 = scmp.ne.s32.totalorder %s150, %s153
      %p159 = scmp.eq.s32.totalorder %s24, 0
      %p160 = por %p158, %p159
      %p161 = scmp.ne.s32.totalorder %s150, %s153
      %p162 = scmp.eq.s32.totalorder %s29, 1
      %p163 = por %p161, %p162
      %p164 = scmp.ne.s32.totalorder %s153, %s154
      %p165 = scmp.eq.s32.totalorder %s29, 0
      %p166 = por %p164, %p165
      %p167 = scmp.ne.s32.totalorder %s153, %s154
      %p168 = scmp.eq.s32.totalorder %s30, 1
      %p169 = por %p167, %p168
      %p171 = scmp.ne.s32.totalorder %s154, %s170
      %p172 = scmp.eq.s32.totalorder %s30, 0
      %p173 = por %p171, %p172
      %s174 = ssub.s32 %s31, %s43
      %p175 = scmp.eq.s32.totalorder %s174, 0
      %s177 = sadd.s32 %s176, 1
      %s178 = scalar_select %p175, %s176, %s177
      %p181 = pneg %p175
      %p182 = scmp.eq.s32.totalorder %s24, 1
      %p183 = por %p181, %p182
      %p184 = scmp.ne.s32.totalorder %s176, %s179
      %p185 = scmp.eq.s32.totalorder %s24, 0
      %p186 = por %p184, %p185
      %p187 = scmp.ne.s32.totalorder %s176, %s179
      %p188 = scmp.eq.s32.totalorder %s29, 1
      %p189 = por %p187, %p188
      %p190 = scmp.ne.s32.totalorder %s179, %s180
      %p191 = scmp.eq.s32.totalorder %s29, 0
      %p192 = por %p190, %p191
      %p193 = scmp.ne.s32.totalorder %s179, %s180
      %p194 = scmp.eq.s32.totalorder %s30, 1
      %p195 = por %p193, %p194
      %p197 = scmp.ne.s32.totalorder %s180, %s196
      %p198 = scmp.eq.s32.totalorder %s30, 0
      %p199 = por %p197, %p198
      %s200 = ssub.s32 %s31, %s43
      %p201 = scmp.eq.s32.totalorder %s200, 0
      %s203 = sadd.s32 %s202, 1
      %s204 = scalar_select %p201, %s202, %s203
      %p207 = pneg %p201
      %p208 = scmp.eq.s32.totalorder %s24, 1
      %p209 = por %p207, %p208
      %p210 = scmp.ne.s32.totalorder %s202, %s205
      %p211 = scmp.eq.s32.totalorder %s24, 0
      %p212 = por %p210, %p211
      %p213 = scmp.ne.s32.totalorder %s202, %s205
      %p214 = scmp.eq.s32.totalorder %s29, 1
      %p215 = por %p213, %p214
      %p216 = scmp.ne.s32.totalorder %s205, %s206
      %p217 = scmp.eq.s32.totalorder %s29, 0
      %p218 = por %p216, %p217
      %p219 = scmp.ne.s32.totalorder %s205, %s206
      %p220 = scmp.eq.s32.totalorder %s30, 1
      %p221 = por %p219, %p220
      %p223 = scmp.ne.s32.totalorder %s206, %s222
      %p224 = scmp.eq.s32.totalorder %s30, 0
      %p225 = por %p223, %p224
      %s226 = ssub.s32 %s31, %s43
      %p227 = scmp.eq.s32.totalorder %s226, 0
      %s229 = sadd.s32 %s228, 1
      %s230 = scalar_select %p227, %s228, %s229
      %p233 = pneg %p227
      %p234 = scmp.eq.s32.totalorder %s24, 1
      %p235 = por %p233, %p234
      %p236 = scmp.ne.s32.totalorder %s228, %s231
      %p237 = scmp.eq.s32.totalorder %s24, 0
      %p238 = por %p236, %p237
      %p239 = scmp.ne.s32.totalorder %s228, %s231
      %p240 = scmp.eq.s32.totalorder %s29, 1
      %p241 = por %p239, %p240
      %p242 = scmp.ne.s32.totalorder %s231, %s232
      %p243 = scmp.eq.s32.totalorder %s29, 0
      %p244 = por %p242, %p243
      %p245 = scmp.ne.s32.totalorder %s231, %s232
      %p246 = scmp.eq.s32.totalorder %s30, 1
      %p247 = por %p245, %p246
      %p249 = scmp.ne.s32.totalorder %s232, %s248
      %p250 = scmp.eq.s32.totalorder %s30, 0
      %p251 = por %p249, %p250
      %s252 = ssub.s32 %s31, %s43
      %s253 = ssub.s32 %s32, %s39
      %s254 = sor.u32 %s252, %s253
      %p255 = scmp.eq.s32.totalorder %s254, 0
      %s257 = sadd.s32 %s256, 1
      %s258 = scalar_select %p255, %s256, %s257
      %p261 = pneg %p255
      %p262 = scmp.eq.s32.totalorder %s24, 1
      %p263 = por %p261, %p262
      %p264 = scmp.ne.s32.totalorder %s256, %s259
      %p265 = scmp.eq.s32.totalorder %s24, 0
      %p266 = por %p264, %p265
      %p267 = scmp.ne.s32.totalorder %s256, %s259
      %p268 = scmp.eq.s32.totalorder %s29, 1
      %p269 = por %p267, %p268
      %p270 = scmp.ne.s32.totalorder %s259, %s260
      %p271 = scmp.eq.s32.totalorder %s29, 0
      %p272 = por %p270, %p271
      %p273 = scmp.ne.s32.totalorder %s259, %s260
      %p274 = scmp.eq.s32.totalorder %s30, 1
      %p275 = por %p273, %p274
      %p277 = scmp.ne.s32.totalorder %s260, %s276
      %p278 = scmp.eq.s32.totalorder %s30, 0
      %p279 = por %p277, %p278
      %s280 = ssub.s32 %s31, %s43
      %s281 = ssub.s32 %s32, %s39
      %s282 = sor.u32 %s280, %s281
      %p283 = scmp.eq.s32.totalorder %s282, 0
      %s285 = sadd.s32 %s284, 1
      %s286 = scalar_select %p283, %s284, %s285
      %p289 = pneg %p283
      %p290 = scmp.eq.s32.totalorder %s24, 1
      %p291 = por %p289, %p290
      %p292 = scmp.ne.s32.totalorder %s284, %s287
      %p293 = scmp.eq.s32.totalorder %s24, 0
      %p294 = por %p292, %p293
      %p295 = scmp.ne.s32.totalorder %s284, %s287
      %p296 = scmp.eq.s32.totalorder %s29, 1
      %p297 = por %p295, %p296
      %p298 = scmp.ne.s32.totalorder %s287, %s288
      %p299 = scmp.eq.s32.totalorder %s29, 0
      %p300 = por %p298, %p299
      %p301 = scmp.ne.s32.totalorder %s287, %s288
      %p302 = scmp.eq.s32.totalorder %s30, 1
      %p303 = por %p301, %p302
      %p305 = scmp.ne.s32.totalorder %s288, %s304
      %p306 = scmp.eq.s32.totalorder %s30, 0
      %p307 = por %p305, %p306
      %s308 = ssub.s32 %s31, %s43
      %s309 = ssub.s32 %s32, %s39
      %s310 = sor.u32 %s308, %s309
      %p311 = scmp.eq.s32.totalorder %s310, 0
      %s313 = sadd.s32 %s312, 1
      %s314 = scalar_select %p311, %s312, %s313
      %p317 = pneg %p311
      %p318 = scmp.eq.s32.totalorder %s24, 1
      %p319 = por %p317, %p318
      %p320 = scmp.ne.s32.totalorder %s312, %s315
      %p321 = scmp.eq.s32.totalorder %s24, 0
      %p322 = por %p320, %p321
      %p323 = scmp.ne.s32.totalorder %s312, %s315
      %p324 = scmp.eq.s32.totalorder %s29, 1
      %p325 = por %p323, %p324
      %p326 = scmp.ne.s32.totalorder %s315, %s316
      %p327 = scmp.eq.s32.totalorder %s29, 0
      %p328 = por %p326, %p327
      %p329 = scmp.ne.s32.totalorder %s315, %s316
      %p330 = scmp.eq.s32.totalorder %s30, 1
      %p331 = por %p329, %p330
      %p333 = scmp.ne.s32.totalorder %s316, %s332
      %p334 = scmp.eq.s32.totalorder %s30, 0
      %p335 = por %p333, %p334
      %s336 = ssub.s32 %s31, %s43
      %s337 = ssub.s32 %s32, %s39
      %s338 = sor.u32 %s336, %s337
      %p339 = scmp.eq.s32.totalorder %s338, 0
      %s341 = sadd.s32 %s340, 1
      %s342 = scalar_select %p339, %s340, %s341
      %p345 = pneg %p339
      %p346 = scmp.eq.s32.totalorder %s24, 1
      %p347 = por %p345, %p346
      %p348 = scmp.ne.s32.totalorder %s340, %s343
      %p349 = scmp.eq.s32.totalorder %s24, 0
      %p350 = por %p348, %p349
      %p351 = scmp.ne.s32.totalorder %s340, %s343
      %p352 = scmp.eq.s32.totalorder %s29, 1
      %p353 = por %p351, %p352
      %p354 = scmp.ne.s32.totalorder %s343, %s344
      %p355 = scmp.eq.s32.totalorder %s29, 0
      %p356 = por %p354, %p355
      %p357 = scmp.ne.s32.totalorder %s343, %s344
      %p358 = scmp.eq.s32.totalorder %s30, 1
      %p359 = por %p357, %p358
      %p361 = scmp.ne.s32.totalorder %s344, %s360
      %p362 = scmp.eq.s32.totalorder %s30, 0
      %p363 = por %p361, %p362
      %p364 = scmp.le.s32.totalorder 1, %s24
      %p365 = scmp.lt.s32.totalorder %s24, 3
      %p366 = pnand %p364, %p365
      %p367 = pneg %p366
      // Predicated region
      $region9: #{run_forward.10} parent=5 // pred_check
        _
      $region10: #{run_forward.10} parent=5 // pred_check_branch
        %369 = sbr.rel (%p366) target = $region12
      $region11: #{run_forward.10} parent=5 // pred_region
        %s370 = ssub.s32 %s24, 1
        // Predicated region
        $region13: #{run_forward.10} parent=11 // pred_check
          %p371 = pneg %p62
        $region14: #{run_forward.10} parent=11 // pred_check_branch
          %373 = sbr.rel (%p371) target = $region16
        $region15: #{run_forward.10} parent=11 // pred_region
          %s374 = smul.u32 3, %s34
          %p375 = scmp.lt.s32.totalorder %s374, 2
          %s376 = scalar_select %p375, %s374, 2
          %s377 = smul.addr %s376, 4
          %s378 = scalar_lea.vmem %s0, %s377
          %s379 = smul.u32 3, %s34
        $region16: #{run_forward.10} parent=11 // pred_fallthru
          _
      $region12: #{run_forward.10} parent=5 // pred_fallthru
        _
      %p380 = scmp.lt.s32.totalorder %s24, 2
      // Predicated region
      $region17: #{run_forward.10} parent=5 // pred_check
        %p381 = pneg %p380
      $region18: #{run_forward.10} parent=5 // pred_check_branch
        %383 = sbr.rel (%p381) target = $region20
      $region19: #{run_forward.10} parent=5 // pred_region
        // Predicated region
        $region21: #{run_forward.10} parent=19 // pred_check
          %p384 = pneg %p82
        $region22: #{run_forward.10} parent=19 // pred_check_branch
          %386 = sbr.rel (%p384) target = $region24
        $region23: #{run_forward.10} parent=19 // pred_region
          %p387 = scmp.lt.s32.totalorder %s31, 1
          %s388 = scalar_select %p387, %s31, 1
          %s389 = smul.addr %s388, 16
          %s390 = smul.addr %s389, 4
          %s391 = scalar_lea.vmem %s1, %s390
        $region24: #{run_forward.10} parent=19 // pred_fallthru
          _
        // Predicated region
        $region25: #{run_forward.10} parent=19 // pred_check
          %p392 = pneg %p108
        $region26: #{run_forward.10} parent=19 // pred_check_branch
          %394 = sbr.rel (%p392) target = $region28
        $region27: #{run_forward.10} parent=19 // pred_region
          %s395 = sand.u32 %s98, 1
          %s396 = scalar_lea.sflag [#allocation3], %s395
          %s397 = sand.u32 %s98, 1
          %s398 = smul.addr %s397, 64
          %s399 = scalar_lea.vmem [#allocation2], %s398
          %s401 = ssub.s32 1024, 1024
          %402 = vsyncadd %s396, %s401
          %s403 = smul.addr %s31, 16
          %s404 = smul.addr %s403, 64
          %s405 = scalar_lea.hbm %s2, %s404
          %s406 = sshll.u32 %s399, 4
          %s407 = int_to_ptr.vmem [resolvable:$true] %s406
          %412 = dma.hbm_to_vmem [thread:$0]  %s405, 1024, %s407, %s396, 64, 64, 4
        $region28: #{run_forward.10} parent=19 // pred_fallthru
          _
        // Predicated region
        $region29: #{run_forward.10} parent=19 // pred_check
          %p413 = pneg %p134
        $region30: #{run_forward.10} parent=19 // pred_check_branch
          %415 = sbr.rel (%p413) target = $region32
        $region31: #{run_forward.10} parent=19 // pred_region
          %p416 = scmp.lt.s32.totalorder %s31, 1
          %s417 = scalar_select %p416, %s31, 1
          %s418 = scalar_lea.vmem %s3, %s417
        $region32: #{run_forward.10} parent=19 // pred_fallthru
          _
        // Predicated region
        $region33: #{run_forward.10} parent=19 // pred_check
          %p419 = pneg %p160
        $region34: #{run_forward.10} parent=19 // pred_check_branch
          %421 = sbr.rel (%p419) target = $region36
        $region35: #{run_forward.10} parent=19 // pred_region
          %s422 = sand.u32 %s150, 1
          %s423 = scalar_lea.sflag [#allocation5], %s422
          %s424 = sand.u32 %s150, 1
          %s425 = smul.addr %s424, 64
          %s426 = scalar_lea.vmem [#allocation4], %s425
          %s428 = ssub.s32 1024, 1024
          %429 = vsyncadd %s423, %s428
          %s430 = smul.addr %s31, 16
          %s431 = smul.addr %s430, 64
          %s432 = scalar_lea.hbm %s4, %s431
          %s433 = sshll.u32 %s426, 4
          %s434 = int_to_ptr.vmem [resolvable:$true] %s433
          %439 = dma.hbm_to_vmem [thread:$0]  %s432, 1024, %s434, %s423, 64, 64, 4
        $region36: #{run_forward.10} parent=19 // pred_fallthru
          _
        // Predicated region
        $region37: #{run_forward.10} parent=19 // pred_check
          %p440 = pneg %p186
        $region38: #{run_forward.10} parent=19 // pred_check_branch
          %442 = sbr.rel (%p440) target = $region40
        $region39: #{run_forward.10} parent=19 // pred_region
          %p443 = scmp.lt.s32.totalorder %s31, 1
          %s444 = scalar_select %p443, %s31, 1
          %s445 = scalar_lea.vmem %s5, %s444
        $region40: #{run_forward.10} parent=19 // pred_fallthru
          _
        // Predicated region
        $region41: #{run_forward.10} parent=19 // pred_check
          %p446 = pneg %p212
        $region42: #{run_forward.10} parent=19 // pred_check_branch
          %448 = sbr.rel (%p446) target = $region44
        $region43: #{run_forward.10} parent=19 // pred_region
          %p449 = scmp.lt.s32.totalorder %s31, 1
          %s450 = scalar_select %p449, %s31, 1
          %s451 = scalar_lea.vmem %s6, %s450
        $region44: #{run_forward.10} parent=19 // pred_fallthru
          _
        // Predicated region
        $region45: #{run_forward.10} parent=19 // pred_check
          %p452 = pneg %p238
        $region46: #{run_forward.10} parent=19 // pred_check_branch
          %454 = sbr.rel (%p452) target = $region48
        $region47: #{run_forward.10} parent=19 // pred_region
          %p455 = scmp.lt.s32.totalorder %s31, 1
          %s456 = scalar_select %p455, %s31, 1
          %s457 = scalar_lea.vmem %s7, %s456
        $region48: #{run_forward.10} parent=19 // pred_fallthru
          _
        // Predicated region
        $region49: #{run_forward.10} parent=19 // pred_check
          %p458 = pneg %p266
        $region50: #{run_forward.10} parent=19 // pred_check_branch
          %460 = sbr.rel (%p458) target = $region52
        $region51: #{run_forward.10} parent=19 // pred_region
          %s461 = smul.u32 3, %s32
          %p462 = scmp.lt.s32.totalorder %s31, 1
          %s463 = scalar_select %p462, %s31, 1
          %p464 = scmp.lt.s32.totalorder %s461, 2
          %s465 = scalar_select %p464, %s461, 2
          %s466 = smul.addr %s463, 3
          %s467 = sadd.s32 %s465, %s466
          %s468 = smul.addr %s467, 8
          %s469 = scalar_lea.vmem %s8, %s468
          %s470 = smul.u32 3, %s32
        $region52: #{run_forward.10} parent=19 // pred_fallthru
          _
      $region20: #{run_forward.10} parent=5 // pred_fallthru
        _
      %p471 = scmp.le.s32.totalorder 1, %s24
      %p472 = scmp.lt.s32.totalorder %s24, 3
      %p473 = pnand %p471, %p472
      %p474 = pneg %p473
      // Predicated region
      $region53: #{run_forward.10} parent=5 // pred_check
        _
      $region54: #{run_forward.10} parent=5 // pred_check_branch
        %476 = sbr.rel (%p473) target = $region56
      $region55: #{run_forward.10} parent=5 // pred_region
        %s477 = ssub.s32 %s24, 1
        %s478 = sand.u32 %s101, 1
        %s479 = scalar_lea.sflag [#allocation3], %s478
        %s480 = sand.u32 %s101, 1
        %s481 = smul.addr %s480, 64
        %s482 = scalar_lea.vmem [#allocation2], %s481
        // Predicated region
        $region57: #{run_forward.10} parent=55 // pred_check
          %p483 = pneg %p114
        $region58: #{run_forward.10} parent=55 // pred_check_branch
          %485 = sbr.rel (%p483) target = $region60
        $region59: #{run_forward.10} parent=55 // pred_region
          %486 = dma.done %s479, 1024
        $region60: #{run_forward.10} parent=55 // pred_fallthru
          _
        %s487 = sand.u32 %s153, 1
        %s488 = scalar_lea.sflag [#allocation5], %s487
        %s489 = sand.u32 %s153, 1
        %s490 = smul.addr %s489, 64
        %s491 = scalar_lea.vmem [#allocation4], %s490
        // Predicated region
        $region61: #{run_forward.10} parent=55 // pred_check
          %p492 = pneg %p166
        $region62: #{run_forward.10} parent=55 // pred_check_branch
          %494 = sbr.rel (%p492) target = $region64
        $region63: #{run_forward.10} parent=55 // pred_region
          %495 = dma.done %s488, 1024
        $region64: #{run_forward.10} parent=55 // pred_fallthru
          _
        %s496 = smul.u32 3, %s34
        %p497 = scmp.lt.s32.totalorder %s496, 2
        %s498 = scalar_select %p497, %s496, 2
        %s499 = smul.addr %s498, 4
        %s500 = scalar_lea.vmem %s0, %s499
        %p501 = pneg %p62
        %p502 = pneg %p59
        %p503 = scmp.lt.s32.totalorder %s33, 1
        %s504 = scalar_select %p503, %s33, 1
        %s505 = smul.addr %s504, 16
        %s506 = smul.addr %s505, 4
        %s507 = scalar_lea.vmem %s1, %s506
        %p508 = pneg %p88
        %p509 = pneg %p85
        %s510 = sand.u32 %s101, 1
        %s511 = scalar_lea.sflag [#allocation3], %s510
        %s512 = sand.u32 %s101, 1
        %s513 = smul.addr %s512, 64
        %s514 = scalar_lea.vmem [#allocation2], %s513
        %p515 = pneg %p114
        %p516 = pneg %p111
        %p517 = scmp.lt.s32.totalorder %s33, 1
        %s518 = scalar_select %p517, %s33, 1
        %s519 = scalar_lea.vmem %s3, %s518
        %p520 = pneg %p140
        %p521 = pneg %p137
        %s522 = sand.u32 %s153, 1
        %s523 = scalar_lea.sflag [#allocation5], %s522
        %s524 = sand.u32 %s153, 1
        %s525 = smul.addr %s524, 64
        %s526 = scalar_lea.vmem [#allocation4], %s525
        %p527 = pneg %p166
        %p528 = pneg %p163
        %p529 = scmp.lt.s32.totalorder %s33, 1
        %s530 = scalar_select %p529, %s33, 1
        %s531 = scalar_lea.vmem %s5, %s530
        %p532 = pneg %p192
        %p533 = pneg %p189
        %p534 = scmp.lt.s32.totalorder %s33, 1
        %s535 = scalar_select %p534, %s33, 1
        %s536 = scalar_lea.vmem %s6, %s535
        %p537 = pneg %p218
        %p538 = pneg %p215
        %p539 = scmp.lt.s32.totalorder %s33, 1
        %s540 = scalar_select %p539, %s33, 1
        %s541 = scalar_lea.vmem %s7, %s540
        %p542 = pneg %p244
        %p543 = pneg %p241
        %s544 = smul.u32 3, %s34
        %p545 = scmp.lt.s32.totalorder %s33, 1
        %s546 = scalar_select %p545, %s33, 1
        %p547 = scmp.lt.s32.totalorder %s544, 2
        %s548 = scalar_select %p547, %s544, 2
        %s549 = smul.addr %s546, 3
        %s550 = sadd.s32 %s548, %s549
        %s551 = smul.addr %s550, 8
        %s552 = scalar_lea.vmem %s8, %s551
        %p553 = pneg %p272
        %p554 = pneg %p269
        %p555 = pneg %p300
        %p556 = pneg %p297
        %s557 = smul.u32 3, %s34
        %p558 = scmp.lt.s32.totalorder %s33, 1
        %s559 = scalar_select %p558, %s33, 1
        %p560 = scmp.lt.s32.totalorder %s557, 2
        %s561 = scalar_select %p560, %s557, 2
        %s562 = smul.addr %s559, 3
        %s563 = sadd.s32 %s561, %s562
        %s564 = smul.addr %s563, 8
        %s565 = scalar_lea.vmem %s9, %s564
        %p566 = pneg %p328
        %p567 = pneg %p325
        %s568 = smul.u32 3, %s34
        %p569 = scmp.lt.s32.totalorder %s33, 1
        %s570 = scalar_select %p569, %s33, 1
        %p571 = scmp.lt.s32.totalorder %s568, 2
        %s572 = scalar_select %p571, %s568, 2
        %s573 = smul.addr %s570, 3
        %s574 = sadd.s32 %s572, %s573
        %s575 = smul.addr %s574, 8
        %s576 = scalar_lea.vmem %s10, %s575
        %p577 = pneg %p356
        %p578 = pneg %p353
        %s579 = smul.u32 3, %s34
        %p580 = scmp.lt.s32.totalorder %s33, 1
        %s581 = scalar_select %p580, %s33, 1
        %p582 = scmp.lt.s32.totalorder %s579, 2
        %s583 = scalar_select %p582, %s579, 2
        %s584 = smul.addr %s581, 3
        %s585 = sadd.s32 %s583, %s584
        %s586 = smul.addr %s585, 8
        %s587 = scalar_lea.vmem %s11, %s586
        %s588 = smul.u32 3, %s34
        %p589 = scmp.lt.s32.totalorder %s588, 2
        %s590 = scalar_select %p589, %s588, 2
        %s591 = smul.addr %s590, 4
        %s592 = scalar_lea.vmem %s0, %s591
        %s593 = smul.u32 3, %s34
        %p594 = scmp.lt.s32.totalorder %s33, 1
        %s595 = scalar_select %p594, %s33, 1
        %s596 = smul.addr %s595, 16
        %s597 = smul.addr %s596, 4
        %s598 = scalar_lea.vmem %s1, %s597
        %p599 = scmp.lt.s32.totalorder %s33, 1
        %s600 = scalar_select %p599, %s33, 1
        %s601 = scalar_lea.vmem %s3, %s600
        %p602 = scmp.lt.s32.totalorder %s33, 1
        %s603 = scalar_select %p602, %s33, 1
        %s604 = scalar_lea.vmem %s5, %s603
        %p605 = scmp.lt.s32.totalorder %s33, 1
        %s606 = scalar_select %p605, %s33, 1
        %s607 = scalar_lea.vmem %s6, %s606
        %p608 = scmp.lt.s32.totalorder %s33, 1
        %s609 = scalar_select %p608, %s33, 1
        %s610 = scalar_lea.vmem %s7, %s609
        %s611 = smul.u32 3, %s34
        %p612 = scmp.lt.s32.totalorder %s33, 1
        %s613 = scalar_select %p612, %s33, 1
        %p614 = scmp.lt.s32.totalorder %s611, 2
        %s615 = scalar_select %p614, %s611, 2
        %s616 = smul.addr %s613, 3
        %s617 = sadd.s32 %s615, %s616
        %s618 = smul.addr %s617, 8
        %s619 = scalar_lea.vmem %s8, %s618
        %s620 = smul.u32 3, %s34
        %s621 = smul.u32 3, %s34
        %p622 = scmp.lt.s32.totalorder %s33, 1
        %s623 = scalar_select %p622, %s33, 1
        %p624 = scmp.lt.s32.totalorder %s621, 2
        %s625 = scalar_select %p624, %s621, 2
        %s626 = smul.addr %s623, 3
        %s627 = sadd.s32 %s625, %s626
        %s628 = smul.addr %s627, 8
        %s629 = scalar_lea.vmem %s9, %s628
        %s630 = smul.u32 3, %s34
        %s631 = smul.u32 3, %s34
        %p632 = scmp.lt.s32.totalorder %s33, 1
        %s633 = scalar_select %p632, %s33, 1
        %p634 = scmp.lt.s32.totalorder %s631, 2
        %s635 = scalar_select %p634, %s631, 2
        %s636 = smul.addr %s633, 3
        %s637 = sadd.s32 %s635, %s636
        %s638 = smul.addr %s637, 8
        %s639 = scalar_lea.vmem %s10, %s638
        %s640 = smul.u32 3, %s34
        %s641 = smul.u32 3, %s34
        %p642 = scmp.lt.s32.totalorder %s33, 1
        %s643 = scalar_select %p642, %s33, 1
        %p644 = scmp.lt.s32.totalorder %s641, 2
        %s645 = scalar_select %p644, %s641, 2
        %s646 = smul.addr %s643, 3
        %s647 = sadd.s32 %s645, %s646
        %s648 = smul.addr %s647, 8
        %s649 = scalar_lea.vmem %s11, %s648
        %s650 = smul.u32 3, %s34
        %v652 = vld [vmem:[%s592] sm:$0xf]
        %v653 = vld [vmem:[%s592 + $0x4] sm:$0xf]
        %v654 = vld [vmem:[%s592 + $0x8] sm:$0xf]
        %v655 = vld [vmem:[%s598] sm:$0xf]
        %v656 = vld [vmem:[%s598 + $0x4] sm:$0xf]
        %v657 = vld [vmem:[%s598 + $0x8] sm:$0xf]
        %v658 = vld [vmem:[%s598 + $0xc] sm:$0xf]
        %v659 = vld [vmem:[%s598 + $0x10] sm:$0xf]
        %v660 = vld [vmem:[%s598 + $0x14] sm:$0xf]
        %v661 = vld [vmem:[%s598 + $0x18] sm:$0xf]
        %v662 = vld [vmem:[%s598 + $0x1c] sm:$0xf]
        %v663 = vld [vmem:[%s598 + $0x20] sm:$0xf]
        %v664 = vld [vmem:[%s598 + $0x24] sm:$0xf]
        %v665 = vld [vmem:[%s598 + $0x28] sm:$0xf]
        %v666 = vld [vmem:[%s598 + $0x2c] sm:$0xf]
        %v667 = vld [vmem:[%s598 + $0x30] sm:$0xf]
        %v668 = vld [vmem:[%s598 + $0x34] sm:$0xf]
        %v669 = vld [vmem:[%s598 + $0x38] sm:$0xf]
        %v670 = vld [vmem:[%s598 + $0x3c] sm:$0xf]
        %v671 = vld [vmem:[%s601] sm:$0x1]
        %v673 = vlaneseq
        %v674 = vshrl.u32 %v673, 7
        %v675 = vsub.s32 0, %v674
        %v676 = vrot.slane %v671, %v675
        %v681 = vunpack.c.l.b16 %v652
        %v682 = vunpack.c.l.b16 %v653
        %v683 = vunpack.c.l.b16 %v654
        %v684 = vpack.c.b16 %v682, %v681
        %v685 = vpack.c.b16 %v683, %v683
        %v704 = vunpack.c.l.b16 %v655
        %v705 = vunpack.c.l.b16 %v656
        %v706 = vunpack.c.l.b16 %v657
        %v707 = vunpack.c.l.b16 %v658
        %v708 = vunpack.c.l.b16 %v659
        %v709 = vunpack.c.l.b16 %v660
        %v710 = vunpack.c.l.b16 %v661
        %v711 = vunpack.c.l.b16 %v662
        %v712 = vunpack.c.l.b16 %v663
        %v713 = vunpack.c.l.b16 %v664
        %v714 = vunpack.c.l.b16 %v665
        %v715 = vunpack.c.l.b16 %v666
        %v716 = vunpack.c.l.b16 %v667
        %v717 = vunpack.c.l.b16 %v668
        %v718 = vunpack.c.l.b16 %v669
        %v719 = vunpack.c.l.b16 %v670
        %v720 = vpack.c.b16 %v705, %v704
        %v721 = vpack.c.b16 %v707, %v706
        %v722 = vpack.c.b16 %v709, %v708
        %v723 = vpack.c.b16 %v711, %v710
        %v724 = vpack.c.b16 %v713, %v712
        %v725 = vpack.c.b16 %v715, %v714
        %v726 = vpack.c.b16 %v717, %v716
        %v727 = vpack.c.b16 %v719, %v718
        %736 = vmatprep.subr.bf16.mxu0 0
        %737 = vmatpush1.bf16.msra.mxu0 %v720
        %738 = vmatprep.subr.bf16.mxu0 0
        %739 = vmatpush1.bf16.msra.mxu0 %v721
        %740 = vmatprep.subr.bf16.mxu0 0
        %741 = vmatpush1.bf16.msra.mxu0 %v722
        %742 = vmatprep.subr.bf16.mxu0 0
        %743 = vmatpush1.bf16.msra.mxu0 %v723
        %744 = vmatprep.subr.bf16.mxu0 0
        %745 = vmatpush1.bf16.msra.mxu0 %v724
        %746 = vmatprep.subr.bf16.mxu0 0
        %747 = vmatpush1.bf16.msra.mxu0 %v725
        %748 = vmatprep.subr.bf16.mxu0 0
        %749 = vmatpush1.bf16.msra.mxu0 %v726
        %750 = vmatprep.subr.bf16.mxu0 0
        %751 = vmatpush1.bf16.msra.mxu0 %v727
        %752 = vmatprep.subr.bf16.mxu0 0
        %753 = vmatpush1.bf16.msra.mxu0 0
        %754 = vmatprep.subr.bf16.mxu0 0
        %755 = vmatpush1.bf16.msra.mxu0 0
        %756 = vmatprep.subr.bf16.mxu0 0
        %757 = vmatpush1.bf16.msra.mxu0 0
        %758 = vmatprep.subr.bf16.mxu0 0
        %759 = vmatpush1.bf16.msra.mxu0 0
        %760 = vmatprep.subr.bf16.mxu0 0
        %761 = vmatpush1.bf16.msra.mxu0 0
        %762 = vmatprep.subr.bf16.mxu0 0
        %763 = vmatpush1.bf16.msra.mxu0 0
        %764 = vmatprep.subr.bf16.mxu0 0
        %765 = vmatpush1.bf16.msra.mxu0 0
        %766 = vmatprep.subr.bf16.mxu0 0
        %767 = vmatpush1.bf16.msra.mxu0 0
        %768 = vmatprep.mubr.bf16.mxu0 0
        %769 = vmatmul.mubr.bf16.gmra.mrb[0].mxu0 %v684
        %v770 = vpop.f32.mrb[0].mxu0
        %v771 = vadd.f32 %v676, %v770
        %v772 = vpop.f32.mrb[0].mxu0
        %v773 = vpop.f32.mrb[0].mxu0
        %v774 = vadd.f32 %v676, %v773
        %v775 = vpop.f32.mrb[0].mxu0
        %776 = vmatprep.mubr.bf16.mxu0 0
        %777 = vmatmul.mubr.bf16.gmra.mrb[0].mxu0 %v685
        %v778 = vpop.f32.mrb[0].mxu0
        %v779 = vadd.f32 %v676, %v778
        %v780 = vpop.f32.mrb[0].mxu0
        %v781 = vpop.f32.mrb[0].mxu0
        %v782 = vpop.f32.mrb[0].mxu0
        %783 = vdwg.mxu0
        %784 = vst [vmem:[%s629] sm:$0xff] %v771
        %785 = vst [vmem:[%s629 + $0x8] sm:$0xff] %v774
        %786 = vst [vmem:[%s629 + $0x10] sm:$0xff] %v779
        %v787 = vld [vmem:[%s482] sm:$0xf]
        %v788 = vld [vmem:[%s482 + $0x4] sm:$0xf]
        %v789 = vld [vmem:[%s482 + $0x8] sm:$0xf]
        %v790 = vld [vmem:[%s482 + $0xc] sm:$0xf]
        %v791 = vld [vmem:[%s482 + $0x10] sm:$0xf]
        %v792 = vld [vmem:[%s482 + $0x14] sm:$0xf]
        %v793 = vld [vmem:[%s482 + $0x18] sm:$0xf]
        %v794 = vld [vmem:[%s482 + $0x1c] sm:$0xf]
        %v795 = vld [vmem:[%s482 + $0x20] sm:$0xf]
        %v796 = vld [vmem:[%s482 + $0x24] sm:$0xf]
        %v797 = vld [vmem:[%s482 + $0x28] sm:$0xf]
        %v798 = vld [vmem:[%s482 + $0x2c] sm:$0xf]
        %v799 = vld [vmem:[%s482 + $0x30] sm:$0xf]
        %v800 = vld [vmem:[%s482 + $0x34] sm:$0xf]
        %v801 = vld [vmem:[%s482 + $0x38] sm:$0xf]
        %v802 = vld [vmem:[%s482 + $0x3c] sm:$0xf]
        %v819 = vunpack.c.l.b16 %v787
        %v820 = vunpack.c.l.b16 %v788
        %v821 = vunpack.c.l.b16 %v789
        %v822 = vunpack.c.l.b16 %v790
        %v823 = vunpack.c.l.b16 %v791
        %v824 = vunpack.c.l.b16 %v792
        %v825 = vunpack.c.l.b16 %v793
        %v826 = vunpack.c.l.b16 %v794
        %v827 = vunpack.c.l.b16 %v795
        %v828 = vunpack.c.l.b16 %v796
        %v829 = vunpack.c.l.b16 %v797
        %v830 = vunpack.c.l.b16 %v798
        %v831 = vunpack.c.l.b16 %v799
        %v832 = vunpack.c.l.b16 %v800
        %v833 = vunpack.c.l.b16 %v801
        %v834 = vunpack.c.l.b16 %v802
        %v835 = vpack.c.b16 %v820, %v819
        %v836 = vpack.c.b16 %v822, %v821
        %v837 = vpack.c.b16 %v824, %v823
        %v838 = vpack.c.b16 %v826, %v825
        %v839 = vpack.c.b16 %v828, %v827
        %v840 = vpack.c.b16 %v830, %v829
        %v841 = vpack.c.b16 %v832, %v831
        %v842 = vpack.c.b16 %v834, %v833
        %851 = vmatprep.subr.bf16.mxu0 0
        %852 = vmatpush1.bf16.msra.mxu0 %v835
        %853 = vmatprep.subr.bf16.mxu0 0
        %854 = vmatpush1.bf16.msra.mxu0 %v836
        %855 = vmatprep.subr.bf16.mxu0 0
        %856 = vmatpush1.bf16.msra.mxu0 %v837
        %857 = vmatprep.subr.bf16.mxu0 0
        %858 = vmatpush1.bf16.msra.mxu0 %v838
        %859 = vmatprep.subr.bf16.mxu0 0
        %860 = vmatpush1.bf16.msra.mxu0 %v839
        %861 = vmatprep.subr.bf16.mxu0 0
        %862 = vmatpush1.bf16.msra.mxu0 %v840
        %863 = vmatprep.subr.bf16.mxu0 0
        %864 = vmatpush1.bf16.msra.mxu0 %v841
        %865 = vmatprep.subr.bf16.mxu0 0
        %866 = vmatpush1.bf16.msra.mxu0 %v842
        %867 = vmatprep.subr.bf16.mxu0 0
        %868 = vmatpush1.bf16.msra.mxu0 0
        %869 = vmatprep.subr.bf16.mxu0 0
        %870 = vmatpush1.bf16.msra.mxu0 0
        %871 = vmatprep.subr.bf16.mxu0 0
        %872 = vmatpush1.bf16.msra.mxu0 0
        %873 = vmatprep.subr.bf16.mxu0 0
        %874 = vmatpush1.bf16.msra.mxu0 0
        %875 = vmatprep.subr.bf16.mxu0 0
        %876 = vmatpush1.bf16.msra.mxu0 0
        %877 = vmatprep.subr.bf16.mxu0 0
        %878 = vmatpush1.bf16.msra.mxu0 0
        %879 = vmatprep.subr.bf16.mxu0 0
        %880 = vmatpush1.bf16.msra.mxu0 0
        %881 = vmatprep.subr.bf16.mxu0 0
        %882 = vmatpush1.bf16.msra.mxu0 0
        %883 = vmatprep.mubr.bf16.mxu0 0
        %884 = vmatmul.mubr.bf16.gmra.mrb[0].mxu0 %v684
        %v885 = vpop.f32.mrb[0].mxu0
        %v886 = vadd.f32 0.0, %v885
        %v887 = vpop.f32.mrb[0].mxu0
        %v888 = vpop.f32.mrb[0].mxu0
        %v889 = vadd.f32 0.0, %v888
        %v890 = vpop.f32.mrb[0].mxu0
        %891 = vmatprep.mubr.bf16.mxu0 0
        %892 = vmatmul.mubr.bf16.gmra.mrb[0].mxu0 %v685
        %v893 = vpop.f32.mrb[0].mxu0
        %v894 = vadd.f32 0.0, %v893
        %v895 = vpop.f32.mrb[0].mxu0
        %v896 = vpop.f32.mrb[0].mxu0
        %v897 = vpop.f32.mrb[0].mxu0
        %898 = vdwg.mxu0
        %899 = vst [vmem:[%s639] sm:$0xff] %v886
        %900 = vst [vmem:[%s639 + $0x8] sm:$0xff] %v889
        %901 = vst [vmem:[%s639 + $0x10] sm:$0xff] %v894
        %v902 = vld [vmem:[%s491] sm:$0xf]
        %v903 = vld [vmem:[%s491 + $0x4] sm:$0xf]
        %v904 = vld [vmem:[%s491 + $0x8] sm:$0xf]
        %v905 = vld [vmem:[%s491 + $0xc] sm:$0xf]
        %v906 = vld [vmem:[%s491 + $0x10] sm:$0xf]
        %v907 = vld [vmem:[%s491 + $0x14] sm:$0xf]
        %v908 = vld [vmem:[%s491 + $0x18] sm:$0xf]
        %v909 = vld [vmem:[%s491 + $0x1c] sm:$0xf]
        %v910 = vld [vmem:[%s491 + $0x20] sm:$0xf]
        %v911 = vld [vmem:[%s491 + $0x24] sm:$0xf]
        %v912 = vld [vmem:[%s491 + $0x28] sm:$0xf]
        %v913 = vld [vmem:[%s491 + $0x2c] sm:$0xf]
        %v914 = vld [vmem:[%s491 + $0x30] sm:$0xf]
        %v915 = vld [vmem:[%s491 + $0x34] sm:$0xf]
        %v916 = vld [vmem:[%s491 + $0x38] sm:$0xf]
        %v917 = vld [vmem:[%s491 + $0x3c] sm:$0xf]
        %v918 = vld [vmem:[%s604] sm:$0x1]
        %v920 = vlaneseq
        %v921 = vshrl.u32 %v920, 7
        %v922 = vsub.s32 0, %v921
        %v923 = vrot.slane %v918, %v922
        %v941 = vunpack.c.l.b16 %v902
        %v942 = vunpack.c.l.b16 %v903
        %v943 = vunpack.c.l.b16 %v904
        %v944 = vunpack.c.l.b16 %v905
        %v945 = vunpack.c.l.b16 %v906
        %v946 = vunpack.c.l.b16 %v907
        %v947 = vunpack.c.l.b16 %v908
        %v948 = vunpack.c.l.b16 %v909
        %v949 = vunpack.c.l.b16 %v910
        %v950 = vunpack.c.l.b16 %v911
        %v951 = vunpack.c.l.b16 %v912
        %v952 = vunpack.c.l.b16 %v913
        %v953 = vunpack.c.l.b16 %v914
        %v954 = vunpack.c.l.b16 %v915
        %v955 = vunpack.c.l.b16 %v916
        %v956 = vunpack.c.l.b16 %v917
        %v957 = vpack.c.b16 %v942, %v941
        %v958 = vpack.c.b16 %v944, %v943
        %v959 = vpack.c.b16 %v946, %v945
        %v960 = vpack.c.b16 %v948, %v947
        %v961 = vpack.c.b16 %v950, %v949
        %v962 = vpack.c.b16 %v952, %v951
        %v963 = vpack.c.b16 %v954, %v953
        %v964 = vpack.c.b16 %v956, %v955
        %973 = vmatprep.subr.bf16.mxu0 0
        %974 = vmatpush1.bf16.msra.mxu0 %v957
        %975 = vmatprep.subr.bf16.mxu0 0
        %976 = vmatpush1.bf16.msra.mxu0 %v958
        %977 = vmatprep.subr.bf16.mxu0 0
        %978 = vmatpush1.bf16.msra.mxu0 %v959
        %979 = vmatprep.subr.bf16.mxu0 0
        %980 = vmatpush1.bf16.msra.mxu0 %v960
        %981 = vmatprep.subr.bf16.mxu0 0
        %982 = vmatpush1.bf16.msra.mxu0 %v961
        %983 = vmatprep.subr.bf16.mxu0 0
        %984 = vmatpush1.bf16.msra.mxu0 %v962
        %985 = vmatprep.subr.bf16.mxu0 0
        %986 = vmatpush1.bf16.msra.mxu0 %v963
        %987 = vmatprep.subr.bf16.mxu0 0
        %988 = vmatpush1.bf16.msra.mxu0 %v964
        %989 = vmatprep.subr.bf16.mxu0 0
        %990 = vmatpush1.bf16.msra.mxu0 0
        %991 = vmatprep.subr.bf16.mxu0 0
        %992 = vmatpush1.bf16.msra.mxu0 0
        %993 = vmatprep.subr.bf16.mxu0 0
        %994 = vmatpush1.bf16.msra.mxu0 0
        %995 = vmatprep.subr.bf16.mxu0 0
        %996 = vmatpush1.bf16.msra.mxu0 0
        %997 = vmatprep.subr.bf16.mxu0 0
        %998 = vmatpush1.bf16.msra.mxu0 0
        %999 = vmatprep.subr.bf16.mxu0 0
        %1000 = vmatpush1.bf16.msra.mxu0 0
        %1001 = vmatprep.subr.bf16.mxu0 0
        %1002 = vmatpush1.bf16.msra.mxu0 0
        %1003 = vmatprep.subr.bf16.mxu0 0
        %1004 = vmatpush1.bf16.msra.mxu0 0
        %1005 = vmatprep.mubr.bf16.mxu0 0
        %1006 = vmatmul.mubr.bf16.gmra.mrb[0].mxu0 %v684
        %v1007 = vpop.f32.mrb[0].mxu0
        %v1008 = vadd.f32 %v923, %v1007
        %v1009 = vpop.f32.mrb[0].mxu0
        %v1010 = vpop.f32.mrb[0].mxu0
        %v1011 = vadd.f32 %v923, %v1010
        %v1012 = vpop.f32.mrb[0].mxu0
        %1013 = vmatprep.mubr.bf16.mxu0 0
        %1014 = vmatmul.mubr.bf16.gmra.mrb[0].mxu0 %v685
        %v1015 = vpop.f32.mrb[0].mxu0
        %v1016 = vadd.f32 %v923, %v1015
        %v1017 = vpop.f32.mrb[0].mxu0
        %v1018 = vpop.f32.mrb[0].mxu0
        %v1019 = vpop.f32.mrb[0].mxu0
        %1020 = vdwg.mxu0
        %v1021 = vmax.f32 %v1008, 0.0
        %v1022 = vmax.f32 %v1011, 0.0
        %v1023 = vmax.f32 %v1016, 0.0
        %v1024 = vld [vmem:[%s607] sm:$0x1]
        %v1026 = vlaneseq
        %v1027 = vshrl.u32 %v1026, 7
        %v1028 = vsub.s32 0, %v1027
        %v1029 = vrot.slane %v1024, %v1028
        %v1031 = vmul.f32 %v1021, %v1029
        %v1032 = vmul.f32 %v1022, %v1029
        %v1033 = vmul.f32 %v1023, %v1029
        %1034 = vadd.xlane.f32.xlu0 %v1031
        %v1035 = vpop.xlane.xlu0 %1034
        %1036 = vadd.xlane.f32.xlu0 %v1032
        %v1037 = vpop.xlane.xlu0 %1036
        %1038 = vadd.xlane.f32.xlu0 %v1033
        %v1039 = vpop.xlane.xlu0 %1038
        %v1040 = vld [vmem:[%s610] sm:$0x1]
        %v1042 = vlaneseq
        %v1043 = vshrl.u32 %v1042, 7
        %v1044 = vsub.s32 0, %v1043
        %v1045 = vrot.slane %v1040, %v1044
        %v1047 = vadd.f32 %v1035, %v1045
        %v1048 = vadd.f32 %v1037, %v1045
        %v1049 = vadd.f32 %v1039, %v1045
        %v1050 = vld [vmem:[%s619] sm:$0xff]
        %v1051 = vld [vmem:[%s619 + $0x8] sm:$0xff]
        %v1052 = vld [vmem:[%s619 + $0x10] sm:$0xff]
        %v1053 = vadd.f32 %v1050, %v1047
        %v1054 = vadd.f32 %v1051, %v1048
        %v1055 = vadd.f32 %v1052, %v1049
        %v1056 = vmul.f32 %v1053, 2.0
        %v1057 = vmul.f32 %v1054, 2.0
        %v1058 = vmul.f32 %v1055, 2.0
        %v1059 = vsub.f32 0.0, %v1056
        %v1060 = vsub.f32 0.0, %v1057
        %v1061 = vsub.f32 0.0, %v1058
        %v1062 = vmul.f32 %v1059, 1.442695
        %v1063 = vpow.pop %v1062
        %v1064 = vmul.f32 %v1060, 1.442695
        %v1065 = vpow.pop %v1064
        %v1066 = vmul.f32 %v1061, 1.442695
        %v1067 = vpow.pop %v1066
        %v1068 = vadd.f32 %v1063, 1.0
        %v1069 = vadd.f32 %v1065, 1.0
        %v1070 = vadd.f32 %v1067, 1.0
        %v1071 = vrcp.pop %v1068
        %v1072 = vmul.f32 1.0, %v1071
        %v1073 = vrcp.pop %v1069
        %v1074 = vmul.f32 1.0, %v1073
        %v1075 = vrcp.pop %v1070
        %v1076 = vmul.f32 1.0, %v1075
        %vm1077 = vcmask 7168
        %1078 = vst.msk [vmem:[%s649] sm:$0xff] %vm1077, %v1072
        %1079 = vst.msk [vmem:[%s649 + $0x8] sm:$0xff] %vm1077, %v1074
        %1080 = vst.msk [vmem:[%s649 + $0x10] sm:$0xff] %vm1077, %v1076
        %s1081 = smul.u32 3, %s34
        %p1082 = scmp.lt.s32.totalorder %s33, 1
        %s1083 = scalar_select %p1082, %s33, 1
        %p1084 = scmp.lt.s32.totalorder %s1081, 2
        %s1085 = scalar_select %p1084, %s1081, 2
        %s1086 = smul.addr %s1083, 3
        %s1087 = sadd.s32 %s1085, %s1086
        %s1088 = smul.addr %s1087, 8
        %s1089 = scalar_lea.vmem %s9, %s1088
        %s1090 = smul.u32 3, %s34
        %p1091 = scmp.lt.s32.totalorder %s33, 1
        %s1092 = scalar_select %p1091, %s33, 1
        %p1093 = scmp.lt.s32.totalorder %s1090, 2
        %s1094 = scalar_select %p1093, %s1090, 2
        %s1095 = smul.addr %s1092, 3
        %s1096 = sadd.s32 %s1094, %s1095
        %s1097 = smul.addr %s1096, 8
        %s1098 = scalar_lea.vmem %s10, %s1097
        %s1099 = smul.u32 3, %s34
        %p1100 = scmp.lt.s32.totalorder %s33, 1
        %s1101 = scalar_select %p1100, %s33, 1
        %p1102 = scmp.lt.s32.totalorder %s1099, 2
        %s1103 = scalar_select %p1102, %s1099, 2
        %s1104 = smul.addr %s1101, 3
        %s1105 = sadd.s32 %s1103, %s1104
        %s1106 = smul.addr %s1105, 8
        %s1107 = scalar_lea.vmem %s11, %s1106
        // Predicated region
        $region65: #{run_forward.10} parent=55 // pred_check
          %p1108 = pneg %p297
        $region66: #{run_forward.10} parent=55 // pred_check_branch
          %1110 = sbr.rel (%p1108) target = $region68
        $region67: #{run_forward.10} parent=55 // pred_region
          %s1111 = smul.u32 3, %s34
        $region68: #{run_forward.10} parent=55 // pred_fallthru
          _
        // Predicated region
        $region69: #{run_forward.10} parent=55 // pred_check
          %p1112 = pneg %p325
        $region70: #{run_forward.10} parent=55 // pred_check_branch
          %1114 = sbr.rel (%p1112) target = $region72
        $region71: #{run_forward.10} parent=55 // pred_region
          %s1115 = smul.u32 3, %s34
        $region72: #{run_forward.10} parent=55 // pred_fallthru
          _
        // Predicated region
        $region73: #{run_forward.10} parent=55 // pred_check
          %p1116 = pneg %p353
        $region74: #{run_forward.10} parent=55 // pred_check_branch
          %1118 = sbr.rel (%p1116) target = $region76
        $region75: #{run_forward.10} parent=55 // pred_region
          %s1119 = smul.u32 3, %s34
        $region76: #{run_forward.10} parent=55 // pred_fallthru
          _
      $region56: #{run_forward.10} parent=5 // pred_fallthru
        _
      %p1120 = scmp.le.s32.totalorder 2, %s24
      // Predicated region
      $region77: #{run_forward.10} parent=5 // pred_check
        %p1121 = pneg %p1120
      $region78: #{run_forward.10} parent=5 // pred_check_branch
        %1123 = sbr.rel (%p1121) target = $region80
      $region79: #{run_forward.10} parent=5 // pred_region
        %s1124 = ssub.s32 %s24, 2
        // Predicated region
        $region81: #{run_forward.10} parent=79 // pred_check
          %p1125 = pneg %p303
        $region82: #{run_forward.10} parent=79 // pred_check_branch
          %1127 = sbr.rel (%p1125) target = $region84
        $region83: #{run_forward.10} parent=79 // pred_region
          %s1128 = smul.u32 3, %s36
          %p1129 = scmp.lt.s32.totalorder %s35, 1
          %s1130 = scalar_select %p1129, %s35, 1
          %p1131 = scmp.lt.s32.totalorder %s1128, 2
          %s1132 = scalar_select %p1131, %s1128, 2
          %s1133 = smul.addr %s1130, 3
          %s1134 = sadd.s32 %s1132, %s1133
          %s1135 = smul.addr %s1134, 8
          %s1136 = scalar_lea.vmem %s9, %s1135
        $region84: #{run_forward.10} parent=79 // pred_fallthru
          _
        // Predicated region
        $region85: #{run_forward.10} parent=79 // pred_check
          %p1137 = pneg %p331
        $region86: #{run_forward.10} parent=79 // pred_check_branch
          %1139 = sbr.rel (%p1137) target = $region88
        $region87: #{run_forward.10} parent=79 // pred_region
          %s1140 = smul.u32 3, %s36
          %p1141 = scmp.lt.s32.totalorder %s35, 1
          %s1142 = scalar_select %p1141, %s35, 1
          %p1143 = scmp.lt.s32.totalorder %s1140, 2
          %s1144 = scalar_select %p1143, %s1140, 2
          %s1145 = smul.addr %s1142, 3
          %s1146 = sadd.s32 %s1144, %s1145
          %s1147 = smul.addr %s1146, 8
          %s1148 = scalar_lea.vmem %s10, %s1147
        $region88: #{run_forward.10} parent=79 // pred_fallthru
          _
        // Predicated region
        $region89: #{run_forward.10} parent=79 // pred_check
          %p1149 = pneg %p359
        $region90: #{run_forward.10} parent=79 // pred_check_branch
          %1151 = sbr.rel (%p1149) target = $region92
        $region91: #{run_forward.10} parent=79 // pred_region
          %s1152 = smul.u32 3, %s36
          %p1153 = scmp.lt.s32.totalorder %s35, 1
          %s1154 = scalar_select %p1153, %s35, 1
          %p1155 = scmp.lt.s32.totalorder %s1152, 2
          %s1156 = scalar_select %p1155, %s1152, 2
          %s1157 = smul.addr %s1154, 3
          %s1158 = sadd.s32 %s1156, %s1157
          %s1159 = smul.addr %s1158, 8
          %s1160 = scalar_lea.vmem %s11, %s1159
        $region92: #{run_forward.10} parent=79 // pred_fallthru
          _
      $region80: #{run_forward.10} parent=5 // pred_fallthru
        _
    $region6: #{run_forward.10} parent=1 // loop_footer
      %s28 = sadd.s32 1, %s24
    $region7: #{run_forward.10} parent=1 // loop_footer_branch
      %23 = sbr.rel target = $region3
    $region8: #{run_forward.10} parent=1 // loop_exit
      _
    %1161 = vsyncpa [#allocation3], 1
    %s1162 = scalar_lea.sflag [#allocation3], 1
    %1163 = vsyncpa %s1162, 1
    %1164 = vsyncpa [#allocation5], 1
    %s1165 = scalar_lea.sflag [#allocation5], 1
    %1166 = vsyncpa %s1165, 1

// kernel: run_forward.12
$region0: #{run_forward.12}
  #allocation0 [shape = 'u32[]', space=smem, size = 0x4, offset = 0x4, fixed_abs, tag = 'smem constant byte address 0x4 - core index']
  #allocation1 [shape = 'u32[144,128]{1,0:T(1,128)}', space=vmem, size = 0x12000, scoped, tag = 'internal scratch']
  %s0 = inlined_call_operand.vmem [shape: bf16[24,24], index: 0, kind: input, shape index: {}]
  %s1 = inlined_call_operand.vmem [shape: bf16[24,128], index: 1, kind: input, shape index: {}]
  %s2 = inlined_call_operand.vmem [shape: f32[24,128], index: 2, kind: output, shape index: {}]
  %s3 = sld [smem:[#allocation0]]
  $region22: #{run_forward.12} parent=0
    _
  %s5 = ssub.s32 1, %s3
  %s6 = scalar_select 0, %s5, %s3
  // Predicated region
  $region2: #{run_forward.12} parent=0 // pred_check
    _
  $region3: #{run_forward.12} parent=0 // pred_check_branch
    %8 = sbr.rel (0) target = $region5
  $region4: #{run_forward.12} parent=0 // pred_region
    _
  $region5: #{run_forward.12} parent=0 // pred_fallthru
    _
  // Predicated region
  $region6: #{run_forward.12} parent=0 // pred_check
    _
  $region7: #{run_forward.12} parent=0 // pred_check_branch
    %10 = sbr.rel (0) target = $region9
  $region8: #{run_forward.12} parent=0 // pred_region
    _
  $region9: #{run_forward.12} parent=0 // pred_fallthru
    _
  %p12 = scmp.eq.s32.totalorder 0, 0
  // Predicated region
  $region10: #{run_forward.12} parent=0 // pred_check
    %p13 = pneg %p12
  $region11: #{run_forward.12} parent=0 // pred_check_branch
    %15 = sbr.rel (%p13) target = $region13
  $region12: #{run_forward.12} parent=0 // pred_region
    %16 = vst [vmem:[%s2] sm:$0xff] 0.0
    %17 = vst [vmem:[%s2 + $0x8] sm:$0xff] 0.0
    %18 = vst [vmem:[%s2 + $0x10] sm:$0xff] 0.0
  $region13: #{run_forward.12} parent=0 // pred_fallthru
    _
  %s19 = smul.u32 0, 24
  %s20 = sshra.s32 %s19, 3
  %s21 = sand.u32 %s19, 7
  %s22 = smul.addr %s20, 4
  %s23 = scalar_lea.vmem %s1, %s22
  %v24 = vld [vmem:[%s23] sm:$0xf]
  %v25 = vld [vmem:[%s23 + $0x4] sm:$0xf]
  %v26 = vld [vmem:[%s23 + $0x8] sm:$0xf]
  %v27 = vld [vmem:[%s2] sm:$0xff]
  %v28 = vld [vmem:[%s2 + $0x8] sm:$0xff]
  %v29 = vld [vmem:[%s2 + $0x10] sm:$0xff]
  %v30 = vld [vmem:[%s0] sm:$0xf]
  %v31 = vld [vmem:[%s0 + $0x4] sm:$0xf]
  %v32 = vld [vmem:[%s0 + $0x8] sm:$0xf]
  %v36 = vunpack.c.l.b16 %v30
  %v37 = vunpack.c.l.b16 %v31
  %v38 = vunpack.c.l.b16 %v32
  %v39 = vpack.c.b16 %v37, %v36
  %v40 = vpack.c.b16 %v38, %v38
  %v44 = vunpack.c.l.b16 %v24
  %v45 = vunpack.c.l.b16 %v25
  %v46 = vunpack.c.l.b16 %v26
  %v47 = vpack.c.b16 %v45, %v44
  %v48 = vpack.c.b16 %v46, %v46
  %vm50 = vcmask 195584
  %v52 = vsel %vm50, %v39, 0
  %v55 = vsel %vm50, %v40, 0
  %vm57 = vcmask 1043456
  %v59 = vsel %vm57, %v48, 0
  %61 = vmatprep.subr.bf16.mxu0 0
  %62 = vmatpush1.bf16.msra.mxu0 %v47
  %63 = vmatprep.subr.bf16.mxu0 0
  %64 = vmatpush1.bf16.msra.mxu0 %v59
  %65 = vmatprep.subr.bf16.mxu0 0
  %66 = vmatpush1.bf16.msra.mxu0 0
  %67 = vmatprep.subr.bf16.mxu0 0
  %68 = vmatpush1.bf16.msra.mxu0 0
  %69 = vmatprep.subr.bf16.mxu0 0
  %70 = vmatpush1.bf16.msra.mxu0 0
  %71 = vmatprep.subr.bf16.mxu0 0
  %72 = vmatpush1.bf16.msra.mxu0 0
  %73 = vmatprep.subr.bf16.mxu0 0
  %74 = vmatpush1.bf16.msra.mxu0 0
  %75 = vmatprep.subr.bf16.mxu0 0
  %76 = vmatpush1.bf16.msra.mxu0 0
  %77 = vmatprep.subr.bf16.mxu0 0
  %78 = vmatpush1.bf16.msra.mxu0 0
  %79 = vmatprep.subr.bf16.mxu0 0
  %80 = vmatpush1.bf16.msra.mxu0 0
  %81 = vmatprep.subr.bf16.mxu0 0
  %82 = vmatpush1.bf16.msra.mxu0 0
  %83 = vmatprep.subr.bf16.mxu0 0
  %84 = vmatpush1.bf16.msra.mxu0 0
  %85 = vmatprep.subr.bf16.mxu0 0
  %86 = vmatpush1.bf16.msra.mxu0 0
  %87 = vmatprep.subr.bf16.mxu0 0
  %88 = vmatpush1.bf16.msra.mxu0 0
  %89 = vmatprep.subr.bf16.mxu0 0
  %90 = vmatpush1.bf16.msra.mxu0 0
  %91 = vmatprep.subr.bf16.mxu0 0
  %92 = vmatpush1.bf16.msra.mxu0 0
  %93 = vmatprep.mubr.bf16.mxu0 0
  %94 = vmatmul.mubr.bf16.gmra.mrb[0].mxu0 %v52
  %v95 = vpop.f32.mrb[0].mxu0
  %v96 = vadd.f32 0.0, %v95
  %v97 = vpop.f32.mrb[0].mxu0
  %v98 = vpop.f32.mrb[0].mxu0
  %v99 = vadd.f32 0.0, %v98
  %v100 = vpop.f32.mrb[0].mxu0
  %101 = vmatprep.mubr.bf16.mxu0 0
  %102 = vmatmul.mubr.bf16.gmra.mrb[0].mxu0 %v55
  %v103 = vpop.f32.mrb[0].mxu0
  %v104 = vadd.f32 0.0, %v103
  %v105 = vpop.f32.mrb[0].mxu0
  %v106 = vpop.f32.mrb[0].mxu0
  %v107 = vpop.f32.mrb[0].mxu0
  %108 = vdwg.mxu0
  %v109 = vadd.f32 %v27, %v96
  %v110 = vadd.f32 %v28, %v99
  %v111 = vadd.f32 %v29, %v104
  %112 = vst [vmem:[%s2] sm:$0xff] %v109
  %113 = vst [vmem:[%s2 + $0x8] sm:$0xff] %v110
  %114 = vst [vmem:[%s2 + $0x10] sm:$0xff] %v111
  // Predicated region
  $region14: #{run_forward.12} parent=0 // pred_check
    _
  $region15: #{run_forward.12} parent=0 // pred_check_branch
    %116 = sbr.rel (0) target = $region17
  $region16: #{run_forward.12} parent=0 // pred_region
    _
  $region17: #{run_forward.12} parent=0 // pred_fallthru
    _
  // Predicated region
  $region18: #{run_forward.12} parent=0 // pred_check
    _
  $region19: #{run_forward.12} parent=0 // pred_check_branch
    %118 = sbr.rel (0) target = $region21
  $region20: #{run_forward.12} parent=0 // pred_region
    _
  $region21: #{run_forward.12} parent=0 // pred_fallthru
    _

// kernel: run_forward.14
$region0: #{run_forward.14}
  #allocation0 [shape = 'u32[]', space=smem, size = 0x4, offset = 0x4, fixed_abs, tag = 'smem constant byte address 0x4 - core index']
  #allocation1 [shape = 'u32[144,128]{1,0:T(1,128)}', space=vmem, size = 0x12000, scoped, tag = 'internal scratch']
  #allocation2 [shape = 'f32[24,128]{1,0:T(8,128)}', space=vmem, size = 0x3000, scoped, tag = 'scratch operand']
  %s0 = inlined_call_operand.vmem [shape: bf16[24,24], index: 0, kind: input, shape index: {}]
  %s1 = inlined_call_operand.vmem [shape: bf16[24,128], index: 1, kind: input, shape index: {}]
  %s2 = inlined_call_operand.vmem [shape: f32[24,128], index: 2, kind: input, shape index: {}]
  %s3 = inlined_call_operand.vmem [shape: f32[24,1], index: 3, kind: input, shape index: {}]
  %s4 = inlined_call_operand.vmem [shape: bf16[24,128], index: 4, kind: output, shape index: {}]
  %s5 = sld [smem:[#allocation0]]
  $region34: #{run_forward.14} parent=0
    _
  %s7 = ssub.s32 1, %s5
  %s8 = scalar_select 0, %s7, %s5
  // Predicated region
  $region2: #{run_forward.14} parent=0 // pred_check
    _
  $region3: #{run_forward.14} parent=0 // pred_check_branch
    %10 = sbr.rel (0) target = $region5
  $region4: #{run_forward.14} parent=0 // pred_region
    _
  $region5: #{run_forward.14} parent=0 // pred_fallthru
    _
  // Predicated region
  $region6: #{run_forward.14} parent=0 // pred_check
    _
  $region7: #{run_forward.14} parent=0 // pred_check_branch
    %12 = sbr.rel (0) target = $region9
  $region8: #{run_forward.14} parent=0 // pred_region
    _
  $region9: #{run_forward.14} parent=0 // pred_fallthru
    _
  // Predicated region
  $region10: #{run_forward.14} parent=0 // pred_check
    _
  $region11: #{run_forward.14} parent=0 // pred_check_branch
    %14 = sbr.rel (0) target = $region13
  $region12: #{run_forward.14} parent=0 // pred_region
    _
  $region13: #{run_forward.14} parent=0 // pred_fallthru
    _
  // Predicated region
  $region14: #{run_forward.14} parent=0 // pred_check
    _
  $region15: #{run_forward.14} parent=0 // pred_check_branch
    %16 = sbr.rel (0) target = $region17
  $region16: #{run_forward.14} parent=0 // pred_region
    _
  $region17: #{run_forward.14} parent=0 // pred_fallthru
    _
  %p18 = scmp.eq.s32.totalorder 0, 0
  // Predicated region
  $region18: #{run_forward.14} parent=0 // pred_check
    %p19 = pneg %p18
  $region19: #{run_forward.14} parent=0 // pred_check_branch
    %21 = sbr.rel (%p19) target = $region21
  $region20: #{run_forward.14} parent=0 // pred_region
    %22 = vst [vmem:[#allocation2] sm:$0xff] 0.0
    %23 = vst [vmem:[#allocation2 + $0x8] sm:$0xff] 0.0
    %24 = vst [vmem:[#allocation2 + $0x10] sm:$0xff] 0.0
  $region21: #{run_forward.14} parent=0 // pred_fallthru
    _
  %s25 = smul.u32 0, 24
  %s26 = sshra.s32 %s25, 3
  %s27 = sand.u32 %s25, 7
  %s28 = smul.addr %s26, 4
  %s29 = scalar_lea.vmem %s1, %s28
  %v30 = vld [vmem:[%s29] sm:$0xf]
  %v31 = vld [vmem:[%s29 + $0x4] sm:$0xf]
  %v32 = vld [vmem:[%s29 + $0x8] sm:$0xf]
  %v33 = vld [vmem:[#allocation2] sm:$0xff]
  %v34 = vld [vmem:[#allocation2 + $0x8] sm:$0xff]
  %v35 = vld [vmem:[#allocation2 + $0x10] sm:$0xff]
  %v36 = vld [vmem:[%s0] sm:$0xf]
  %v37 = vld [vmem:[%s0 + $0x4] sm:$0xf]
  %v38 = vld [vmem:[%s0 + $0x8] sm:$0xf]
  %v42 = vunpack.c.l.b16 %v36
  %v43 = vunpack.c.l.b16 %v37
  %v44 = vunpack.c.l.b16 %v38
  %v45 = vpack.c.b16 %v43, %v42
  %v46 = vpack.c.b16 %v44, %v44
  %v50 = vunpack.c.l.b16 %v30
  %v51 = vunpack.c.l.b16 %v31
  %v52 = vunpack.c.l.b16 %v32
  %v53 = vpack.c.b16 %v51, %v50
  %v54 = vpack.c.b16 %v52, %v52
  %vm56 = vcmask 195584
  %v58 = vsel %vm56, %v45, 0
  %v61 = vsel %vm56, %v46, 0
  %vm63 = vcmask 1043456
  %v65 = vsel %vm63, %v54, 0
  %67 = vmatprep.subr.bf16.mxu0 0
  %68 = vmatpush1.bf16.msra.mxu0 %v53
  %69 = vmatprep.subr.bf16.mxu0 0
  %70 = vmatpush1.bf16.msra.mxu0 %v65
  %71 = vmatprep.subr.bf16.mxu0 0
  %72 = vmatpush1.bf16.msra.mxu0 0
  %73 = vmatprep.subr.bf16.mxu0 0
  %74 = vmatpush1.bf16.msra.mxu0 0
  %75 = vmatprep.subr.bf16.mxu0 0
  %76 = vmatpush1.bf16.msra.mxu0 0
  %77 = vmatprep.subr.bf16.mxu0 0
  %78 = vmatpush1.bf16.msra.mxu0 0
  %79 = vmatprep.subr.bf16.mxu0 0
  %80 = vmatpush1.bf16.msra.mxu0 0
  %81 = vmatprep.subr.bf16.mxu0 0
  %82 = vmatpush1.bf16.msra.mxu0 0
  %83 = vmatprep.subr.bf16.mxu0 0
  %84 = vmatpush1.bf16.msra.mxu0 0
  %85 = vmatprep.subr.bf16.mxu0 0
  %86 = vmatpush1.bf16.msra.mxu0 0
  %87 = vmatprep.subr.bf16.mxu0 0
  %88 = vmatpush1.bf16.msra.mxu0 0
  %89 = vmatprep.subr.bf16.mxu0 0
  %90 = vmatpush1.bf16.msra.mxu0 0
  %91 = vmatprep.subr.bf16.mxu0 0
  %92 = vmatpush1.bf16.msra.mxu0 0
  %93 = vmatprep.subr.bf16.mxu0 0
  %94 = vmatpush1.bf16.msra.mxu0 0
  %95 = vmatprep.subr.bf16.mxu0 0
  %96 = vmatpush1.bf16.msra.mxu0 0
  %97 = vmatprep.subr.bf16.mxu0 0
  %98 = vmatpush1.bf16.msra.mxu0 0
  %99 = vmatprep.mubr.bf16.mxu0 0
  %100 = vmatmul.mubr.bf16.gmra.mrb[0].mxu0 %v58
  %v101 = vpop.f32.mrb[0].mxu0
  %v102 = vadd.f32 0.0, %v101
  %v103 = vpop.f32.mrb[0].mxu0
  %v104 = vpop.f32.mrb[0].mxu0
  %v105 = vadd.f32 0.0, %v104
  %v106 = vpop.f32.mrb[0].mxu0
  %107 = vmatprep.mubr.bf16.mxu0 0
  %108 = vmatmul.mubr.bf16.gmra.mrb[0].mxu0 %v61
  %v109 = vpop.f32.mrb[0].mxu0
  %v110 = vadd.f32 0.0, %v109
  %v111 = vpop.f32.mrb[0].mxu0
  %v112 = vpop.f32.mrb[0].mxu0
  %v113 = vpop.f32.mrb[0].mxu0
  %114 = vdwg.mxu0
  %v115 = vadd.f32 %v33, %v102
  %v116 = vadd.f32 %v34, %v105
  %v117 = vadd.f32 %v35, %v110
  %118 = vst [vmem:[#allocation2] sm:$0xff] %v115
  %119 = vst [vmem:[#allocation2 + $0x8] sm:$0xff] %v116
  %120 = vst [vmem:[#allocation2 + $0x10] sm:$0xff] %v117
  // Predicated region
  $region22: #{run_forward.14} parent=0 // pred_check
    %p121 = pneg %p18
  $region23: #{run_forward.14} parent=0 // pred_check_branch
    %123 = sbr.rel (%p121) target = $region25
  $region24: #{run_forward.14} parent=0 // pred_region
    %v124 = vld [vmem:[%s3] sm:$0xff]
    %v125 = vld [vmem:[%s3 + $0x8] sm:$0xff]
    %v126 = vld [vmem:[%s3 + $0x10] sm:$0xff]
    %v127 = vld [vmem:[%s2] sm:$0xff]
    %v128 = vld [vmem:[%s2 + $0x8] sm:$0xff]
    %v129 = vld [vmem:[%s2 + $0x10] sm:$0xff]
    %131 = vset.pattern.permute.xlu0 0
    %132 = vperm.xlu0 %131, %v124
    %v133 = vpop.permute.xlu0 %132
    %136 = vset.pattern.permute.xlu0 0
    %137 = vperm.xlu0 %136, %v125
    %v138 = vpop.permute.xlu0 %137
    %141 = vset.pattern.permute.xlu0 0
    %142 = vperm.xlu0 %141, %v126
    %v143 = vpop.permute.xlu0 %142
    %v145 = vmul.f32 %v133, %v127
    %v146 = vmul.f32 %v138, %v128
    %v147 = vmul.f32 %v143, %v129
    %v148 = vsub.f32 1.0, %v124
    %v149 = vsub.f32 1.0, %v125
    %v150 = vsub.f32 1.0, %v126
    %v151 = vld [vmem:[#allocation2] sm:$0xff]
    %v152 = vld [vmem:[#allocation2 + $0x8] sm:$0xff]
    %v153 = vld [vmem:[#allocation2 + $0x10] sm:$0xff]
    %155 = vset.pattern.permute.xlu0 0
    %156 = vperm.xlu0 %155, %v148
    %v157 = vpop.permute.xlu0 %156
    %160 = vset.pattern.permute.xlu0 0
    %161 = vperm.xlu0 %160, %v149
    %v162 = vpop.permute.xlu0 %161
    %165 = vset.pattern.permute.xlu0 0
    %166 = vperm.xlu0 %165, %v150
    %v167 = vpop.permute.xlu0 %166
    %v169 = vmul.f32 %v157, %v151
    %v170 = vmul.f32 %v162, %v152
    %v171 = vmul.f32 %v167, %v153
    %v172 = vadd.f32 %v145, %v169
    %v173 = vadd.f32 %v146, %v170
    %v174 = vadd.f32 %v147, %v171
    %v175 = vpack.c.bf16 %v173, %v172
    %v176 = vpack.c.bf16 %v174, %v174
    %v179 = vunpack.c.l.b16 %v175
    %v180 = vunpack.c.h.b16 %v175
    %v181 = vunpack.c.l.b16 %v176
    %v182 = vpack.c.b16 %v179, %v179
    %v183 = vpack.c.b16 %v180, %v180
    %v184 = vpack.c.b16 %v181, %v181
    %188 = vst [vmem:[%s4] sm:$0xf] %v182
    %189 = vst [vmem:[%s4 + $0x4] sm:$0xf] %v183
    %190 = vst [vmem:[%s4 + $0x8] sm:$0xf] %v184
  $region25: #{run_forward.14} parent=0 // pred_fallthru
    _
  // Predicated region
  $region26: #{run_forward.14} parent=0 // pred_check
    _
  $region27: #{run_forward.14} parent=0 // pred_check_branch
    %192 = sbr.rel (0) target = $region29
  $region28: #{run_forward.14} parent=0 // pred_region
    _
  $region29: #{run_forward.14} parent=0 // pred_fallthru
    _
  // Predicated region
  $region30: #{run_forward.14} parent=0 // pred_check
    _
  $region31: #{run_forward.14} parent=0 // pred_check_branch
    %194 = sbr.rel (0) target = $region33
  $region32: #{run_forward.14} parent=0 // pred_region
    _
  $region33: #{run_forward.14} parent=0 // pred_fallthru
    _

// kernel: div.11
$region0: #{div.11}
  #allocation0 [shape = 's32[1]{0}', space=sflag, size = 0x4, scoped, tag = 'scoped memory for div.11']
  %s0 = inlined_call_operand.vmem [shape: f32[4], index: 0, kind: input, shape index: {}]
  %s1 = inlined_call_operand.vmem [shape: f32[4], index: 1, kind: input, shape index: {}]
  %s2 = inlined_call_operand.vmem [shape: f32[4], index: 2, kind: output, shape index: {}]
  %v3 = vld [vmem:[%s0] sm:$0x1]
  %v4 = vld [vmem:[%s1] sm:$0x1]
  %5 = xla_tuple %v3, %v4
  %6 = xla_tuple %5
  %v7 = vrcp.pop %v4
  %v8 = vmul.f32 %v3, %v7
  %9 = xla_tuple %v8
  %10 = vst [vmem:[%s2] sm:$0x1] %v8

// kernel: run_forward.19
$region0: #{run_forward.19}
  #allocation0 [shape = 'u32[]', space=smem, size = 0x4, offset = 0x4, fixed_abs, tag = 'smem constant byte address 0x4 - core index']
  #allocation1 [shape = 'u32[144,128]{1,0:T(1,128)}', space=vmem, size = 0x12000, scoped, tag = 'internal scratch']
  %s0 = inlined_call_operand.vmem [shape: f32[4,8,128], index: 0, kind: input, shape index: {}]
  %s1 = inlined_call_operand.vmem [shape: f32[4,8,128], index: 1, kind: input, shape index: {}]
  %s2 = inlined_call_operand.vmem [shape: f32[4,1,8], index: 2, kind: input, shape index: {}]
  %s3 = inlined_call_operand.vmem [shape: f32[4,8,1], index: 3, kind: output, shape index: {}]
  %s4 = sld [smem:[#allocation0]]
  $region45: #{run_forward.19} parent=0
    _
  %s6 = ssub.s32 1, %s4
  %s7 = scalar_select 0, %s6, %s4
  loop: start=0, step=1, limit=6
  $region2: #{run_forward.19} parent=0 // loop_pre_header
    _
  $region3: #{run_forward.19} parent=0 // loop_header
    %s9 = sphi 0, %s13
    %p10 = scmp.ge.s32.totalorder %s9, 6
    %s19 = sphi 0, %s21
    %s22 = sphi 0, %s19
    %s23 = sphi 0, %s22
    %s39 = sphi 0, %s23
    %s45 = sphi 0, %s47
    %s48 = sphi 0, %s45
    %s49 = sphi 0, %s48
    %s65 = sphi 0, %s49
    %s71 = sphi 0, %s73
    %s74 = sphi 0, %s71
    %s75 = sphi 0, %s74
    %s91 = sphi 0, %s75
    %s97 = sphi 0, %s99
    %s100 = sphi 0, %s97
    %s101 = sphi 0, %s100
    %s117 = sphi 0, %s101
  $region4: #{run_forward.19} parent=0 // loop_header_branch
    %12 = sbr.rel (%p10) target = $region8
  $region5: #{run_forward.19} parent=0 // loop_body
    %s14 = ssub.s32 %s9, 1
    %s15 = ssub.s32 %s9, 2
    %s16 = sadd.s32 %s9, 1
    %s17 = ssub.s32 %s9, %s16
    %p18 = scmp.eq.s32.totalorder %s17, 0
    %s20 = sadd.s32 %s19, 1
    %s21 = scalar_select %p18, %s19, %s20
    %p24 = pneg %p18
    %p25 = scmp.eq.s32.totalorder %s9, 3
    %p26 = por %p24, %p25
    %p27 = scmp.ne.s32.totalorder %s19, %s22
    %p28 = scmp.eq.s32.totalorder %s9, 0
    %p29 = por %p27, %p28
    %p30 = scmp.ne.s32.totalorder %s19, %s22
    %p31 = scmp.eq.s32.totalorder %s14, 3
    %p32 = por %p30, %p31
    %p33 = scmp.ne.s32.totalorder %s22, %s23
    %p34 = scmp.eq.s32.totalorder %s14, 0
    %p35 = por %p33, %p34
    %p36 = scmp.ne.s32.totalorder %s22, %s23
    %p37 = scmp.eq.s32.totalorder %s15, 3
    %p38 = por %p36, %p37
    %p40 = scmp.ne.s32.totalorder %s23, %s39
    %p41 = scmp.eq.s32.totalorder %s15, 0
    %p42 = por %p40, %p41
    %s43 = ssub.s32 %s9, %s16
    %p44 = scmp.eq.s32.totalorder %s43, 0
    %s46 = sadd.s32 %s45, 1
    %s47 = scalar_select %p44, %s45, %s46
    %p50 = pneg %p44
    %p51 = scmp.eq.s32.totalorder %s9, 3
    %p52 = por %p50, %p51
    %p53 = scmp.ne.s32.totalorder %s45, %s48
    %p54 = scmp.eq.s32.totalorder %s9, 0
    %p55 = por %p53, %p54
    %p56 = scmp.ne.s32.totalorder %s45, %s48
    %p57 = scmp.eq.s32.totalorder %s14, 3
    %p58 = por %p56, %p57
    %p59 = scmp.ne.s32.totalorder %s48, %s49
    %p60 = scmp.eq.s32.totalorder %s14, 0
    %p61 = por %p59, %p60
    %p62 = scmp.ne.s32.totalorder %s48, %s49
    %p63 = scmp.eq.s32.totalorder %s15, 3
    %p64 = por %p62, %p63
    %p66 = scmp.ne.s32.totalorder %s49, %s65
    %p67 = scmp.eq.s32.totalorder %s15, 0
    %p68 = por %p66, %p67
    %s69 = ssub.s32 %s9, %s16
    %p70 = scmp.eq.s32.totalorder %s69, 0
    %s72 = sadd.s32 %s71, 1
    %s73 = scalar_select %p70, %s71, %s72
    %p76 = pneg %p70
    %p77 = scmp.eq.s32.totalorder %s9, 3
    %p78 = por %p76, %p77
    %p79 = scmp.ne.s32.totalorder %s71, %s74
    %p80 = scmp.eq.s32.totalorder %s9, 0
    %p81 = por %p79, %p80
    %p82 = scmp.ne.s32.totalorder %s71, %s74
    %p83 = scmp.eq.s32.totalorder %s14, 3
    %p84 = por %p82, %p83
    %p85 = scmp.ne.s32.totalorder %s74, %s75
    %p86 = scmp.eq.s32.totalorder %s14, 0
    %p87 = por %p85, %p86
    %p88 = scmp.ne.s32.totalorder %s74, %s75
    %p89 = scmp.eq.s32.totalorder %s15, 3
    %p90 = por %p88, %p89
    %p92 = scmp.ne.s32.totalorder %s75, %s91
    %p93 = scmp.eq.s32.totalorder %s15, 0
    %p94 = por %p92, %p93
    %s95 = ssub.s32 %s9, %s16
    %p96 = scmp.eq.s32.totalorder %s95, 0
    %s98 = sadd.s32 %s97, 1
    %s99 = scalar_select %p96, %s97, %s98
    %p102 = pneg %p96
    %p103 = scmp.eq.s32.totalorder %s9, 3
    %p104 = por %p102, %p103
    %p105 = scmp.ne.s32.totalorder %s97, %s100
    %p106 = scmp.eq.s32.totalorder %s9, 0
    %p107 = por %p105, %p106
    %p108 = scmp.ne.s32.totalorder %s97, %s100
    %p109 = scmp.eq.s32.totalorder %s14, 3
    %p110 = por %p108, %p109
    %p111 = scmp.ne.s32.totalorder %s100, %s101
    %p112 = scmp.eq.s32.totalorder %s14, 0
    %p113 = por %p111, %p112
    %p114 = scmp.ne.s32.totalorder %s100, %s101
    %p115 = scmp.eq.s32.totalorder %s15, 3
    %p116 = por %p114, %p115
    %p118 = scmp.ne.s32.totalorder %s101, %s117
    %p119 = scmp.eq.s32.totalorder %s15, 0
    %p120 = por %p118, %p119
    %p121 = scmp.le.s32.totalorder 1, %s9
    %p122 = scmp.lt.s32.totalorder %s9, 5
    %p123 = pnand %p121, %p122
    %p124 = pneg %p123
    // Predicated region
    $region9: #{run_forward.19} parent=5 // pred_check
      _
    $region10: #{run_forward.19} parent=5 // pred_check_branch
      %126 = sbr.rel (%p123) target = $region12
    $region11: #{run_forward.19} parent=5 // pred_region
      %s127 = ssub.s32 %s9, 1
    $region12: #{run_forward.19} parent=5 // pred_fallthru
      _
    %p128 = scmp.lt.s32.totalorder %s9, 4
    // Predicated region
    $region13: #{run_forward.19} parent=5 // pred_check
      %p129 = pneg %p128
    $region14: #{run_forward.19} parent=5 // pred_check_branch
      %131 = sbr.rel (%p129) target = $region16
    $region15: #{run_forward.19} parent=5 // pred_region
      // Predicated region
      $region17: #{run_forward.19} parent=15 // pred_check
        %p132 = pneg %p29
      $region18: #{run_forward.19} parent=15 // pred_check_branch
        %134 = sbr.rel (%p132) target = $region20
      $region19: #{run_forward.19} parent=15 // pred_region
        %p135 = scmp.lt.s32.totalorder %s9, 3
        %s136 = scalar_select %p135, %s9, 3
        %s137 = smul.addr %s136, 8
        %s138 = scalar_lea.vmem %s0, %s137
      $region20: #{run_forward.19} parent=15 // pred_fallthru
        _
      // Predicated region
      $region21: #{run_forward.19} parent=15 // pred_check
        %p139 = pneg %p55
      $region22: #{run_forward.19} parent=15 // pred_check_branch
        %141 = sbr.rel (%p139) target = $region24
      $region23: #{run_forward.19} parent=15 // pred_region
        %p142 = scmp.lt.s32.totalorder %s9, 3
        %s143 = scalar_select %p142, %s9, 3
        %s144 = smul.addr %s143, 8
        %s145 = scalar_lea.vmem %s1, %s144
      $region24: #{run_forward.19} parent=15 // pred_fallthru
        _
      // Predicated region
      $region25: #{run_forward.19} parent=15 // pred_check
        %p146 = pneg %p81
      $region26: #{run_forward.19} parent=15 // pred_check_branch
        %148 = sbr.rel (%p146) target = $region28
      $region27: #{run_forward.19} parent=15 // pred_region
        %p149 = scmp.lt.s32.totalorder %s9, 3
        %s150 = scalar_select %p149, %s9, 3
        %s151 = scalar_lea.vmem %s2, %s150
      $region28: #{run_forward.19} parent=15 // pred_fallthru
        _
    $region16: #{run_forward.19} parent=5 // pred_fallthru
      _
    %p152 = scmp.le.s32.totalorder 1, %s9
    %p153 = scmp.lt.s32.totalorder %s9, 5
    %p154 = pnand %p152, %p153
    %p155 = pneg %p154
    // Predicated region
    $region29: #{run_forward.19} parent=5 // pred_check
      _
    $region30: #{run_forward.19} parent=5 // pred_check_branch
      %157 = sbr.rel (%p154) target = $region32
    $region31: #{run_forward.19} parent=5 // pred_region
      %s158 = ssub.s32 %s9, 1
      %p159 = scmp.lt.s32.totalorder %s14, 3
      %s160 = scalar_select %p159, %s14, 3
      %s161 = smul.addr %s160, 8
      %s162 = scalar_lea.vmem %s0, %s161
      %p163 = pneg %p35
      %p164 = pneg %p32
      %p165 = scmp.lt.s32.totalorder %s14, 3
      %s166 = scalar_select %p165, %s14, 3
      %s167 = smul.addr %s166, 8
      %s168 = scalar_lea.vmem %s1, %s167
      %p169 = pneg %p61
      %p170 = pneg %p58
      %p171 = scmp.lt.s32.totalorder %s14, 3
      %s172 = scalar_select %p171, %s14, 3
      %s173 = scalar_lea.vmem %s2, %s172
      %p174 = pneg %p87
      %p175 = pneg %p84
      %p176 = pneg %p113
      %p177 = pneg %p110
      %p178 = scmp.lt.s32.totalorder %s14, 3
      %s179 = scalar_select %p178, %s14, 3
      %s180 = smul.addr %s179, 8
      %s181 = scalar_lea.vmem %s3, %s180
      %p182 = scmp.lt.s32.totalorder %s14, 3
      %s183 = scalar_select %p182, %s14, 3
      %s184 = smul.addr %s183, 8
      %s185 = scalar_lea.vmem %s0, %s184
      %p186 = scmp.lt.s32.totalorder %s14, 3
      %s187 = scalar_select %p186, %s14, 3
      %s188 = smul.addr %s187, 8
      %s189 = scalar_lea.vmem %s1, %s188
      %p190 = scmp.lt.s32.totalorder %s14, 3
      %s191 = scalar_select %p190, %s14, 3
      %s192 = scalar_lea.vmem %s2, %s191
      %p193 = scmp.lt.s32.totalorder %s14, 3
      %s194 = scalar_select %p193, %s14, 3
      %s195 = smul.addr %s194, 8
      %s196 = scalar_lea.vmem %s3, %s195
      %v197 = vld [vmem:[%s185] sm:$0xff]
      %v198 = vld [vmem:[%s189] sm:$0xff]
      %v199 = vmul.f32 %v197, %v197
      %200 = vadd.xlane.f32.xlu0 %v199
      %v201 = vpop.xlane.xlu0 %200
      %v202 = vmax.f32 %v201, 1e-24
      %v203 = vrsqrt.pop %v202
      %v204 = vmul.f32 %v197, %v203
      %v205 = vmul.f32 %v198, %v198
      %206 = vadd.xlane.f32.xlu0 %v205
      %v207 = vpop.xlane.xlu0 %206
      %v208 = vmax.f32 %v207, 1e-24
      %v209 = vrsqrt.pop %v208
      %v210 = vmul.f32 %v198, %v209
      %v211 = vmul.f32 %v204, %v210
      %212 = vadd.xlane.f32.xlu0 %v211
      %v213 = vpop.xlane.xlu0 %212
      %214 = vmatprep.subr.mxu0 0.0
      %215 = vmatpush1.xpose.msra.mxu0 %v210
      %216 = vmatprep.subr.mxu0 0.0
      %217 = vmatpush1.xpose.msra.mxu0 0.0
      %218 = vmatprep.subr.mxu0 0.0
      %219 = vmatpush1.xpose.msra.mxu0 0.0
      %220 = vmatprep.subr.mxu0 0.0
      %221 = vmatpush1.xpose.msra.mxu0 0.0
      %222 = vmatprep.subr.mxu0 0.0
      %223 = vmatpush1.xpose.msra.mxu0 0.0
      %224 = vmatprep.subr.mxu0 0.0
      %225 = vmatpush1.xpose.msra.mxu0 0.0
      %226 = vmatprep.subr.mxu0 0.0
      %227 = vmatpush1.xpose.msra.mxu0 0.0
      %228 = vmatprep.subr.mxu0 0.0
      %229 = vmatpush1.xpose.msra.mxu0 0.0
      %230 = vmatprep.subr.mxu0 0.0
      %231 = vmatpush1.xpose.msra.mxu0 0.0
      %232 = vmatprep.subr.mxu0 0.0
      %233 = vmatpush1.xpose.msra.mxu0 0.0
      %234 = vmatprep.subr.mxu0 0.0
      %235 = vmatpush1.xpose.msra.mxu0 0.0
      %236 = vmatprep.subr.mxu0 0.0
      %237 = vmatpush1.xpose.msra.mxu0 0.0
      %238 = vmatprep.subr.mxu0 0.0
      %239 = vmatpush1.xpose.msra.mxu0 0.0
      %240 = vmatprep.subr.mxu0 0.0
      %241 = vmatpush1.xpose.msra.mxu0 0.0
      %242 = vmatprep.subr.mxu0 0.0
      %243 = vmatpush1.xpose.msra.mxu0 0.0
      %244 = vmatprep.subr.mxu0 0.0
      %245 = vmatpush1.xpose.msra.mxu0 0.0
      %246 = vmatprep.subr.mxu0 0.0
      %247 = vmatpush1.xpose.msra.mxu0 0.0
      %248 = vmatprep.subr.mxu0 0.0
      %249 = vmatpush1.xpose.msra.mxu0 0.0
      %250 = vmatprep.subr.mxu0 0.0
      %251 = vmatpush1.xpose.msra.mxu0 0.0
      %252 = vmatprep.subr.mxu0 0.0
      %253 = vmatpush1.xpose.msra.mxu0 0.0
      %254 = vmatprep.subr.mxu0 0.0
      %255 = vmatpush1.xpose.msra.mxu0 0.0
      %256 = vmatprep.subr.mxu0 0.0
      %257 = vmatpush1.xpose.msra.mxu0 0.0
      %258 = vmatprep.subr.mxu0 0.0
      %259 = vmatpush1.xpose.msra.mxu0 0.0
      %260 = vmatprep.subr.mxu0 0.0
      %261 = vmatpush1.xpose.msra.mxu0 0.0
      %262 = vmatprep.subr.mxu0 0.0
      %263 = vmatpush1.xpose.msra.mxu0 0.0
      %264 = vmatprep.subr.mxu0 0.0
      %265 = vmatpush1.xpose.msra.mxu0 0.0
      %266 = vmatprep.subr.mxu0 0.0
      %267 = vmatpush1.xpose.msra.mxu0 0.0
      %268 = vmatprep.subr.mxu0 0.0
      %269 = vmatpush1.xpose.msra.mxu0 0.0
      %270 = vmatprep.subr.mxu0 0.0
      %271 = vmatpush1.xpose.msra.mxu0 0.0
      %272 = vmatprep.subr.mxu0 0.0
      %273 = vmatpush1.xpose.msra.mxu0 0.0
      %274 = vmatprep.subr.mxu0 0.0
      %275 = vmatpush1.xpose.msra.mxu0 0.0
      %276 = vmatprep.subr.mxu0 0.0
      %277 = vmatpush1.xpose.msra.mxu0 0.0
      %278 = vmatprep.mubr.f32.mxu0 0.0
      %279 = vmatmul.mubr.f32.gmra.mrb[0].mxu0 %v204
      %v280 = vpop.f32.mrb[0].mxu0
      %v281 = vadd.f32 1e-08, %v280
      %v282 = vpop.f32.mrb[0].mxu0
      %283 = vdwg.mxu0
      %v284 = vmul.f32 %v281, 5.0
      %v285 = vld [vmem:[%s192] sm:$0x1]
      %vm286 = vcmp.gt.f32.partialorder %v285, 0.5
      %v287 = vsel %vm286, 1, 0
      %v288 = vlaneseq
      %v289 = vshrl.u32 %v288, 7
      %v290 = vsub.s32 0, %v289
      %v291 = vrot.slane %v287, %v290
      %vm292 = vcmp.eq.s32.totalorder %v291, 1
      %v293 = vsel %vm292, %v284, -1e+30
      %vm294 = vcmask 64512
      %v295 = vsel %vm294, %v293, -inf
      %296 = vmax.xlane.f32.xlu0 %v295
      %v297 = vpop.xlane.xlu0 %296
      %v298 = vsub.f32 %v293, %v297
      %v299 = vmul.f32 %v298, 1.442695
      %v300 = vpow.pop %v299
      %v301 = vsel %vm294, %v300, 0.0
      %302 = vadd.xlane.f32.xlu0 %v301
      %v303 = vpop.xlane.xlu0 %302
      %v304 = vlog2.pop %v303
      %v305 = vmul.f32 %v304, 0.6931472
      %v306 = vadd.f32 %v297, %v305
      %v307 = vmul.f32 %v213, 5.0
      %v308 = vsub.f32 %v307, %v306
      %v309 = vmul.f32 %v308, 1.442695
      %v310 = vpow.pop %v309
      %v311 = vadd.f32 %v310, 1e-08
      %v312 = vlog2.pop %v311
      %v313 = vmul.f32 %v312, 0.6931472
      %vm314 = vcmask 7168
      %315 = vst.msk [vmem:[%s196] sm:$0xff] %vm314, %v313
      %p316 = scmp.lt.s32.totalorder %s14, 3
      %s317 = scalar_select %p316, %s14, 3
      %s318 = smul.addr %s317, 8
      %s319 = scalar_lea.vmem %s3, %s318
      // Predicated region
      $region33: #{run_forward.19} parent=31 // pred_check
        %p320 = pneg %p110
      $region34: #{run_forward.19} parent=31 // pred_check_branch
        %322 = sbr.rel (%p320) target = $region36
      $region35: #{run_forward.19} parent=31 // pred_region
        _
      $region36: #{run_forward.19} parent=31 // pred_fallthru
        _
    $region32: #{run_forward.19} parent=5 // pred_fallthru
      _
    %p323 = scmp.le.s32.totalorder 2, %s9
    // Predicated region
    $region37: #{run_forward.19} parent=5 // pred_check
      %p324 = pneg %p323
    $region38: #{run_forward.19} parent=5 // pred_check_branch
      %326 = sbr.rel (%p324) target = $region40
    $region39: #{run_forward.19} parent=5 // pred_region
      %s327 = ssub.s32 %s9, 2
      // Predicated region
      $region41: #{run_forward.19} parent=39 // pred_check
        %p328 = pneg %p116
      $region42: #{run_forward.19} parent=39 // pred_check_branch
        %330 = sbr.rel (%p328) target = $region44
      $region43: #{run_forward.19} parent=39 // pred_region
        %p331 = scmp.lt.s32.totalorder %s15, 3
        %s332 = scalar_select %p331, %s15, 3
        %s333 = smul.addr %s332, 8
        %s334 = scalar_lea.vmem %s3, %s333
      $region44: #{run_forward.19} parent=39 // pred_fallthru
        _
    $region40: #{run_forward.19} parent=5 // pred_fallthru
      _
  $region6: #{run_forward.19} parent=0 // loop_footer
    %s13 = sadd.s32 1, %s9
  $region7: #{run_forward.19} parent=0 // loop_footer_branch
    %8 = sbr.rel target = $region3
  $region8: #{run_forward.19} parent=0 // loop_exit
    _

// kernel: run_forward.18
$region0: #{run_forward.18}
  #allocation0 [shape = 'u32[]', space=smem, size = 0x4, offset = 0x4, fixed_abs, tag = 'smem constant byte address 0x4 - core index']
  #allocation1 [shape = 'u32[144,128]{1,0:T(1,128)}', space=vmem, size = 0x12000, scoped, tag = 'internal scratch']
  %s0 = inlined_call_operand.vmem [shape: f32[2,8,128], index: 0, kind: input, shape index: {}]
  %s1 = inlined_call_operand.vmem [shape: f32[2,8,128], index: 1, kind: input, shape index: {}]
  %s2 = inlined_call_operand.vmem [shape: f32[2,8,128], index: 2, kind: input, shape index: {}]
  %s3 = inlined_call_operand.vmem [shape: f32[2,8,1], index: 3, kind: output, shape index: {}]
  %s4 = sld [smem:[#allocation0]]
  $region45: #{run_forward.18} parent=0
    _
  %s6 = ssub.s32 1, %s4
  %s7 = scalar_select 0, %s6, %s4
  loop: start=0, step=1, limit=4
  $region2: #{run_forward.18} parent=0 // loop_pre_header
    _
  $region3: #{run_forward.18} parent=0 // loop_header
    %s9 = sphi 0, %s13
    %p10 = scmp.ge.s32.totalorder %s9, 4
    %s19 = sphi 0, %s21
    %s22 = sphi 0, %s19
    %s23 = sphi 0, %s22
    %s39 = sphi 0, %s23
    %s45 = sphi 0, %s47
    %s48 = sphi 0, %s45
    %s49 = sphi 0, %s48
    %s65 = sphi 0, %s49
    %s71 = sphi 0, %s73
    %s74 = sphi 0, %s71
    %s75 = sphi 0, %s74
    %s91 = sphi 0, %s75
    %s97 = sphi 0, %s99
    %s100 = sphi 0, %s97
    %s101 = sphi 0, %s100
    %s117 = sphi 0, %s101
  $region4: #{run_forward.18} parent=0 // loop_header_branch
    %12 = sbr.rel (%p10) target = $region8
  $region5: #{run_forward.18} parent=0 // loop_body
    %s14 = ssub.s32 %s9, 1
    %s15 = ssub.s32 %s9, 2
    %s16 = sadd.s32 %s9, 1
    %s17 = ssub.s32 %s9, %s16
    %p18 = scmp.eq.s32.totalorder %s17, 0
    %s20 = sadd.s32 %s19, 1
    %s21 = scalar_select %p18, %s19, %s20
    %p24 = pneg %p18
    %p25 = scmp.eq.s32.totalorder %s9, 1
    %p26 = por %p24, %p25
    %p27 = scmp.ne.s32.totalorder %s19, %s22
    %p28 = scmp.eq.s32.totalorder %s9, 0
    %p29 = por %p27, %p28
    %p30 = scmp.ne.s32.totalorder %s19, %s22
    %p31 = scmp.eq.s32.totalorder %s14, 1
    %p32 = por %p30, %p31
    %p33 = scmp.ne.s32.totalorder %s22, %s23
    %p34 = scmp.eq.s32.totalorder %s14, 0
    %p35 = por %p33, %p34
    %p36 = scmp.ne.s32.totalorder %s22, %s23
    %p37 = scmp.eq.s32.totalorder %s15, 1
    %p38 = por %p36, %p37
    %p40 = scmp.ne.s32.totalorder %s23, %s39
    %p41 = scmp.eq.s32.totalorder %s15, 0
    %p42 = por %p40, %p41
    %s43 = ssub.s32 %s9, %s16
    %p44 = scmp.eq.s32.totalorder %s43, 0
    %s46 = sadd.s32 %s45, 1
    %s47 = scalar_select %p44, %s45, %s46
    %p50 = pneg %p44
    %p51 = scmp.eq.s32.totalorder %s9, 1
    %p52 = por %p50, %p51
    %p53 = scmp.ne.s32.totalorder %s45, %s48
    %p54 = scmp.eq.s32.totalorder %s9, 0
    %p55 = por %p53, %p54
    %p56 = scmp.ne.s32.totalorder %s45, %s48
    %p57 = scmp.eq.s32.totalorder %s14, 1
    %p58 = por %p56, %p57
    %p59 = scmp.ne.s32.totalorder %s48, %s49
    %p60 = scmp.eq.s32.totalorder %s14, 0
    %p61 = por %p59, %p60
    %p62 = scmp.ne.s32.totalorder %s48, %s49
    %p63 = scmp.eq.s32.totalorder %s15, 1
    %p64 = por %p62, %p63
    %p66 = scmp.ne.s32.totalorder %s49, %s65
    %p67 = scmp.eq.s32.totalorder %s15, 0
    %p68 = por %p66, %p67
    %s69 = ssub.s32 %s9, %s16
    %p70 = scmp.eq.s32.totalorder %s69, 0
    %s72 = sadd.s32 %s71, 1
    %s73 = scalar_select %p70, %s71, %s72
    %p76 = pneg %p70
    %p77 = scmp.eq.s32.totalorder %s9, 1
    %p78 = por %p76, %p77
    %p79 = scmp.ne.s32.totalorder %s71, %s74
    %p80 = scmp.eq.s32.totalorder %s9, 0
    %p81 = por %p79, %p80
    %p82 = scmp.ne.s32.totalorder %s71, %s74
    %p83 = scmp.eq.s32.totalorder %s14, 1
    %p84 = por %p82, %p83
    %p85 = scmp.ne.s32.totalorder %s74, %s75
    %p86 = scmp.eq.s32.totalorder %s14, 0
    %p87 = por %p85, %p86
    %p88 = scmp.ne.s32.totalorder %s74, %s75
    %p89 = scmp.eq.s32.totalorder %s15, 1
    %p90 = por %p88, %p89
    %p92 = scmp.ne.s32.totalorder %s75, %s91
    %p93 = scmp.eq.s32.totalorder %s15, 0
    %p94 = por %p92, %p93
    %s95 = ssub.s32 %s9, %s16
    %p96 = scmp.eq.s32.totalorder %s95, 0
    %s98 = sadd.s32 %s97, 1
    %s99 = scalar_select %p96, %s97, %s98
    %p102 = pneg %p96
    %p103 = scmp.eq.s32.totalorder %s9, 1
    %p104 = por %p102, %p103
    %p105 = scmp.ne.s32.totalorder %s97, %s100
    %p106 = scmp.eq.s32.totalorder %s9, 0
    %p107 = por %p105, %p106
    %p108 = scmp.ne.s32.totalorder %s97, %s100
    %p109 = scmp.eq.s32.totalorder %s14, 1
    %p110 = por %p108, %p109
    %p111 = scmp.ne.s32.totalorder %s100, %s101
    %p112 = scmp.eq.s32.totalorder %s14, 0
    %p113 = por %p111, %p112
    %p114 = scmp.ne.s32.totalorder %s100, %s101
    %p115 = scmp.eq.s32.totalorder %s15, 1
    %p116 = por %p114, %p115
    %p118 = scmp.ne.s32.totalorder %s101, %s117
    %p119 = scmp.eq.s32.totalorder %s15, 0
    %p120 = por %p118, %p119
    %p121 = scmp.le.s32.totalorder 1, %s9
    %p122 = scmp.lt.s32.totalorder %s9, 3
    %p123 = pnand %p121, %p122
    %p124 = pneg %p123
    // Predicated region
    $region9: #{run_forward.18} parent=5 // pred_check
      _
    $region10: #{run_forward.18} parent=5 // pred_check_branch
      %126 = sbr.rel (%p123) target = $region12
    $region11: #{run_forward.18} parent=5 // pred_region
      %s127 = ssub.s32 %s9, 1
    $region12: #{run_forward.18} parent=5 // pred_fallthru
      _
    %p128 = scmp.lt.s32.totalorder %s9, 2
    // Predicated region
    $region13: #{run_forward.18} parent=5 // pred_check
      %p129 = pneg %p128
    $region14: #{run_forward.18} parent=5 // pred_check_branch
      %131 = sbr.rel (%p129) target = $region16
    $region15: #{run_forward.18} parent=5 // pred_region
      // Predicated region
      $region17: #{run_forward.18} parent=15 // pred_check
        %p132 = pneg %p29
      $region18: #{run_forward.18} parent=15 // pred_check_branch
        %134 = sbr.rel (%p132) target = $region20
      $region19: #{run_forward.18} parent=15 // pred_region
        %p135 = scmp.lt.s32.totalorder %s9, 1
        %s136 = scalar_select %p135, %s9, 1
        %s137 = smul.addr %s136, 8
        %s138 = scalar_lea.vmem %s0, %s137
      $region20: #{run_forward.18} parent=15 // pred_fallthru
        _
      // Predicated region
      $region21: #{run_forward.18} parent=15 // pred_check
        %p139 = pneg %p55
      $region22: #{run_forward.18} parent=15 // pred_check_branch
        %141 = sbr.rel (%p139) target = $region24
      $region23: #{run_forward.18} parent=15 // pred_region
        %p142 = scmp.lt.s32.totalorder %s9, 1
        %s143 = scalar_select %p142, %s9, 1
        %s144 = smul.addr %s143, 8
        %s145 = scalar_lea.vmem %s1, %s144
      $region24: #{run_forward.18} parent=15 // pred_fallthru
        _
      // Predicated region
      $region25: #{run_forward.18} parent=15 // pred_check
        %p146 = pneg %p81
      $region26: #{run_forward.18} parent=15 // pred_check_branch
        %148 = sbr.rel (%p146) target = $region28
      $region27: #{run_forward.18} parent=15 // pred_region
        %p149 = scmp.lt.s32.totalorder %s9, 1
        %s150 = scalar_select %p149, %s9, 1
        %s151 = smul.addr %s150, 8
        %s152 = scalar_lea.vmem %s2, %s151
      $region28: #{run_forward.18} parent=15 // pred_fallthru
        _
    $region16: #{run_forward.18} parent=5 // pred_fallthru
      _
    %p153 = scmp.le.s32.totalorder 1, %s9
    %p154 = scmp.lt.s32.totalorder %s9, 3
    %p155 = pnand %p153, %p154
    %p156 = pneg %p155
    // Predicated region
    $region29: #{run_forward.18} parent=5 // pred_check
      _
    $region30: #{run_forward.18} parent=5 // pred_check_branch
      %158 = sbr.rel (%p155) target = $region32
    $region31: #{run_forward.18} parent=5 // pred_region
      %s159 = ssub.s32 %s9, 1
      %p160 = scmp.lt.s32.totalorder %s14, 1
      %s161 = scalar_select %p160, %s14, 1
      %s162 = smul.addr %s161, 8
      %s163 = scalar_lea.vmem %s0, %s162
      %p164 = pneg %p35
      %p165 = pneg %p32
      %p166 = scmp.lt.s32.totalorder %s14, 1
      %s167 = scalar_select %p166, %s14, 1
      %s168 = smul.addr %s167, 8
      %s169 = scalar_lea.vmem %s1, %s168
      %p170 = pneg %p61
      %p171 = pneg %p58
      %p172 = scmp.lt.s32.totalorder %s14, 1
      %s173 = scalar_select %p172, %s14, 1
      %s174 = smul.addr %s173, 8
      %s175 = scalar_lea.vmem %s2, %s174
      %p176 = pneg %p87
      %p177 = pneg %p84
      %p178 = pneg %p113
      %p179 = pneg %p110
      %p180 = scmp.lt.s32.totalorder %s14, 1
      %s181 = scalar_select %p180, %s14, 1
      %s182 = smul.addr %s181, 8
      %s183 = scalar_lea.vmem %s3, %s182
      %p184 = scmp.lt.s32.totalorder %s14, 1
      %s185 = scalar_select %p184, %s14, 1
      %s186 = smul.addr %s185, 8
      %s187 = scalar_lea.vmem %s0, %s186
      %p188 = scmp.lt.s32.totalorder %s14, 1
      %s189 = scalar_select %p188, %s14, 1
      %s190 = smul.addr %s189, 8
      %s191 = scalar_lea.vmem %s1, %s190
      %p192 = scmp.lt.s32.totalorder %s14, 1
      %s193 = scalar_select %p192, %s14, 1
      %s194 = smul.addr %s193, 8
      %s195 = scalar_lea.vmem %s2, %s194
      %p196 = scmp.lt.s32.totalorder %s14, 1
      %s197 = scalar_select %p196, %s14, 1
      %s198 = smul.addr %s197, 8
      %s199 = scalar_lea.vmem %s3, %s198
      %v200 = vld [vmem:[%s187] sm:$0xff]
      %v201 = vld [vmem:[%s191] sm:$0xff]
      %v202 = vmul.f32 %v200, %v201
      %203 = vadd.xlane.f32.xlu0 %v202
      %v204 = vpop.xlane.xlu0 %203
      %v205 = vld [vmem:[%s195] sm:$0xff]
      %v206 = vmul.f32 %v200, %v205
      %207 = vadd.xlane.f32.xlu0 %v206
      %v208 = vpop.xlane.xlu0 %207
      %v209 = vsub.f32 %v208, %v204
      %v210 = vmax.f32 %v209, 0.0
      %v211 = vand.u32 2147483647, %v209
      %v212 = vsub.f32 0.0, %v211
      %v213 = vmul.f32 %v212, 1.442695
      %v214 = vpow.pop %v213
      %v215 = vadd.f32 %v214, 1.0
      %v216 = vlog2.pop %v215
      %v217 = vmul.f32 %v216, 0.6931472
      %v218 = vadd.f32 %v210, %v217
      %vm219 = vcmask 7168
      %220 = vst.msk [vmem:[%s199] sm:$0xff] %vm219, %v218
      %p221 = scmp.lt.s32.totalorder %s14, 1
      %s222 = scalar_select %p221, %s14, 1
      %s223 = smul.addr %s222, 8
      %s224 = scalar_lea.vmem %s3, %s223
      // Predicated region
      $region33: #{run_forward.18} parent=31 // pred_check
        %p225 = pneg %p110
      $region34: #{run_forward.18} parent=31 // pred_check_branch
        %227 = sbr.rel (%p225) target = $region36
      $region35: #{run_forward.18} parent=31 // pred_region
        _
      $region36: #{run_forward.18} parent=31 // pred_fallthru
        _
    $region32: #{run_forward.18} parent=5 // pred_fallthru
      _
    %p228 = scmp.le.s32.totalorder 2, %s9
    // Predicated region
    $region37: #{run_forward.18} parent=5 // pred_check
      %p229 = pneg %p228
    $region38: #{run_forward.18} parent=5 // pred_check_branch
      %231 = sbr.rel (%p229) target = $region40
    $region39: #{run_forward.18} parent=5 // pred_region
      %s232 = ssub.s32 %s9, 2
      // Predicated region
      $region41: #{run_forward.18} parent=39 // pred_check
        %p233 = pneg %p116
      $region42: #{run_forward.18} parent=39 // pred_check_branch
        %235 = sbr.rel (%p233) target = $region44
      $region43: #{run_forward.18} parent=39 // pred_region
        %p236 = scmp.lt.s32.totalorder %s15, 1
        %s237 = scalar_select %p236, %s15, 1
        %s238 = smul.addr %s237, 8
        %s239 = scalar_lea.vmem %s3, %s238
      $region44: #{run_forward.18} parent=39 // pred_fallthru
        _
    $region40: #{run_forward.18} parent=5 // pred_fallthru
      _
  $region6: #{run_forward.18} parent=0 // loop_footer
    %s13 = sadd.s32 1, %s9
  $region7: #{run_forward.18} parent=0 // loop_footer_branch
    %8 = sbr.rel target = $region3
  $region8: #{run_forward.18} parent=0 // loop_exit
    _

</llo_original>
